<compile_context>
chip_gen: v5e
topology: v5e:2x2
jax: 0.10.0
libtpu: 0.0.40
codegen_flags: <defaults>
</compile_context>

<pallas_src>
import jax
import jax.numpy as jnp
from jax import lax
from jax.experimental import pallas as pl
from jax.experimental.pallas import tpu as pltpu


def _transe_kernel(idx_ref, ent_ref, rel_ref,
                   pos_out, neg_out,
                   pos_h_out, pos_t_out, neg_h_out, neg_t_out):
    tb = idx_ref.shape[0]
    ne_pad = ent_ref.shape[0]
    nr_pad = rel_ref.shape[0]

    ids = idx_ref[...]          # (tb, 6) int32, columns: ph, pt, pr, nh, nt, nr
    ent_tab = ent_ref[...]      # (ne_pad, Dp) f32, VMEM-resident across the grid
    rel_tab = rel_ref[...]      # (nr_pad, Dp) f32

    ent_iota = lax.broadcasted_iota(jnp.int32, (tb, ne_pad), 1)
    rel_iota = lax.broadcasted_iota(jnp.int32, (tb, nr_pad), 1)

    def gather(iota, tab, col):
        # One-hot gather on the MXU: exactly one 1.0 per row, so the matmul is
        # an exact row select (HIGHEST precision keeps full f32 accuracy).
        onehot = (iota == ids[:, col:col + 1]).astype(tab.dtype)
        return jnp.dot(onehot, tab,
                       preferred_element_type=jnp.float32,
                       precision=jax.lax.Precision.HIGHEST)

    ph = gather(ent_iota, ent_tab, 0)
    pt = gather(ent_iota, ent_tab, 1)
    pr = gather(rel_iota, rel_tab, 2)
    nh = gather(ent_iota, ent_tab, 3)
    nt = gather(ent_iota, ent_tab, 4)
    nr = gather(rel_iota, rel_tab, 5)

    # Full, unmasked (tb, Dp) tile stores — lane/sublane dense.
    pos_out[...] = (ph + pr - pt).astype(pos_out.dtype)
    neg_out[...] = (nh + nr - nt).astype(neg_out.dtype)
    pos_h_out[...] = ph.astype(pos_h_out.dtype)
    pos_t_out[...] = pt.astype(pos_t_out.dtype)
    neg_h_out[...] = nh.astype(neg_h_out.dtype)
    neg_t_out[...] = nt.astype(neg_t_out.dtype)


def transe_forward(ent_emb, rel_emb, pos_h, pos_t, pos_r, neg_h, neg_t, neg_r,
                   *, tb=None):
    B = pos_h.shape[0]
    NE, D = ent_emb.shape
    NR, _ = rel_emb.shape
    dtype = ent_emb.dtype

    def round_up(x, m):
        return m * ((x + m - 1) // m)

    # Contraction dim padded to 256 (multiple of both MXU granularities:
    # 128 on v5e, 256 on v6e/v7x); feature dim padded to lane width 128.
    ne_pad = round_up(NE, 256)
    nr_pad = round_up(NR, 256)
    d_pad = round_up(D, 128)

    ent_p = jnp.pad(ent_emb, ((0, ne_pad - NE), (0, d_pad - D)))
    rel_p = jnp.pad(rel_emb, ((0, nr_pad - NR), (0, d_pad - D)))

    # Batch tile: multiple of 8 sublanes; 1024 for large batches, otherwise
    # sized so there are >=2 grid steps when possible (v7x megacore).
    if tb is None:
        if B > 2048:
            tb = 1024
        else:
            tb = max(8, 8 * pl.cdiv(pl.cdiv(B, 2), 8))
    assert tb % 8 == 0, "batch tile must be a multiple of 8 sublanes"
    n_steps = pl.cdiv(B, tb)
    b_pad = n_steps * tb

    # Indices as a single (b_pad, 6) int32 VMEM input, tiled (tb, 6) per step.
    idx_all = jnp.stack([pos_h, pos_t, pos_r, neg_h, neg_t, neg_r],
                        axis=1).astype(jnp.int32)
    if b_pad != B:
        idx_all = jnp.pad(idx_all, ((0, b_pad - B), (0, 0)))  # index 0 is valid

    table_map = lambda i: (0, 0)   # constant -> table DMA'd once, VMEM-resident
    in_specs = [
        pl.BlockSpec((tb, 6), lambda i: (i, 0)),
        pl.BlockSpec((ne_pad, d_pad), table_map),
        pl.BlockSpec((nr_pad, d_pad), table_map),
    ]
    out_spec = pl.BlockSpec((tb, d_pad), lambda i: (i, 0))
    out_shape = jax.ShapeDtypeStruct((b_pad, d_pad), dtype)

    # Explicit scoped-VMEM budget: tables (worst case double-buffered) + 6
    # double-buffered output tiles + one-hot intermediates + index tile.
    tab_bytes = 2 * (ne_pad + nr_pad) * d_pad * 4
    out_bytes = 6 * 2 * tb * d_pad * 4
    onehot_bytes = 2 * tb * max(ne_pad, nr_pad) * 4
    idx_bytes = 2 * tb * 128 * 4
    need = tab_bytes + out_bytes + onehot_bytes + idx_bytes + (4 << 20)
    vmem_limit = int(min(max(need, 32 << 20), 100 << 20))

    outs = pl.pallas_call(
        _transe_kernel,
        grid=(n_steps,),
        in_specs=in_specs,
        out_specs=[out_spec] * 6,
        out_shape=[out_shape] * 6,
        compiler_params=pltpu.CompilerParams(
            dimension_semantics=("parallel",),
            vmem_limit_bytes=vmem_limit),
    )(idx_all, ent_p, rel_p)

    if b_pad != B or d_pad != D:
        outs = [o[:B, :D] for o in outs]
    return tuple(outs)


def init_transe_params(key, entity_total, relation_total, embedding_size):
    """Xavier-uniform init + row-wise L2 normalization (matches torch __init__)."""
    k_ent, k_rel = jax.random.split(key)

    def xavier_uniform(k, fan_out, fan_in):
        bound = jnp.sqrt(6.0 / (fan_in + fan_out))
        return jax.random.uniform(k, (fan_out, fan_in), jnp.float32, -bound, bound)

    ent_w = xavier_uniform(k_ent, entity_total, embedding_size)
    rel_w = xavier_uniform(k_rel, relation_total, embedding_size)

    def l2_normalize(w):
        norm = jnp.sqrt(jnp.sum(w * w, axis=1, keepdims=True))
        return w / jnp.maximum(norm, 1e-12)

    return l2_normalize(ent_w), l2_normalize(rel_w)


if __name__ == "__main__":
    entity_total = 32
    relation_total = 16
    embedding_size = 128
    batch = 8

    key = jax.random.PRNGKey(0)
    k_params, k_ph, k_pt, k_pr, k_nh, k_nt, k_nr = jax.random.split(key, 7)

    ent_emb, rel_emb = init_transe_params(
        k_params, entity_total, relation_total, embedding_size)

    pos_h = jax.random.randint(k_ph, (batch,), 0, entity_total, jnp.int32)
    pos_t = jax.random.randint(k_pt, (batch,), 0, entity_total, jnp.int32)
    pos_r = jax.random.randint(k_pr, (batch,), 0, relation_total, jnp.int32)
    neg_h = jax.random.randint(k_nh, (batch,), 0, entity_total, jnp.int32)
    neg_t = jax.random.randint(k_nt, (batch,), 0, entity_total, jnp.int32)
    neg_r = jax.random.randint(k_nr, (batch,), 0, relation_total, jnp.int32)

    outs = transe_forward(ent_emb, rel_emb,
                          pos_h, pos_t, pos_r, neg_h, neg_t, neg_r)
    outs = jax.block_until_ready(outs)
    pos, neg, pos_h_e, pos_t_e, neg_h_e, neg_t_e = outs

    # Pure-JAX reference.
    ref_ph = ent_emb[pos_h]
    ref_pt = ent_emb[pos_t]
    ref_pr = rel_emb[pos_r]
    ref_nh = ent_emb[neg_h]
    ref_nt = ent_emb[neg_t]
    ref_nr = rel_emb[neg_r]
    ref_pos = ref_ph + ref_pr - ref_pt
    ref_neg = ref_nh + ref_nr - ref_nt

    assert jnp.allclose(pos, ref_pos, atol=1e-5)
    assert jnp.allclose(neg, ref_neg, atol=1e-5)
    assert jnp.allclose(pos_h_e, ref_ph, atol=1e-5)
    assert jnp.allclose(pos_t_e, ref_pt, atol=1e-5)
    assert jnp.allclose(neg_h_e, ref_nh, atol=1e-5)
    assert jnp.allclose(neg_t_e, ref_nt, atol=1e-5)

    print("KERNEL_OK")
</pallas_src>

<mosaic_0001>
module attributes {stable_mosaic.version = 11 : i64} {
  func.func @_transe_kernel(%arg0: i32, %arg1: memref<8x6xi32, #tpu.memory_space<vmem>>, %arg2: memref<256x128xf32, #tpu.memory_space<vmem>>, %arg3: memref<256x128xf32, #tpu.memory_space<vmem>>, %arg4: memref<8x128xf32, #tpu.memory_space<vmem>>, %arg5: memref<8x128xf32, #tpu.memory_space<vmem>>, %arg6: memref<8x128xf32, #tpu.memory_space<vmem>>, %arg7: memref<8x128xf32, #tpu.memory_space<vmem>>, %arg8: memref<8x128xf32, #tpu.memory_space<vmem>>, %arg9: memref<8x128xf32, #tpu.memory_space<vmem>>) attributes {dimension_semantics = [#tpu.dimension_semantics<parallel>], iteration_bounds = array<i64: 1>, scalar_prefetch = 0 : i64, scratch_operands = 0 : i64, tpu.core_type = #tpu.core_type<tc>, window_params = [{transform_indices = @transform_0, window_bounds = array<i64: 8, 6>}, {pipeline_mode = #tpu.pipeline_mode<synchronous>, transform_indices = @transform_1, window_bounds = array<i64: 256, 128>}, {pipeline_mode = #tpu.pipeline_mode<synchronous>, transform_indices = @transform_2, window_bounds = array<i64: 256, 128>}, {transform_indices = @transform_3, window_bounds = array<i64: 8, 128>}, {transform_indices = @transform_4, window_bounds = array<i64: 8, 128>}, {transform_indices = @transform_5, window_bounds = array<i64: 8, 128>}, {transform_indices = @transform_6, window_bounds = array<i64: 8, 128>}, {transform_indices = @transform_7, window_bounds = array<i64: 8, 128>}, {transform_indices = @transform_8, window_bounds = array<i64: 8, 128>}]} {
    %c0 = arith.constant 0 : index
    %c0_0 = arith.constant 0 : index
    %0 = vector.load %arg1[%c0, %c0_0] : memref<8x6xi32, #tpu.memory_space<vmem>>, vector<8x6xi32>
    %c0_1 = arith.constant 0 : index
    %c0_2 = arith.constant 0 : index
    %1 = vector.load %arg2[%c0_1, %c0_2] : memref<256x128xf32, #tpu.memory_space<vmem>>, vector<256x128xf32>
    %c0_3 = arith.constant 0 : index
    %c0_4 = arith.constant 0 : index
    %2 = vector.load %arg3[%c0_3, %c0_4] : memref<256x128xf32, #tpu.memory_space<vmem>>, vector<256x128xf32>
    %3 = tpu.iota {dimensions = array<i32: 1>} : vector<8x256xi32>
    %4 = tpu.iota {dimensions = array<i32: 1>} : vector<8x256xi32>
    %5 = vector.extract_strided_slice %0 {offsets = [0, 0], sizes = [8, 1], strides = [1, 1]} : vector<8x6xi32> to vector<8x1xi32>
    %6 = vector.broadcast %5 : vector<8x1xi32> to vector<8x256xi32>
    %7 = arith.cmpi eq, %3, %6 : vector<8x256xi32>
    %8 = arith.extui %7 : vector<8x256xi1> to vector<8x256xi32>
    %9 = arith.sitofp %8 : vector<8x256xi32> to vector<8x256xf32>
    %cst = arith.constant dense<0.000000e+00> : vector<8x128xf32>
    %10 = tpu.matmul %9, %1, %cst {dimension_numbers = #tpu.dot_dimension_numbers<[1], [0], [0], [1], [0, 0, 1, 1], [], []>, precision = #tpu.contract_precision<fp32>} : vector<8x256xf32>, vector<256x128xf32>, vector<8x128xf32> -> vector<8x128xf32>
    %11 = vector.extract_strided_slice %0 {offsets = [0, 1], sizes = [8, 1], strides = [1, 1]} : vector<8x6xi32> to vector<8x1xi32>
    %12 = vector.broadcast %11 : vector<8x1xi32> to vector<8x256xi32>
    %13 = arith.cmpi eq, %3, %12 : vector<8x256xi32>
    %14 = arith.extui %13 : vector<8x256xi1> to vector<8x256xi32>
    %15 = arith.sitofp %14 : vector<8x256xi32> to vector<8x256xf32>
    %cst_5 = arith.constant dense<0.000000e+00> : vector<8x128xf32>
    %16 = tpu.matmul %15, %1, %cst_5 {dimension_numbers = #tpu.dot_dimension_numbers<[1], [0], [0], [1], [0, 0, 1, 1], [], []>, precision = #tpu.contract_precision<fp32>} : vector<8x256xf32>, vector<256x128xf32>, vector<8x128xf32> -> vector<8x128xf32>
    %17 = vector.extract_strided_slice %0 {offsets = [0, 2], sizes = [8, 1], strides = [1, 1]} : vector<8x6xi32> to vector<8x1xi32>
    %18 = vector.broadcast %17 : vector<8x1xi32> to vector<8x256xi32>
    %19 = arith.cmpi eq, %4, %18 : vector<8x256xi32>
    %20 = arith.extui %19 : vector<8x256xi1> to vector<8x256xi32>
    %21 = arith.sitofp %20 : vector<8x256xi32> to vector<8x256xf32>
    %cst_6 = arith.constant dense<0.000000e+00> : vector<8x128xf32>
    %22 = tpu.matmul %21, %2, %cst_6 {dimension_numbers = #tpu.dot_dimension_numbers<[1], [0], [0], [1], [0, 0, 1, 1], [], []>, precision = #tpu.contract_precision<fp32>} : vector<8x256xf32>, vector<256x128xf32>, vector<8x128xf32> -> vector<8x128xf32>
    %23 = vector.extract_strided_slice %0 {offsets = [0, 3], sizes = [8, 1], strides = [1, 1]} : vector<8x6xi32> to vector<8x1xi32>
    %24 = vector.broadcast %23 : vector<8x1xi32> to vector<8x256xi32>
    %25 = arith.cmpi eq, %3, %24 : vector<8x256xi32>
    %26 = arith.extui %25 : vector<8x256xi1> to vector<8x256xi32>
    %27 = arith.sitofp %26 : vector<8x256xi32> to vector<8x256xf32>
    %cst_7 = arith.constant dense<0.000000e+00> : vector<8x128xf32>
    %28 = tpu.matmul %27, %1, %cst_7 {dimension_numbers = #tpu.dot_dimension_numbers<[1], [0], [0], [1], [0, 0, 1, 1], [], []>, precision = #tpu.contract_precision<fp32>} : vector<8x256xf32>, vector<256x128xf32>, vector<8x128xf32> -> vector<8x128xf32>
    %29 = vector.extract_strided_slice %0 {offsets = [0, 4], sizes = [8, 1], strides = [1, 1]} : vector<8x6xi32> to vector<8x1xi32>
    %30 = vector.broadcast %29 : vector<8x1xi32> to vector<8x256xi32>
    %31 = arith.cmpi eq, %3, %30 : vector<8x256xi32>
    %32 = arith.extui %31 : vector<8x256xi1> to vector<8x256xi32>
    %33 = arith.sitofp %32 : vector<8x256xi32> to vector<8x256xf32>
    %cst_8 = arith.constant dense<0.000000e+00> : vector<8x128xf32>
    %34 = tpu.matmul %33, %1, %cst_8 {dimension_numbers = #tpu.dot_dimension_numbers<[1], [0], [0], [1], [0, 0, 1, 1], [], []>, precision = #tpu.contract_precision<fp32>} : vector<8x256xf32>, vector<256x128xf32>, vector<8x128xf32> -> vector<8x128xf32>
    %35 = vector.extract_strided_slice %0 {offsets = [0, 5], sizes = [8, 1], strides = [1, 1]} : vector<8x6xi32> to vector<8x1xi32>
    %36 = vector.broadcast %35 : vector<8x1xi32> to vector<8x256xi32>
    %37 = arith.cmpi eq, %4, %36 : vector<8x256xi32>
    %38 = arith.extui %37 : vector<8x256xi1> to vector<8x256xi32>
    %39 = arith.sitofp %38 : vector<8x256xi32> to vector<8x256xf32>
    %cst_9 = arith.constant dense<0.000000e+00> : vector<8x128xf32>
    %40 = tpu.matmul %39, %2, %cst_9 {dimension_numbers = #tpu.dot_dimension_numbers<[1], [0], [0], [1], [0, 0, 1, 1], [], []>, precision = #tpu.contract_precision<fp32>} : vector<8x256xf32>, vector<256x128xf32>, vector<8x128xf32> -> vector<8x128xf32>
    %41 = arith.addf %10, %22 : vector<8x128xf32>
    %42 = arith.subf %41, %16 : vector<8x128xf32>
    %c0_10 = arith.constant 0 : index
    %c0_11 = arith.constant 0 : index
    %43 = vector.load %arg4[%c0_10, %c0_11] : memref<8x128xf32, #tpu.memory_space<vmem>>, vector<8x128xf32>
    tpu.vector_store %arg4[%c0_10, %c0_11], %42 {strides = array<i32>} : memref<8x128xf32, #tpu.memory_space<vmem>>, vector<8x128xf32>,
    %44 = arith.addf %28, %40 : vector<8x128xf32>
    %45 = arith.subf %44, %34 : vector<8x128xf32>
    %c0_12 = arith.constant 0 : index
    %c0_13 = arith.constant 0 : index
    %46 = vector.load %arg5[%c0_12, %c0_13] : memref<8x128xf32, #tpu.memory_space<vmem>>, vector<8x128xf32>
    tpu.vector_store %arg5[%c0_12, %c0_13], %45 {strides = array<i32>} : memref<8x128xf32, #tpu.memory_space<vmem>>, vector<8x128xf32>,
    %c0_14 = arith.constant 0 : index
    %c0_15 = arith.constant 0 : index
    %47 = vector.load %arg6[%c0_14, %c0_15] : memref<8x128xf32, #tpu.memory_space<vmem>>, vector<8x128xf32>
    tpu.vector_store %arg6[%c0_14, %c0_15], %10 {strides = array<i32>} : memref<8x128xf32, #tpu.memory_space<vmem>>, vector<8x128xf32>,
    %c0_16 = arith.constant 0 : index
    %c0_17 = arith.constant 0 : index
    %48 = vector.load %arg7[%c0_16, %c0_17] : memref<8x128xf32, #tpu.memory_space<vmem>>, vector<8x128xf32>
    tpu.vector_store %arg7[%c0_16, %c0_17], %16 {strides = array<i32>} : memref<8x128xf32, #tpu.memory_space<vmem>>, vector<8x128xf32>,
    %c0_18 = arith.constant 0 : index
    %c0_19 = arith.constant 0 : index
    %49 = vector.load %arg8[%c0_18, %c0_19] : memref<8x128xf32, #tpu.memory_space<vmem>>, vector<8x128xf32>
    tpu.vector_store %arg8[%c0_18, %c0_19], %28 {strides = array<i32>} : memref<8x128xf32, #tpu.memory_space<vmem>>, vector<8x128xf32>,
    %c0_20 = arith.constant 0 : index
    %c0_21 = arith.constant 0 : index
    %50 = vector.load %arg9[%c0_20, %c0_21] : memref<8x128xf32, #tpu.memory_space<vmem>>, vector<8x128xf32>
    tpu.vector_store %arg9[%c0_20, %c0_21], %34 {strides = array<i32>} : memref<8x128xf32, #tpu.memory_space<vmem>>, vector<8x128xf32>,
    return
  }
  func.func @transform_0(%arg0: i32) -> (i32, i32) {
    %c0_i32 = arith.constant 0 : i32
    %c0_i32_0 = arith.constant 0 : i32
    return %arg0, %c0_i32 : i32, i32
  }
  func.func @transform_1(%arg0: i32) -> (i32, i32) {
    %c0_i32 = arith.constant 0 : i32
    %c0_i32_0 = arith.constant 0 : i32
    %c0_i32_1 = arith.constant 0 : i32
    return %c0_i32, %c0_i32_0 : i32, i32
  }
  func.func @transform_2(%arg0: i32) -> (i32, i32) {
    %c0_i32 = arith.constant 0 : i32
    %c0_i32_0 = arith.constant 0 : i32
    %c0_i32_1 = arith.constant 0 : i32
    return %c0_i32, %c0_i32_0 : i32, i32
  }
  func.func @transform_3(%arg0: i32) -> (i32, i32) {
    %c0_i32 = arith.constant 0 : i32
    %c0_i32_0 = arith.constant 0 : i32
    return %arg0, %c0_i32 : i32, i32
  }
  func.func @transform_4(%arg0: i32) -> (i32, i32) {
    %c0_i32 = arith.constant 0 : i32
    %c0_i32_0 = arith.constant 0 : i32
    return %arg0, %c0_i32 : i32, i32
  }
  func.func @transform_5(%arg0: i32) -> (i32, i32) {
    %c0_i32 = arith.constant 0 : i32
    %c0_i32_0 = arith.constant 0 : i32
    return %arg0, %c0_i32 : i32, i32
  }
  func.func @transform_6(%arg0: i32) -> (i32, i32) {
    %c0_i32 = arith.constant 0 : i32
    %c0_i32_0 = arith.constant 0 : i32
    return %arg0, %c0_i32 : i32, i32
  }
  func.func @transform_7(%arg0: i32) -> (i32, i32) {
    %c0_i32 = arith.constant 0 : i32
    %c0_i32_0 = arith.constant 0 : i32
    return %arg0, %c0_i32 : i32, i32
  }
  func.func @transform_8(%arg0: i32) -> (i32, i32) {
    %c0_i32 = arith.constant 0 : i32
    %c0_i32_0 = arith.constant 0 : i32
    return %arg0, %c0_i32 : i32, i32
  }
}

</mosaic_0001>

<llo_original>
// kernel: tpu_custom_call.1
$region0: #{tpu_custom_call.1}
  #allocation0 [shape = 'u32[]', space=smem, size = 0x4, offset = 0x4, fixed_abs, tag = 'smem constant byte address 0x4 - core index']
  #allocation1 [shape = 'u32[72,128]{1,0:T(1,128)}', space=vmem, size = 0x9000, scoped, tag = 'internal scratch']
  %s0 = inlined_call_operand.hbm [shape: s32[8,6], index: 0, kind: input, shape index: {}]
  %s1 = inlined_call_operand.hbm [shape: f32[256,128], index: 1, kind: input, shape index: {}]
  %s2 = inlined_call_operand.hbm [shape: f32[256,128], index: 2, kind: input, shape index: {}]
  %s3 = inlined_call_operand.hbm [shape: f32[8,128], index: 3, kind: output, shape index: {0}]
  %s4 = inlined_call_operand.hbm [shape: f32[8,128], index: 4, kind: output, shape index: {1}]
  %s5 = inlined_call_operand.hbm [shape: f32[8,128], index: 5, kind: output, shape index: {2}]
  %s6 = inlined_call_operand.hbm [shape: f32[8,128], index: 6, kind: output, shape index: {3}]
  %s7 = inlined_call_operand.hbm [shape: f32[8,128], index: 7, kind: output, shape index: {4}]
  %s8 = inlined_call_operand.hbm [shape: f32[8,128], index: 8, kind: output, shape index: {5}]
  %9 = xla_tuple %s3, %s4, %s5, %s6, %s7, %s8
  %s10 = sld [smem:[#allocation0]]
  $region74: #{tpu_custom_call.1} parent=0
    _
  %s12 = ssub.s32 1, %s10
  %s13 = scalar_select 0, %s12, %s10
  $region1: #{tpu_custom_call.1} parent=0
    #allocation2 [shape = 'u8[4096]{0}', space=vmem, size = 0x1000, scoped, tag = 'input window, operand 0, single buffered']
    #allocation3 [shape = 's32[1]{0}', space=sflag, size = 0x4, scoped, tag = 'scoped memory for tpu_custom_call.1']
    #allocation4 [shape = 's32[1]{0}', space=sflag, size = 0x4, scoped, tag = 'scoped memory for tpu_custom_call.1']
    #allocation5 [shape = 'u8[131072]{0}', space=vmem, size = 0x20000, scoped, tag = 'input window, operand 1, single buffered']
    #allocation6 [shape = 's32[1]{0}', space=sflag, size = 0x4, scoped, tag = 'scoped memory for tpu_custom_call.1']
    #allocation7 [shape = 'u8[131072]{0}', space=vmem, size = 0x20000, scoped, tag = 'input window, operand 2, single buffered']
    #allocation8 [shape = 'u8[4096]{0}', space=vmem, size = 0x1000, scoped, tag = 'output window, operand 0, single buffered']
    #allocation9 [shape = 'u8[4096]{0}', space=vmem, size = 0x1000, scoped, tag = 'output window, operand 1, single buffered']
    #allocation10 [shape = 's32[1]{0}', space=sflag, size = 0x4, scoped, tag = 'scoped memory for tpu_custom_call.1']
    #allocation11 [shape = 'u8[4096]{0}', space=vmem, size = 0x1000, scoped, tag = 'output window, operand 2, single buffered']
    #allocation12 [shape = 'u8[4096]{0}', space=vmem, size = 0x1000, scoped, tag = 'output window, operand 3, single buffered']
    #allocation13 [shape = 's32[1]{0}', space=sflag, size = 0x4, scoped, tag = 'scoped memory for tpu_custom_call.1']
    #allocation14 [shape = 'u8[4096]{0}', space=vmem, size = 0x1000, scoped, tag = 'output window, operand 4, single buffered']
    #allocation15 [shape = 'u8[4096]{0}', space=vmem, size = 0x1000, scoped, tag = 'output window, operand 5, single buffered']
    #allocation16 [shape = 's32[1]{0}', space=sflag, size = 0x4, scoped, tag = 'scoped memory for tpu_custom_call.1']
    %14 = vsyncpa [#allocation3], 0
    %15 = vsyncpa [#allocation6], 0
    %16 = vsyncpa [#allocation4], 0
    %17 = vsyncpa [#allocation10], 0
    %18 = vsyncpa [#allocation13], 0
    %19 = vsyncpa [#allocation16], 0
    // Predicated region
    $region2: #{tpu_custom_call.1} parent=1 // pred_check
      _
    $region3: #{tpu_custom_call.1} parent=1 // pred_check_branch
      %21 = sbr.rel (0) target = $region5
    $region4: #{tpu_custom_call.1} parent=1 // pred_region
      %23 = vsyncadd [#allocation3], 0
      %s25 = sshll.u32 %s0, 4
      %s26 = int_to_ptr.hbm [resolvable:$true] %s25
      %s27 = sshll.u32 [#allocation2], 4
      %s28 = int_to_ptr.vmem [resolvable:$true] %s27
      %30 = dma.hbm_to_vmem [thread:$0]  %s26, 128, %s28, [#allocation3]
    $region5: #{tpu_custom_call.1} parent=1 // pred_fallthru
      _
    // Predicated region
    $region6: #{tpu_custom_call.1} parent=1 // pred_check
      _
    $region7: #{tpu_custom_call.1} parent=1 // pred_check_branch
      %32 = sbr.rel (0) target = $region9
    $region8: #{tpu_custom_call.1} parent=1 // pred_region
      %34 = vsyncadd [#allocation6], 0
      %s35 = sshll.u32 %s1, 4
      %s36 = int_to_ptr.hbm [resolvable:$true] %s35
      %s37 = sshll.u32 [#allocation5], 4
      %s38 = int_to_ptr.vmem [resolvable:$true] %s37
      %43 = dma.hbm_to_vmem [thread:$0]  %s36, 4096, %s38, [#allocation6], 128, 128, 8
    $region9: #{tpu_custom_call.1} parent=1 // pred_fallthru
      _
    // Predicated region
    $region10: #{tpu_custom_call.1} parent=1 // pred_check
      _
    $region11: #{tpu_custom_call.1} parent=1 // pred_check_branch
      %45 = sbr.rel (0) target = $region13
    $region12: #{tpu_custom_call.1} parent=1 // pred_region
      %47 = vsyncadd [#allocation6], 0
      %s48 = sshll.u32 %s2, 4
      %s49 = int_to_ptr.hbm [resolvable:$true] %s48
      %s50 = sshll.u32 [#allocation7], 4
      %s51 = int_to_ptr.vmem [resolvable:$true] %s50
      %56 = dma.hbm_to_vmem [thread:$0]  %s49, 4096, %s51, [#allocation6], 128, 128, 8
    $region13: #{tpu_custom_call.1} parent=1 // pred_fallthru
      _
    // Predicated region
    $region14: #{tpu_custom_call.1} parent=1 // pred_check
      _
    $region15: #{tpu_custom_call.1} parent=1 // pred_check_branch
      %58 = sbr.rel (0) target = $region17
    $region16: #{tpu_custom_call.1} parent=1 // pred_region
      %60 = dma.done [#allocation3], 128
    $region17: #{tpu_custom_call.1} parent=1 // pred_fallthru
      _
    // Predicated region
    $region18: #{tpu_custom_call.1} parent=1 // pred_check
      _
    $region19: #{tpu_custom_call.1} parent=1 // pred_check_branch
      %62 = sbr.rel (0) target = $region21
    $region20: #{tpu_custom_call.1} parent=1 // pred_region
      %64 = dma.done [#allocation6], 4096
    $region21: #{tpu_custom_call.1} parent=1 // pred_fallthru
      _
    // Predicated region
    $region22: #{tpu_custom_call.1} parent=1 // pred_check
      _
    $region23: #{tpu_custom_call.1} parent=1 // pred_check_branch
      %66 = sbr.rel (0) target = $region25
    $region24: #{tpu_custom_call.1} parent=1 // pred_region
      %68 = dma.done [#allocation6], 4096
    $region25: #{tpu_custom_call.1} parent=1 // pred_fallthru
      _
    %v69 = vld [vmem:[#allocation2] sm:$0xff]
    %v70 = vld [vmem:[#allocation5] sm:$0xff]
    %v71 = vld [vmem:[#allocation5 + $0x8] sm:$0xff]
    %v72 = vld [vmem:[#allocation5 + $0x10] sm:$0xff]
    %v73 = vld [vmem:[#allocation5 + $0x18] sm:$0xff]
    %v74 = vld [vmem:[#allocation5 + $0x20] sm:$0xff]
    %v75 = vld [vmem:[#allocation5 + $0x28] sm:$0xff]
    %v76 = vld [vmem:[#allocation5 + $0x30] sm:$0xff]
    %v77 = vld [vmem:[#allocation5 + $0x38] sm:$0xff]
    %v78 = vld [vmem:[#allocation5 + $0x40] sm:$0xff]
    %v79 = vld [vmem:[#allocation5 + $0x48] sm:$0xff]
    %v80 = vld [vmem:[#allocation5 + $0x50] sm:$0xff]
    %v81 = vld [vmem:[#allocation5 + $0x58] sm:$0xff]
    %v82 = vld [vmem:[#allocation5 + $0x60] sm:$0xff]
    %v83 = vld [vmem:[#allocation5 + $0x68] sm:$0xff]
    %v84 = vld [vmem:[#allocation5 + $0x70] sm:$0xff]
    %v85 = vld [vmem:[#allocation5 + $0x78] sm:$0xff]
    %v86 = vld [vmem:[#allocation5 + $0x80] sm:$0xff]
    %v87 = vld [vmem:[#allocation5 + $0x88] sm:$0xff]
    %v88 = vld [vmem:[#allocation5 + $0x90] sm:$0xff]
    %v89 = vld [vmem:[#allocation5 + $0x98] sm:$0xff]
    %v90 = vld [vmem:[#allocation5 + $0xa0] sm:$0xff]
    %v91 = vld [vmem:[#allocation5 + $0xa8] sm:$0xff]
    %v92 = vld [vmem:[#allocation5 + $0xb0] sm:$0xff]
    %v93 = vld [vmem:[#allocation5 + $0xb8] sm:$0xff]
    %v94 = vld [vmem:[#allocation5 + $0xc0] sm:$0xff]
    %v95 = vld [vmem:[#allocation5 + $0xc8] sm:$0xff]
    %v96 = vld [vmem:[#allocation5 + $0xd0] sm:$0xff]
    %v97 = vld [vmem:[#allocation5 + $0xd8] sm:$0xff]
    %v98 = vld [vmem:[#allocation5 + $0xe0] sm:$0xff]
    %v99 = vld [vmem:[#allocation5 + $0xe8] sm:$0xff]
    %v100 = vld [vmem:[#allocation5 + $0xf0] sm:$0xff]
    %v101 = vld [vmem:[#allocation5 + $0xf8] sm:$0xff]
    %v102 = vld [vmem:[#allocation7] sm:$0xff]
    %v103 = vld [vmem:[#allocation7 + $0x8] sm:$0xff]
    %v104 = vld [vmem:[#allocation7 + $0x10] sm:$0xff]
    %v105 = vld [vmem:[#allocation7 + $0x18] sm:$0xff]
    %v106 = vld [vmem:[#allocation7 + $0x20] sm:$0xff]
    %v107 = vld [vmem:[#allocation7 + $0x28] sm:$0xff]
    %v108 = vld [vmem:[#allocation7 + $0x30] sm:$0xff]
    %v109 = vld [vmem:[#allocation7 + $0x38] sm:$0xff]
    %v110 = vld [vmem:[#allocation7 + $0x40] sm:$0xff]
    %v111 = vld [vmem:[#allocation7 + $0x48] sm:$0xff]
    %v112 = vld [vmem:[#allocation7 + $0x50] sm:$0xff]
    %v113 = vld [vmem:[#allocation7 + $0x58] sm:$0xff]
    %v114 = vld [vmem:[#allocation7 + $0x60] sm:$0xff]
    %v115 = vld [vmem:[#allocation7 + $0x68] sm:$0xff]
    %v116 = vld [vmem:[#allocation7 + $0x70] sm:$0xff]
    %v117 = vld [vmem:[#allocation7 + $0x78] sm:$0xff]
    %v118 = vld [vmem:[#allocation7 + $0x80] sm:$0xff]
    %v119 = vld [vmem:[#allocation7 + $0x88] sm:$0xff]
    %v120 = vld [vmem:[#allocation7 + $0x90] sm:$0xff]
    %v121 = vld [vmem:[#allocation7 + $0x98] sm:$0xff]
    %v122 = vld [vmem:[#allocation7 + $0xa0] sm:$0xff]
    %v123 = vld [vmem:[#allocation7 + $0xa8] sm:$0xff]
    %v124 = vld [vmem:[#allocation7 + $0xb0] sm:$0xff]
    %v125 = vld [vmem:[#allocation7 + $0xb8] sm:$0xff]
    %v126 = vld [vmem:[#allocation7 + $0xc0] sm:$0xff]
    %v127 = vld [vmem:[#allocation7 + $0xc8] sm:$0xff]
    %v128 = vld [vmem:[#allocation7 + $0xd0] sm:$0xff]
    %v129 = vld [vmem:[#allocation7 + $0xd8] sm:$0xff]
    %v130 = vld [vmem:[#allocation7 + $0xe0] sm:$0xff]
    %v131 = vld [vmem:[#allocation7 + $0xe8] sm:$0xff]
    %v132 = vld [vmem:[#allocation7 + $0xf0] sm:$0xff]
    %v133 = vld [vmem:[#allocation7 + $0xf8] sm:$0xff]
    %v134 = vlaneseq
    %v135 = vand.u32 %v134, 127
    %v136 = vadd.s32 %v135, 128
    %137 = vset.pattern.permute.xlu0 0
    %138 = vperm.xlu0 %137, %v69
    %v139 = vpop.permute.xlu0 %138
    %vm140 = vcmp.eq.s32.totalorder %v135, %v139
    %vm141 = vcmp.eq.s32.totalorder %v136, %v139
    %v142 = vsel %vm140, 1, 0
    %v143 = vsel %vm141, 1, 0
    %v144 = vcvt.s32.f32 %v142
    %v145 = vcvt.s32.f32 %v143
    %v146 = vand.u32 %v85, 4294901760
    %147 = vmatpush.msra.mxu0 %v146
    %v148 = vand.u32 %v84, 4294901760
    %149 = vmatpush.msra.mxu0 %v148
    %v150 = vand.u32 %v83, 4294901760
    %151 = vmatpush.msra.mxu0 %v150
    %v152 = vand.u32 %v82, 4294901760
    %153 = vmatpush.msra.mxu0 %v152
    %v154 = vand.u32 %v81, 4294901760
    %155 = vmatpush.msra.mxu0 %v154
    %v156 = vand.u32 %v80, 4294901760
    %157 = vmatpush.msra.mxu0 %v156
    %v158 = vand.u32 %v79, 4294901760
    %159 = vmatpush.msra.mxu0 %v158
    %v160 = vand.u32 %v78, 4294901760
    %161 = vmatpush.msra.mxu0 %v160
    %v162 = vand.u32 %v77, 4294901760
    %163 = vmatpush.msra.mxu0 %v162
    %v164 = vand.u32 %v76, 4294901760
    %165 = vmatpush.msra.mxu0 %v164
    %v166 = vand.u32 %v75, 4294901760
    %167 = vmatpush.msra.mxu0 %v166
    %v168 = vand.u32 %v74, 4294901760
    %169 = vmatpush.msra.mxu0 %v168
    %v170 = vand.u32 %v73, 4294901760
    %171 = vmatpush.msra.mxu0 %v170
    %v172 = vand.u32 %v72, 4294901760
    %173 = vmatpush.msra.mxu0 %v172
    %v174 = vand.u32 %v71, 4294901760
    %175 = vmatpush.msra.mxu0 %v174
    %v176 = vand.u32 %v70, 4294901760
    %177 = vmatpush.msra.mxu0 %v176
    %v178 = vand.u32 %v144, 4294901760
    %v179 = vsub.f32 %v144, %v178
    %v180 = vand.u32 %v179, 4294901760
    %v181 = vsub.f32 %v179, %v180
    %v182 = vand.u32 %v181, 4294901760
    %183 = vmatmul.f32.gmra.mxu0 %v182
    %v184 = vpop.f32.mrf.mxu0
    %v185 = vadd.f32 0.0, %v184
    %186 = vdwg.mxu0
    %v187 = vand.u32 %v85, 4294901760
    %v188 = vsub.f32 %v85, %v187
    %v189 = vand.u32 %v188, 4294901760
    %v190 = vsub.f32 %v188, %v189
    %v191 = vand.u32 %v190, 4294901760
    %192 = vmatpush.msra.mxu0 %v191
    %v193 = vand.u32 %v84, 4294901760
    %v194 = vsub.f32 %v84, %v193
    %v195 = vand.u32 %v194, 4294901760
    %v196 = vsub.f32 %v194, %v195
    %v197 = vand.u32 %v196, 4294901760
    %198 = vmatpush.msra.mxu0 %v197
    %v199 = vand.u32 %v83, 4294901760
    %v200 = vsub.f32 %v83, %v199
    %v201 = vand.u32 %v200, 4294901760
    %v202 = vsub.f32 %v200, %v201
    %v203 = vand.u32 %v202, 4294901760
    %204 = vmatpush.msra.mxu0 %v203
    %v205 = vand.u32 %v82, 4294901760
    %v206 = vsub.f32 %v82, %v205
    %v207 = vand.u32 %v206, 4294901760
    %v208 = vsub.f32 %v206, %v207
    %v209 = vand.u32 %v208, 4294901760
    %210 = vmatpush.msra.mxu0 %v209
    %v211 = vand.u32 %v81, 4294901760
    %v212 = vsub.f32 %v81, %v211
    %v213 = vand.u32 %v212, 4294901760
    %v214 = vsub.f32 %v212, %v213
    %v215 = vand.u32 %v214, 4294901760
    %216 = vmatpush.msra.mxu0 %v215
    %v217 = vand.u32 %v80, 4294901760
    %v218 = vsub.f32 %v80, %v217
    %v219 = vand.u32 %v218, 4294901760
    %v220 = vsub.f32 %v218, %v219
    %v221 = vand.u32 %v220, 4294901760
    %222 = vmatpush.msra.mxu0 %v221
    %v223 = vand.u32 %v79, 4294901760
    %v224 = vsub.f32 %v79, %v223
    %v225 = vand.u32 %v224, 4294901760
    %v226 = vsub.f32 %v224, %v225
    %v227 = vand.u32 %v226, 4294901760
    %228 = vmatpush.msra.mxu0 %v227
    %v229 = vand.u32 %v78, 4294901760
    %v230 = vsub.f32 %v78, %v229
    %v231 = vand.u32 %v230, 4294901760
    %v232 = vsub.f32 %v230, %v231
    %v233 = vand.u32 %v232, 4294901760
    %234 = vmatpush.msra.mxu0 %v233
    %v235 = vand.u32 %v77, 4294901760
    %v236 = vsub.f32 %v77, %v235
    %v237 = vand.u32 %v236, 4294901760
    %v238 = vsub.f32 %v236, %v237
    %v239 = vand.u32 %v238, 4294901760
    %240 = vmatpush.msra.mxu0 %v239
    %v241 = vand.u32 %v76, 4294901760
    %v242 = vsub.f32 %v76, %v241
    %v243 = vand.u32 %v242, 4294901760
    %v244 = vsub.f32 %v242, %v243
    %v245 = vand.u32 %v244, 4294901760
    %246 = vmatpush.msra.mxu0 %v245
    %v247 = vand.u32 %v75, 4294901760
    %v248 = vsub.f32 %v75, %v247
    %v249 = vand.u32 %v248, 4294901760
    %v250 = vsub.f32 %v248, %v249
    %v251 = vand.u32 %v250, 4294901760
    %252 = vmatpush.msra.mxu0 %v251
    %v253 = vand.u32 %v74, 4294901760
    %v254 = vsub.f32 %v74, %v253
    %v255 = vand.u32 %v254, 4294901760
    %v256 = vsub.f32 %v254, %v255
    %v257 = vand.u32 %v256, 4294901760
    %258 = vmatpush.msra.mxu0 %v257
    %v259 = vand.u32 %v73, 4294901760
    %v260 = vsub.f32 %v73, %v259
    %v261 = vand.u32 %v260, 4294901760
    %v262 = vsub.f32 %v260, %v261
    %v263 = vand.u32 %v262, 4294901760
    %264 = vmatpush.msra.mxu0 %v263
    %v265 = vand.u32 %v72, 4294901760
    %v266 = vsub.f32 %v72, %v265
    %v267 = vand.u32 %v266, 4294901760
    %v268 = vsub.f32 %v266, %v267
    %v269 = vand.u32 %v268, 4294901760
    %270 = vmatpush.msra.mxu0 %v269
    %v271 = vand.u32 %v71, 4294901760
    %v272 = vsub.f32 %v71, %v271
    %v273 = vand.u32 %v272, 4294901760
    %v274 = vsub.f32 %v272, %v273
    %v275 = vand.u32 %v274, 4294901760
    %276 = vmatpush.msra.mxu0 %v275
    %v277 = vand.u32 %v70, 4294901760
    %v278 = vsub.f32 %v70, %v277
    %v279 = vand.u32 %v278, 4294901760
    %v280 = vsub.f32 %v278, %v279
    %v281 = vand.u32 %v280, 4294901760
    %282 = vmatpush.msra.mxu0 %v281
    %v283 = vand.u32 %v144, 4294901760
    %284 = vmatmul.f32.gmra.mxu0 %v283
    %v285 = vpop.f32.mrf.mxu0
    %v286 = vadd.f32 %v185, %v285
    %287 = vdwg.mxu0
    %v288 = vand.u32 %v85, 4294901760
    %v289 = vsub.f32 %v85, %v288
    %290 = vmatpush.msra.mxu0 %v289
    %v291 = vand.u32 %v84, 4294901760
    %v292 = vsub.f32 %v84, %v291
    %293 = vmatpush.msra.mxu0 %v292
    %v294 = vand.u32 %v83, 4294901760
    %v295 = vsub.f32 %v83, %v294
    %296 = vmatpush.msra.mxu0 %v295
    %v297 = vand.u32 %v82, 4294901760
    %v298 = vsub.f32 %v82, %v297
    %299 = vmatpush.msra.mxu0 %v298
    %v300 = vand.u32 %v81, 4294901760
    %v301 = vsub.f32 %v81, %v300
    %302 = vmatpush.msra.mxu0 %v301
    %v303 = vand.u32 %v80, 4294901760
    %v304 = vsub.f32 %v80, %v303
    %305 = vmatpush.msra.mxu0 %v304
    %v306 = vand.u32 %v79, 4294901760
    %v307 = vsub.f32 %v79, %v306
    %308 = vmatpush.msra.mxu0 %v307
    %v309 = vand.u32 %v78, 4294901760
    %v310 = vsub.f32 %v78, %v309
    %311 = vmatpush.msra.mxu0 %v310
    %v312 = vand.u32 %v77, 4294901760
    %v313 = vsub.f32 %v77, %v312
    %314 = vmatpush.msra.mxu0 %v313
    %v315 = vand.u32 %v76, 4294901760
    %v316 = vsub.f32 %v76, %v315
    %317 = vmatpush.msra.mxu0 %v316
    %v318 = vand.u32 %v75, 4294901760
    %v319 = vsub.f32 %v75, %v318
    %320 = vmatpush.msra.mxu0 %v319
    %v321 = vand.u32 %v74, 4294901760
    %v322 = vsub.f32 %v74, %v321
    %323 = vmatpush.msra.mxu0 %v322
    %v324 = vand.u32 %v73, 4294901760
    %v325 = vsub.f32 %v73, %v324
    %326 = vmatpush.msra.mxu0 %v325
    %v327 = vand.u32 %v72, 4294901760
    %v328 = vsub.f32 %v72, %v327
    %329 = vmatpush.msra.mxu0 %v328
    %v330 = vand.u32 %v71, 4294901760
    %v331 = vsub.f32 %v71, %v330
    %332 = vmatpush.msra.mxu0 %v331
    %v333 = vand.u32 %v70, 4294901760
    %v334 = vsub.f32 %v70, %v333
    %335 = vmatpush.msra.mxu0 %v334
    %v336 = vand.u32 %v144, 4294901760
    %v337 = vsub.f32 %v144, %v336
    %338 = vmatmul.f32.gmra.mxu0 %v337
    %v339 = vpop.f32.mrf.mxu0
    %v340 = vadd.f32 %v286, %v339
    %341 = vdwg.mxu0
    %v342 = vand.u32 %v85, 4294901760
    %343 = vmatpush.msra.mxu0 %v342
    %v344 = vand.u32 %v84, 4294901760
    %345 = vmatpush.msra.mxu0 %v344
    %v346 = vand.u32 %v83, 4294901760
    %347 = vmatpush.msra.mxu0 %v346
    %v348 = vand.u32 %v82, 4294901760
    %349 = vmatpush.msra.mxu0 %v348
    %v350 = vand.u32 %v81, 4294901760
    %351 = vmatpush.msra.mxu0 %v350
    %v352 = vand.u32 %v80, 4294901760
    %353 = vmatpush.msra.mxu0 %v352
    %v354 = vand.u32 %v79, 4294901760
    %355 = vmatpush.msra.mxu0 %v354
    %v356 = vand.u32 %v78, 4294901760
    %357 = vmatpush.msra.mxu0 %v356
    %v358 = vand.u32 %v77, 4294901760
    %359 = vmatpush.msra.mxu0 %v358
    %v360 = vand.u32 %v76, 4294901760
    %361 = vmatpush.msra.mxu0 %v360
    %v362 = vand.u32 %v75, 4294901760
    %363 = vmatpush.msra.mxu0 %v362
    %v364 = vand.u32 %v74, 4294901760
    %365 = vmatpush.msra.mxu0 %v364
    %v366 = vand.u32 %v73, 4294901760
    %367 = vmatpush.msra.mxu0 %v366
    %v368 = vand.u32 %v72, 4294901760
    %369 = vmatpush.msra.mxu0 %v368
    %v370 = vand.u32 %v71, 4294901760
    %371 = vmatpush.msra.mxu0 %v370
    %v372 = vand.u32 %v70, 4294901760
    %373 = vmatpush.msra.mxu0 %v372
    %v374 = vand.u32 %v144, 4294901760
    %v375 = vsub.f32 %v144, %v374
    %v376 = vand.u32 %v375, 4294901760
    %377 = vmatmul.f32.gmra.mxu0 %v376
    %v378 = vpop.f32.mrf.mxu0
    %v379 = vadd.f32 %v340, %v378
    %380 = vdwg.mxu0
    %v381 = vand.u32 %v85, 4294901760
    %v382 = vsub.f32 %v85, %v381
    %v383 = vand.u32 %v382, 4294901760
    %384 = vmatpush.msra.mxu0 %v383
    %v385 = vand.u32 %v84, 4294901760
    %v386 = vsub.f32 %v84, %v385
    %v387 = vand.u32 %v386, 4294901760
    %388 = vmatpush.msra.mxu0 %v387
    %v389 = vand.u32 %v83, 4294901760
    %v390 = vsub.f32 %v83, %v389
    %v391 = vand.u32 %v390, 4294901760
    %392 = vmatpush.msra.mxu0 %v391
    %v393 = vand.u32 %v82, 4294901760
    %v394 = vsub.f32 %v82, %v393
    %v395 = vand.u32 %v394, 4294901760
    %396 = vmatpush.msra.mxu0 %v395
    %v397 = vand.u32 %v81, 4294901760
    %v398 = vsub.f32 %v81, %v397
    %v399 = vand.u32 %v398, 4294901760
    %400 = vmatpush.msra.mxu0 %v399
    %v401 = vand.u32 %v80, 4294901760
    %v402 = vsub.f32 %v80, %v401
    %v403 = vand.u32 %v402, 4294901760
    %404 = vmatpush.msra.mxu0 %v403
    %v405 = vand.u32 %v79, 4294901760
    %v406 = vsub.f32 %v79, %v405
    %v407 = vand.u32 %v406, 4294901760
    %408 = vmatpush.msra.mxu0 %v407
    %v409 = vand.u32 %v78, 4294901760
    %v410 = vsub.f32 %v78, %v409
    %v411 = vand.u32 %v410, 4294901760
    %412 = vmatpush.msra.mxu0 %v411
    %v413 = vand.u32 %v77, 4294901760
    %v414 = vsub.f32 %v77, %v413
    %v415 = vand.u32 %v414, 4294901760
    %416 = vmatpush.msra.mxu0 %v415
    %v417 = vand.u32 %v76, 4294901760
    %v418 = vsub.f32 %v76, %v417
    %v419 = vand.u32 %v418, 4294901760
    %420 = vmatpush.msra.mxu0 %v419
    %v421 = vand.u32 %v75, 4294901760
    %v422 = vsub.f32 %v75, %v421
    %v423 = vand.u32 %v422, 4294901760
    %424 = vmatpush.msra.mxu0 %v423
    %v425 = vand.u32 %v74, 4294901760
    %v426 = vsub.f32 %v74, %v425
    %v427 = vand.u32 %v426, 4294901760
    %428 = vmatpush.msra.mxu0 %v427
    %v429 = vand.u32 %v73, 4294901760
    %v430 = vsub.f32 %v73, %v429
    %v431 = vand.u32 %v430, 4294901760
    %432 = vmatpush.msra.mxu0 %v431
    %v433 = vand.u32 %v72, 4294901760
    %v434 = vsub.f32 %v72, %v433
    %v435 = vand.u32 %v434, 4294901760
    %436 = vmatpush.msra.mxu0 %v435
    %v437 = vand.u32 %v71, 4294901760
    %v438 = vsub.f32 %v71, %v437
    %v439 = vand.u32 %v438, 4294901760
    %440 = vmatpush.msra.mxu0 %v439
    %v441 = vand.u32 %v70, 4294901760
    %v442 = vsub.f32 %v70, %v441
    %v443 = vand.u32 %v442, 4294901760
    %444 = vmatpush.msra.mxu0 %v443
    %v445 = vand.u32 %v144, 4294901760
    %446 = vmatmul.f32.gmra.mxu0 %v445
    %v447 = vpop.f32.mrf.mxu0
    %v448 = vadd.f32 %v379, %v447
    %449 = vdwg.mxu0
    %v450 = vand.u32 %v85, 4294901760
    %451 = vmatpush.msra.mxu0 %v450
    %v452 = vand.u32 %v84, 4294901760
    %453 = vmatpush.msra.mxu0 %v452
    %v454 = vand.u32 %v83, 4294901760
    %455 = vmatpush.msra.mxu0 %v454
    %v456 = vand.u32 %v82, 4294901760
    %457 = vmatpush.msra.mxu0 %v456
    %v458 = vand.u32 %v81, 4294901760
    %459 = vmatpush.msra.mxu0 %v458
    %v460 = vand.u32 %v80, 4294901760
    %461 = vmatpush.msra.mxu0 %v460
    %v462 = vand.u32 %v79, 4294901760
    %463 = vmatpush.msra.mxu0 %v462
    %v464 = vand.u32 %v78, 4294901760
    %465 = vmatpush.msra.mxu0 %v464
    %v466 = vand.u32 %v77, 4294901760
    %467 = vmatpush.msra.mxu0 %v466
    %v468 = vand.u32 %v76, 4294901760
    %469 = vmatpush.msra.mxu0 %v468
    %v470 = vand.u32 %v75, 4294901760
    %471 = vmatpush.msra.mxu0 %v470
    %v472 = vand.u32 %v74, 4294901760
    %473 = vmatpush.msra.mxu0 %v472
    %v474 = vand.u32 %v73, 4294901760
    %475 = vmatpush.msra.mxu0 %v474
    %v476 = vand.u32 %v72, 4294901760
    %477 = vmatpush.msra.mxu0 %v476
    %v478 = vand.u32 %v71, 4294901760
    %479 = vmatpush.msra.mxu0 %v478
    %v480 = vand.u32 %v70, 4294901760
    %481 = vmatpush.msra.mxu0 %v480
    %v482 = vand.u32 %v144, 4294901760
    %483 = vmatmul.f32.gmra.mxu0 %v482
    %v484 = vpop.f32.mrf.mxu0
    %v485 = vadd.f32 %v448, %v484
    %486 = vdwg.mxu0
    %v487 = vand.u32 %v101, 4294901760
    %488 = vmatpush.msra.mxu0 %v487
    %v489 = vand.u32 %v100, 4294901760
    %490 = vmatpush.msra.mxu0 %v489
    %v491 = vand.u32 %v99, 4294901760
    %492 = vmatpush.msra.mxu0 %v491
    %v493 = vand.u32 %v98, 4294901760
    %494 = vmatpush.msra.mxu0 %v493
    %v495 = vand.u32 %v97, 4294901760
    %496 = vmatpush.msra.mxu0 %v495
    %v497 = vand.u32 %v96, 4294901760
    %498 = vmatpush.msra.mxu0 %v497
    %v499 = vand.u32 %v95, 4294901760
    %500 = vmatpush.msra.mxu0 %v499
    %v501 = vand.u32 %v94, 4294901760
    %502 = vmatpush.msra.mxu0 %v501
    %v503 = vand.u32 %v93, 4294901760
    %504 = vmatpush.msra.mxu0 %v503
    %v505 = vand.u32 %v92, 4294901760
    %506 = vmatpush.msra.mxu0 %v505
    %v507 = vand.u32 %v91, 4294901760
    %508 = vmatpush.msra.mxu0 %v507
    %v509 = vand.u32 %v90, 4294901760
    %510 = vmatpush.msra.mxu0 %v509
    %v511 = vand.u32 %v89, 4294901760
    %512 = vmatpush.msra.mxu0 %v511
    %v513 = vand.u32 %v88, 4294901760
    %514 = vmatpush.msra.mxu0 %v513
    %v515 = vand.u32 %v87, 4294901760
    %516 = vmatpush.msra.mxu0 %v515
    %v517 = vand.u32 %v86, 4294901760
    %518 = vmatpush.msra.mxu0 %v517
    %v519 = vand.u32 %v145, 4294901760
    %v520 = vsub.f32 %v145, %v519
    %v521 = vand.u32 %v520, 4294901760
    %v522 = vsub.f32 %v520, %v521
    %v523 = vand.u32 %v522, 4294901760
    %524 = vmatmul.f32.gmra.mxu0 %v523
    %v525 = vpop.f32.mrf.mxu0
    %v526 = vadd.f32 %v485, %v525
    %527 = vdwg.mxu0
    %v528 = vand.u32 %v101, 4294901760
    %v529 = vsub.f32 %v101, %v528
    %v530 = vand.u32 %v529, 4294901760
    %v531 = vsub.f32 %v529, %v530
    %v532 = vand.u32 %v531, 4294901760
    %533 = vmatpush.msra.mxu0 %v532
    %v534 = vand.u32 %v100, 4294901760
    %v535 = vsub.f32 %v100, %v534
    %v536 = vand.u32 %v535, 4294901760
    %v537 = vsub.f32 %v535, %v536
    %v538 = vand.u32 %v537, 4294901760
    %539 = vmatpush.msra.mxu0 %v538
    %v540 = vand.u32 %v99, 4294901760
    %v541 = vsub.f32 %v99, %v540
    %v542 = vand.u32 %v541, 4294901760
    %v543 = vsub.f32 %v541, %v542
    %v544 = vand.u32 %v543, 4294901760
    %545 = vmatpush.msra.mxu0 %v544
    %v546 = vand.u32 %v98, 4294901760
    %v547 = vsub.f32 %v98, %v546
    %v548 = vand.u32 %v547, 4294901760
    %v549 = vsub.f32 %v547, %v548
    %v550 = vand.u32 %v549, 4294901760
    %551 = vmatpush.msra.mxu0 %v550
    %v552 = vand.u32 %v97, 4294901760
    %v553 = vsub.f32 %v97, %v552
    %v554 = vand.u32 %v553, 4294901760
    %v555 = vsub.f32 %v553, %v554
    %v556 = vand.u32 %v555, 4294901760
    %557 = vmatpush.msra.mxu0 %v556
    %v558 = vand.u32 %v96, 4294901760
    %v559 = vsub.f32 %v96, %v558
    %v560 = vand.u32 %v559, 4294901760
    %v561 = vsub.f32 %v559, %v560
    %v562 = vand.u32 %v561, 4294901760
    %563 = vmatpush.msra.mxu0 %v562
    %v564 = vand.u32 %v95, 4294901760
    %v565 = vsub.f32 %v95, %v564
    %v566 = vand.u32 %v565, 4294901760
    %v567 = vsub.f32 %v565, %v566
    %v568 = vand.u32 %v567, 4294901760
    %569 = vmatpush.msra.mxu0 %v568
    %v570 = vand.u32 %v94, 4294901760
    %v571 = vsub.f32 %v94, %v570
    %v572 = vand.u32 %v571, 4294901760
    %v573 = vsub.f32 %v571, %v572
    %v574 = vand.u32 %v573, 4294901760
    %575 = vmatpush.msra.mxu0 %v574
    %v576 = vand.u32 %v93, 4294901760
    %v577 = vsub.f32 %v93, %v576
    %v578 = vand.u32 %v577, 4294901760
    %v579 = vsub.f32 %v577, %v578
    %v580 = vand.u32 %v579, 4294901760
    %581 = vmatpush.msra.mxu0 %v580
    %v582 = vand.u32 %v92, 4294901760
    %v583 = vsub.f32 %v92, %v582
    %v584 = vand.u32 %v583, 4294901760
    %v585 = vsub.f32 %v583, %v584
    %v586 = vand.u32 %v585, 4294901760
    %587 = vmatpush.msra.mxu0 %v586
    %v588 = vand.u32 %v91, 4294901760
    %v589 = vsub.f32 %v91, %v588
    %v590 = vand.u32 %v589, 4294901760
    %v591 = vsub.f32 %v589, %v590
    %v592 = vand.u32 %v591, 4294901760
    %593 = vmatpush.msra.mxu0 %v592
    %v594 = vand.u32 %v90, 4294901760
    %v595 = vsub.f32 %v90, %v594
    %v596 = vand.u32 %v595, 4294901760
    %v597 = vsub.f32 %v595, %v596
    %v598 = vand.u32 %v597, 4294901760
    %599 = vmatpush.msra.mxu0 %v598
    %v600 = vand.u32 %v89, 4294901760
    %v601 = vsub.f32 %v89, %v600
    %v602 = vand.u32 %v601, 4294901760
    %v603 = vsub.f32 %v601, %v602
    %v604 = vand.u32 %v603, 4294901760
    %605 = vmatpush.msra.mxu0 %v604
    %v606 = vand.u32 %v88, 4294901760
    %v607 = vsub.f32 %v88, %v606
    %v608 = vand.u32 %v607, 4294901760
    %v609 = vsub.f32 %v607, %v608
    %v610 = vand.u32 %v609, 4294901760
    %611 = vmatpush.msra.mxu0 %v610
    %v612 = vand.u32 %v87, 4294901760
    %v613 = vsub.f32 %v87, %v612
    %v614 = vand.u32 %v613, 4294901760
    %v615 = vsub.f32 %v613, %v614
    %v616 = vand.u32 %v615, 4294901760
    %617 = vmatpush.msra.mxu0 %v616
    %v618 = vand.u32 %v86, 4294901760
    %v619 = vsub.f32 %v86, %v618
    %v620 = vand.u32 %v619, 4294901760
    %v621 = vsub.f32 %v619, %v620
    %v622 = vand.u32 %v621, 4294901760
    %623 = vmatpush.msra.mxu0 %v622
    %v624 = vand.u32 %v145, 4294901760
    %625 = vmatmul.f32.gmra.mxu0 %v624
    %v626 = vpop.f32.mrf.mxu0
    %v627 = vadd.f32 %v526, %v626
    %628 = vdwg.mxu0
    %v629 = vand.u32 %v101, 4294901760
    %v630 = vsub.f32 %v101, %v629
    %631 = vmatpush.msra.mxu0 %v630
    %v632 = vand.u32 %v100, 4294901760
    %v633 = vsub.f32 %v100, %v632
    %634 = vmatpush.msra.mxu0 %v633
    %v635 = vand.u32 %v99, 4294901760
    %v636 = vsub.f32 %v99, %v635
    %637 = vmatpush.msra.mxu0 %v636
    %v638 = vand.u32 %v98, 4294901760
    %v639 = vsub.f32 %v98, %v638
    %640 = vmatpush.msra.mxu0 %v639
    %v641 = vand.u32 %v97, 4294901760
    %v642 = vsub.f32 %v97, %v641
    %643 = vmatpush.msra.mxu0 %v642
    %v644 = vand.u32 %v96, 4294901760
    %v645 = vsub.f32 %v96, %v644
    %646 = vmatpush.msra.mxu0 %v645
    %v647 = vand.u32 %v95, 4294901760
    %v648 = vsub.f32 %v95, %v647
    %649 = vmatpush.msra.mxu0 %v648
    %v650 = vand.u32 %v94, 4294901760
    %v651 = vsub.f32 %v94, %v650
    %652 = vmatpush.msra.mxu0 %v651
    %v653 = vand.u32 %v93, 4294901760
    %v654 = vsub.f32 %v93, %v653
    %655 = vmatpush.msra.mxu0 %v654
    %v656 = vand.u32 %v92, 4294901760
    %v657 = vsub.f32 %v92, %v656
    %658 = vmatpush.msra.mxu0 %v657
    %v659 = vand.u32 %v91, 4294901760
    %v660 = vsub.f32 %v91, %v659
    %661 = vmatpush.msra.mxu0 %v660
    %v662 = vand.u32 %v90, 4294901760
    %v663 = vsub.f32 %v90, %v662
    %664 = vmatpush.msra.mxu0 %v663
    %v665 = vand.u32 %v89, 4294901760
    %v666 = vsub.f32 %v89, %v665
    %667 = vmatpush.msra.mxu0 %v666
    %v668 = vand.u32 %v88, 4294901760
    %v669 = vsub.f32 %v88, %v668
    %670 = vmatpush.msra.mxu0 %v669
    %v671 = vand.u32 %v87, 4294901760
    %v672 = vsub.f32 %v87, %v671
    %673 = vmatpush.msra.mxu0 %v672
    %v674 = vand.u32 %v86, 4294901760
    %v675 = vsub.f32 %v86, %v674
    %676 = vmatpush.msra.mxu0 %v675
    %v677 = vand.u32 %v145, 4294901760
    %v678 = vsub.f32 %v145, %v677
    %679 = vmatmul.f32.gmra.mxu0 %v678
    %v680 = vpop.f32.mrf.mxu0
    %v681 = vadd.f32 %v627, %v680
    %682 = vdwg.mxu0
    %v683 = vand.u32 %v101, 4294901760
    %684 = vmatpush.msra.mxu0 %v683
    %v685 = vand.u32 %v100, 4294901760
    %686 = vmatpush.msra.mxu0 %v685
    %v687 = vand.u32 %v99, 4294901760
    %688 = vmatpush.msra.mxu0 %v687
    %v689 = vand.u32 %v98, 4294901760
    %690 = vmatpush.msra.mxu0 %v689
    %v691 = vand.u32 %v97, 4294901760
    %692 = vmatpush.msra.mxu0 %v691
    %v693 = vand.u32 %v96, 4294901760
    %694 = vmatpush.msra.mxu0 %v693
    %v695 = vand.u32 %v95, 4294901760
    %696 = vmatpush.msra.mxu0 %v695
    %v697 = vand.u32 %v94, 4294901760
    %698 = vmatpush.msra.mxu0 %v697
    %v699 = vand.u32 %v93, 4294901760
    %700 = vmatpush.msra.mxu0 %v699
    %v701 = vand.u32 %v92, 4294901760
    %702 = vmatpush.msra.mxu0 %v701
    %v703 = vand.u32 %v91, 4294901760
    %704 = vmatpush.msra.mxu0 %v703
    %v705 = vand.u32 %v90, 4294901760
    %706 = vmatpush.msra.mxu0 %v705
    %v707 = vand.u32 %v89, 4294901760
    %708 = vmatpush.msra.mxu0 %v707
    %v709 = vand.u32 %v88, 4294901760
    %710 = vmatpush.msra.mxu0 %v709
    %v711 = vand.u32 %v87, 4294901760
    %712 = vmatpush.msra.mxu0 %v711
    %v713 = vand.u32 %v86, 4294901760
    %714 = vmatpush.msra.mxu0 %v713
    %v715 = vand.u32 %v145, 4294901760
    %v716 = vsub.f32 %v145, %v715
    %v717 = vand.u32 %v716, 4294901760
    %718 = vmatmul.f32.gmra.mxu0 %v717
    %v719 = vpop.f32.mrf.mxu0
    %v720 = vadd.f32 %v681, %v719
    %721 = vdwg.mxu0
    %v722 = vand.u32 %v101, 4294901760
    %v723 = vsub.f32 %v101, %v722
    %v724 = vand.u32 %v723, 4294901760
    %725 = vmatpush.msra.mxu0 %v724
    %v726 = vand.u32 %v100, 4294901760
    %v727 = vsub.f32 %v100, %v726
    %v728 = vand.u32 %v727, 4294901760
    %729 = vmatpush.msra.mxu0 %v728
    %v730 = vand.u32 %v99, 4294901760
    %v731 = vsub.f32 %v99, %v730
    %v732 = vand.u32 %v731, 4294901760
    %733 = vmatpush.msra.mxu0 %v732
    %v734 = vand.u32 %v98, 4294901760
    %v735 = vsub.f32 %v98, %v734
    %v736 = vand.u32 %v735, 4294901760
    %737 = vmatpush.msra.mxu0 %v736
    %v738 = vand.u32 %v97, 4294901760
    %v739 = vsub.f32 %v97, %v738
    %v740 = vand.u32 %v739, 4294901760
    %741 = vmatpush.msra.mxu0 %v740
    %v742 = vand.u32 %v96, 4294901760
    %v743 = vsub.f32 %v96, %v742
    %v744 = vand.u32 %v743, 4294901760
    %745 = vmatpush.msra.mxu0 %v744
    %v746 = vand.u32 %v95, 4294901760
    %v747 = vsub.f32 %v95, %v746
    %v748 = vand.u32 %v747, 4294901760
    %749 = vmatpush.msra.mxu0 %v748
    %v750 = vand.u32 %v94, 4294901760
    %v751 = vsub.f32 %v94, %v750
    %v752 = vand.u32 %v751, 4294901760
    %753 = vmatpush.msra.mxu0 %v752
    %v754 = vand.u32 %v93, 4294901760
    %v755 = vsub.f32 %v93, %v754
    %v756 = vand.u32 %v755, 4294901760
    %757 = vmatpush.msra.mxu0 %v756
    %v758 = vand.u32 %v92, 4294901760
    %v759 = vsub.f32 %v92, %v758
    %v760 = vand.u32 %v759, 4294901760
    %761 = vmatpush.msra.mxu0 %v760
    %v762 = vand.u32 %v91, 4294901760
    %v763 = vsub.f32 %v91, %v762
    %v764 = vand.u32 %v763, 4294901760
    %765 = vmatpush.msra.mxu0 %v764
    %v766 = vand.u32 %v90, 4294901760
    %v767 = vsub.f32 %v90, %v766
    %v768 = vand.u32 %v767, 4294901760
    %769 = vmatpush.msra.mxu0 %v768
    %v770 = vand.u32 %v89, 4294901760
    %v771 = vsub.f32 %v89, %v770
    %v772 = vand.u32 %v771, 4294901760
    %773 = vmatpush.msra.mxu0 %v772
    %v774 = vand.u32 %v88, 4294901760
    %v775 = vsub.f32 %v88, %v774
    %v776 = vand.u32 %v775, 4294901760
    %777 = vmatpush.msra.mxu0 %v776
    %v778 = vand.u32 %v87, 4294901760
    %v779 = vsub.f32 %v87, %v778
    %v780 = vand.u32 %v779, 4294901760
    %781 = vmatpush.msra.mxu0 %v780
    %v782 = vand.u32 %v86, 4294901760
    %v783 = vsub.f32 %v86, %v782
    %v784 = vand.u32 %v783, 4294901760
    %785 = vmatpush.msra.mxu0 %v784
    %v786 = vand.u32 %v145, 4294901760
    %787 = vmatmul.f32.gmra.mxu0 %v786
    %v788 = vpop.f32.mrf.mxu0
    %v789 = vadd.f32 %v720, %v788
    %790 = vdwg.mxu0
    %v791 = vand.u32 %v101, 4294901760
    %792 = vmatpush.msra.mxu0 %v791
    %v793 = vand.u32 %v100, 4294901760
    %794 = vmatpush.msra.mxu0 %v793
    %v795 = vand.u32 %v99, 4294901760
    %796 = vmatpush.msra.mxu0 %v795
    %v797 = vand.u32 %v98, 4294901760
    %798 = vmatpush.msra.mxu0 %v797
    %v799 = vand.u32 %v97, 4294901760
    %800 = vmatpush.msra.mxu0 %v799
    %v801 = vand.u32 %v96, 4294901760
    %802 = vmatpush.msra.mxu0 %v801
    %v803 = vand.u32 %v95, 4294901760
    %804 = vmatpush.msra.mxu0 %v803
    %v805 = vand.u32 %v94, 4294901760
    %806 = vmatpush.msra.mxu0 %v805
    %v807 = vand.u32 %v93, 4294901760
    %808 = vmatpush.msra.mxu0 %v807
    %v809 = vand.u32 %v92, 4294901760
    %810 = vmatpush.msra.mxu0 %v809
    %v811 = vand.u32 %v91, 4294901760
    %812 = vmatpush.msra.mxu0 %v811
    %v813 = vand.u32 %v90, 4294901760
    %814 = vmatpush.msra.mxu0 %v813
    %v815 = vand.u32 %v89, 4294901760
    %816 = vmatpush.msra.mxu0 %v815
    %v817 = vand.u32 %v88, 4294901760
    %818 = vmatpush.msra.mxu0 %v817
    %v819 = vand.u32 %v87, 4294901760
    %820 = vmatpush.msra.mxu0 %v819
    %v821 = vand.u32 %v86, 4294901760
    %822 = vmatpush.msra.mxu0 %v821
    %v823 = vand.u32 %v145, 4294901760
    %824 = vmatmul.f32.gmra.mxu0 %v823
    %v825 = vpop.f32.mrf.mxu0
    %v826 = vadd.f32 %v789, %v825
    %827 = vdwg.mxu0
    %828 = vset.pattern.permute.xlu0 1
    %829 = vperm.xlu0 %828, %v69
    %v830 = vpop.permute.xlu0 %829
    %vm831 = vcmp.eq.s32.totalorder %v135, %v830
    %vm832 = vcmp.eq.s32.totalorder %v136, %v830
    %v833 = vsel %vm831, 1, 0
    %v834 = vsel %vm832, 1, 0
    %v835 = vcvt.s32.f32 %v833
    %v836 = vcvt.s32.f32 %v834
    %v837 = vand.u32 %v85, 4294901760
    %838 = vmatpush.msra.mxu0 %v837
    %v839 = vand.u32 %v84, 4294901760
    %840 = vmatpush.msra.mxu0 %v839
    %v841 = vand.u32 %v83, 4294901760
    %842 = vmatpush.msra.mxu0 %v841
    %v843 = vand.u32 %v82, 4294901760
    %844 = vmatpush.msra.mxu0 %v843
    %v845 = vand.u32 %v81, 4294901760
    %846 = vmatpush.msra.mxu0 %v845
    %v847 = vand.u32 %v80, 4294901760
    %848 = vmatpush.msra.mxu0 %v847
    %v849 = vand.u32 %v79, 4294901760
    %850 = vmatpush.msra.mxu0 %v849
    %v851 = vand.u32 %v78, 4294901760
    %852 = vmatpush.msra.mxu0 %v851
    %v853 = vand.u32 %v77, 4294901760
    %854 = vmatpush.msra.mxu0 %v853
    %v855 = vand.u32 %v76, 4294901760
    %856 = vmatpush.msra.mxu0 %v855
    %v857 = vand.u32 %v75, 4294901760
    %858 = vmatpush.msra.mxu0 %v857
    %v859 = vand.u32 %v74, 4294901760
    %860 = vmatpush.msra.mxu0 %v859
    %v861 = vand.u32 %v73, 4294901760
    %862 = vmatpush.msra.mxu0 %v861
    %v863 = vand.u32 %v72, 4294901760
    %864 = vmatpush.msra.mxu0 %v863
    %v865 = vand.u32 %v71, 4294901760
    %866 = vmatpush.msra.mxu0 %v865
    %v867 = vand.u32 %v70, 4294901760
    %868 = vmatpush.msra.mxu0 %v867
    %v869 = vand.u32 %v835, 4294901760
    %v870 = vsub.f32 %v835, %v869
    %v871 = vand.u32 %v870, 4294901760
    %v872 = vsub.f32 %v870, %v871
    %v873 = vand.u32 %v872, 4294901760
    %874 = vmatmul.f32.gmra.mxu0 %v873
    %v875 = vpop.f32.mrf.mxu0
    %v876 = vadd.f32 0.0, %v875
    %877 = vdwg.mxu0
    %v878 = vand.u32 %v85, 4294901760
    %v879 = vsub.f32 %v85, %v878
    %v880 = vand.u32 %v879, 4294901760
    %v881 = vsub.f32 %v879, %v880
    %v882 = vand.u32 %v881, 4294901760
    %883 = vmatpush.msra.mxu0 %v882
    %v884 = vand.u32 %v84, 4294901760
    %v885 = vsub.f32 %v84, %v884
    %v886 = vand.u32 %v885, 4294901760
    %v887 = vsub.f32 %v885, %v886
    %v888 = vand.u32 %v887, 4294901760
    %889 = vmatpush.msra.mxu0 %v888
    %v890 = vand.u32 %v83, 4294901760
    %v891 = vsub.f32 %v83, %v890
    %v892 = vand.u32 %v891, 4294901760
    %v893 = vsub.f32 %v891, %v892
    %v894 = vand.u32 %v893, 4294901760
    %895 = vmatpush.msra.mxu0 %v894
    %v896 = vand.u32 %v82, 4294901760
    %v897 = vsub.f32 %v82, %v896
    %v898 = vand.u32 %v897, 4294901760
    %v899 = vsub.f32 %v897, %v898
    %v900 = vand.u32 %v899, 4294901760
    %901 = vmatpush.msra.mxu0 %v900
    %v902 = vand.u32 %v81, 4294901760
    %v903 = vsub.f32 %v81, %v902
    %v904 = vand.u32 %v903, 4294901760
    %v905 = vsub.f32 %v903, %v904
    %v906 = vand.u32 %v905, 4294901760
    %907 = vmatpush.msra.mxu0 %v906
    %v908 = vand.u32 %v80, 4294901760
    %v909 = vsub.f32 %v80, %v908
    %v910 = vand.u32 %v909, 4294901760
    %v911 = vsub.f32 %v909, %v910
    %v912 = vand.u32 %v911, 4294901760
    %913 = vmatpush.msra.mxu0 %v912
    %v914 = vand.u32 %v79, 4294901760
    %v915 = vsub.f32 %v79, %v914
    %v916 = vand.u32 %v915, 4294901760
    %v917 = vsub.f32 %v915, %v916
    %v918 = vand.u32 %v917, 4294901760
    %919 = vmatpush.msra.mxu0 %v918
    %v920 = vand.u32 %v78, 4294901760
    %v921 = vsub.f32 %v78, %v920
    %v922 = vand.u32 %v921, 4294901760
    %v923 = vsub.f32 %v921, %v922
    %v924 = vand.u32 %v923, 4294901760
    %925 = vmatpush.msra.mxu0 %v924
    %v926 = vand.u32 %v77, 4294901760
    %v927 = vsub.f32 %v77, %v926
    %v928 = vand.u32 %v927, 4294901760
    %v929 = vsub.f32 %v927, %v928
    %v930 = vand.u32 %v929, 4294901760
    %931 = vmatpush.msra.mxu0 %v930
    %v932 = vand.u32 %v76, 4294901760
    %v933 = vsub.f32 %v76, %v932
    %v934 = vand.u32 %v933, 4294901760
    %v935 = vsub.f32 %v933, %v934
    %v936 = vand.u32 %v935, 4294901760
    %937 = vmatpush.msra.mxu0 %v936
    %v938 = vand.u32 %v75, 4294901760
    %v939 = vsub.f32 %v75, %v938
    %v940 = vand.u32 %v939, 4294901760
    %v941 = vsub.f32 %v939, %v940
    %v942 = vand.u32 %v941, 4294901760
    %943 = vmatpush.msra.mxu0 %v942
    %v944 = vand.u32 %v74, 4294901760
    %v945 = vsub.f32 %v74, %v944
    %v946 = vand.u32 %v945, 4294901760
    %v947 = vsub.f32 %v945, %v946
    %v948 = vand.u32 %v947, 4294901760
    %949 = vmatpush.msra.mxu0 %v948
    %v950 = vand.u32 %v73, 4294901760
    %v951 = vsub.f32 %v73, %v950
    %v952 = vand.u32 %v951, 4294901760
    %v953 = vsub.f32 %v951, %v952
    %v954 = vand.u32 %v953, 4294901760
    %955 = vmatpush.msra.mxu0 %v954
    %v956 = vand.u32 %v72, 4294901760
    %v957 = vsub.f32 %v72, %v956
    %v958 = vand.u32 %v957, 4294901760
    %v959 = vsub.f32 %v957, %v958
    %v960 = vand.u32 %v959, 4294901760
    %961 = vmatpush.msra.mxu0 %v960
    %v962 = vand.u32 %v71, 4294901760
    %v963 = vsub.f32 %v71, %v962
    %v964 = vand.u32 %v963, 4294901760
    %v965 = vsub.f32 %v963, %v964
    %v966 = vand.u32 %v965, 4294901760
    %967 = vmatpush.msra.mxu0 %v966
    %v968 = vand.u32 %v70, 4294901760
    %v969 = vsub.f32 %v70, %v968
    %v970 = vand.u32 %v969, 4294901760
    %v971 = vsub.f32 %v969, %v970
    %v972 = vand.u32 %v971, 4294901760
    %973 = vmatpush.msra.mxu0 %v972
    %v974 = vand.u32 %v835, 4294901760
    %975 = vmatmul.f32.gmra.mxu0 %v974
    %v976 = vpop.f32.mrf.mxu0
    %v977 = vadd.f32 %v876, %v976
    %978 = vdwg.mxu0
    %v979 = vand.u32 %v85, 4294901760
    %v980 = vsub.f32 %v85, %v979
    %981 = vmatpush.msra.mxu0 %v980
    %v982 = vand.u32 %v84, 4294901760
    %v983 = vsub.f32 %v84, %v982
    %984 = vmatpush.msra.mxu0 %v983
    %v985 = vand.u32 %v83, 4294901760
    %v986 = vsub.f32 %v83, %v985
    %987 = vmatpush.msra.mxu0 %v986
    %v988 = vand.u32 %v82, 4294901760
    %v989 = vsub.f32 %v82, %v988
    %990 = vmatpush.msra.mxu0 %v989
    %v991 = vand.u32 %v81, 4294901760
    %v992 = vsub.f32 %v81, %v991
    %993 = vmatpush.msra.mxu0 %v992
    %v994 = vand.u32 %v80, 4294901760
    %v995 = vsub.f32 %v80, %v994
    %996 = vmatpush.msra.mxu0 %v995
    %v997 = vand.u32 %v79, 4294901760
    %v998 = vsub.f32 %v79, %v997
    %999 = vmatpush.msra.mxu0 %v998
    %v1000 = vand.u32 %v78, 4294901760
    %v1001 = vsub.f32 %v78, %v1000
    %1002 = vmatpush.msra.mxu0 %v1001
    %v1003 = vand.u32 %v77, 4294901760
    %v1004 = vsub.f32 %v77, %v1003
    %1005 = vmatpush.msra.mxu0 %v1004
    %v1006 = vand.u32 %v76, 4294901760
    %v1007 = vsub.f32 %v76, %v1006
    %1008 = vmatpush.msra.mxu0 %v1007
    %v1009 = vand.u32 %v75, 4294901760
    %v1010 = vsub.f32 %v75, %v1009
    %1011 = vmatpush.msra.mxu0 %v1010
    %v1012 = vand.u32 %v74, 4294901760
    %v1013 = vsub.f32 %v74, %v1012
    %1014 = vmatpush.msra.mxu0 %v1013
    %v1015 = vand.u32 %v73, 4294901760
    %v1016 = vsub.f32 %v73, %v1015
    %1017 = vmatpush.msra.mxu0 %v1016
    %v1018 = vand.u32 %v72, 4294901760
    %v1019 = vsub.f32 %v72, %v1018
    %1020 = vmatpush.msra.mxu0 %v1019
    %v1021 = vand.u32 %v71, 4294901760
    %v1022 = vsub.f32 %v71, %v1021
    %1023 = vmatpush.msra.mxu0 %v1022
    %v1024 = vand.u32 %v70, 4294901760
    %v1025 = vsub.f32 %v70, %v1024
    %1026 = vmatpush.msra.mxu0 %v1025
    %v1027 = vand.u32 %v835, 4294901760
    %v1028 = vsub.f32 %v835, %v1027
    %1029 = vmatmul.f32.gmra.mxu0 %v1028
    %v1030 = vpop.f32.mrf.mxu0
    %v1031 = vadd.f32 %v977, %v1030
    %1032 = vdwg.mxu0
    %v1033 = vand.u32 %v85, 4294901760
    %1034 = vmatpush.msra.mxu0 %v1033
    %v1035 = vand.u32 %v84, 4294901760
    %1036 = vmatpush.msra.mxu0 %v1035
    %v1037 = vand.u32 %v83, 4294901760
    %1038 = vmatpush.msra.mxu0 %v1037
    %v1039 = vand.u32 %v82, 4294901760
    %1040 = vmatpush.msra.mxu0 %v1039
    %v1041 = vand.u32 %v81, 4294901760
    %1042 = vmatpush.msra.mxu0 %v1041
    %v1043 = vand.u32 %v80, 4294901760
    %1044 = vmatpush.msra.mxu0 %v1043
    %v1045 = vand.u32 %v79, 4294901760
    %1046 = vmatpush.msra.mxu0 %v1045
    %v1047 = vand.u32 %v78, 4294901760
    %1048 = vmatpush.msra.mxu0 %v1047
    %v1049 = vand.u32 %v77, 4294901760
    %1050 = vmatpush.msra.mxu0 %v1049
    %v1051 = vand.u32 %v76, 4294901760
    %1052 = vmatpush.msra.mxu0 %v1051
    %v1053 = vand.u32 %v75, 4294901760
    %1054 = vmatpush.msra.mxu0 %v1053
    %v1055 = vand.u32 %v74, 4294901760
    %1056 = vmatpush.msra.mxu0 %v1055
    %v1057 = vand.u32 %v73, 4294901760
    %1058 = vmatpush.msra.mxu0 %v1057
    %v1059 = vand.u32 %v72, 4294901760
    %1060 = vmatpush.msra.mxu0 %v1059
    %v1061 = vand.u32 %v71, 4294901760
    %1062 = vmatpush.msra.mxu0 %v1061
    %v1063 = vand.u32 %v70, 4294901760
    %1064 = vmatpush.msra.mxu0 %v1063
    %v1065 = vand.u32 %v835, 4294901760
    %v1066 = vsub.f32 %v835, %v1065
    %v1067 = vand.u32 %v1066, 4294901760
    %1068 = vmatmul.f32.gmra.mxu0 %v1067
    %v1069 = vpop.f32.mrf.mxu0
    %v1070 = vadd.f32 %v1031, %v1069
    %1071 = vdwg.mxu0
    %v1072 = vand.u32 %v85, 4294901760
    %v1073 = vsub.f32 %v85, %v1072
    %v1074 = vand.u32 %v1073, 4294901760
    %1075 = vmatpush.msra.mxu0 %v1074
    %v1076 = vand.u32 %v84, 4294901760
    %v1077 = vsub.f32 %v84, %v1076
    %v1078 = vand.u32 %v1077, 4294901760
    %1079 = vmatpush.msra.mxu0 %v1078
    %v1080 = vand.u32 %v83, 4294901760
    %v1081 = vsub.f32 %v83, %v1080
    %v1082 = vand.u32 %v1081, 4294901760
    %1083 = vmatpush.msra.mxu0 %v1082
    %v1084 = vand.u32 %v82, 4294901760
    %v1085 = vsub.f32 %v82, %v1084
    %v1086 = vand.u32 %v1085, 4294901760
    %1087 = vmatpush.msra.mxu0 %v1086
    %v1088 = vand.u32 %v81, 4294901760
    %v1089 = vsub.f32 %v81, %v1088
    %v1090 = vand.u32 %v1089, 4294901760
    %1091 = vmatpush.msra.mxu0 %v1090
    %v1092 = vand.u32 %v80, 4294901760
    %v1093 = vsub.f32 %v80, %v1092
    %v1094 = vand.u32 %v1093, 4294901760
    %1095 = vmatpush.msra.mxu0 %v1094
    %v1096 = vand.u32 %v79, 4294901760
    %v1097 = vsub.f32 %v79, %v1096
    %v1098 = vand.u32 %v1097, 4294901760
    %1099 = vmatpush.msra.mxu0 %v1098
    %v1100 = vand.u32 %v78, 4294901760
    %v1101 = vsub.f32 %v78, %v1100
    %v1102 = vand.u32 %v1101, 4294901760
    %1103 = vmatpush.msra.mxu0 %v1102
    %v1104 = vand.u32 %v77, 4294901760
    %v1105 = vsub.f32 %v77, %v1104
    %v1106 = vand.u32 %v1105, 4294901760
    %1107 = vmatpush.msra.mxu0 %v1106
    %v1108 = vand.u32 %v76, 4294901760
    %v1109 = vsub.f32 %v76, %v1108
    %v1110 = vand.u32 %v1109, 4294901760
    %1111 = vmatpush.msra.mxu0 %v1110
    %v1112 = vand.u32 %v75, 4294901760
    %v1113 = vsub.f32 %v75, %v1112
    %v1114 = vand.u32 %v1113, 4294901760
    %1115 = vmatpush.msra.mxu0 %v1114
    %v1116 = vand.u32 %v74, 4294901760
    %v1117 = vsub.f32 %v74, %v1116
    %v1118 = vand.u32 %v1117, 4294901760
    %1119 = vmatpush.msra.mxu0 %v1118
    %v1120 = vand.u32 %v73, 4294901760
    %v1121 = vsub.f32 %v73, %v1120
    %v1122 = vand.u32 %v1121, 4294901760
    %1123 = vmatpush.msra.mxu0 %v1122
    %v1124 = vand.u32 %v72, 4294901760
    %v1125 = vsub.f32 %v72, %v1124
    %v1126 = vand.u32 %v1125, 4294901760
    %1127 = vmatpush.msra.mxu0 %v1126
    %v1128 = vand.u32 %v71, 4294901760
    %v1129 = vsub.f32 %v71, %v1128
    %v1130 = vand.u32 %v1129, 4294901760
    %1131 = vmatpush.msra.mxu0 %v1130
    %v1132 = vand.u32 %v70, 4294901760
    %v1133 = vsub.f32 %v70, %v1132
    %v1134 = vand.u32 %v1133, 4294901760
    %1135 = vmatpush.msra.mxu0 %v1134
    %v1136 = vand.u32 %v835, 4294901760
    %1137 = vmatmul.f32.gmra.mxu0 %v1136
    %v1138 = vpop.f32.mrf.mxu0
    %v1139 = vadd.f32 %v1070, %v1138
    %1140 = vdwg.mxu0
    %v1141 = vand.u32 %v85, 4294901760
    %1142 = vmatpush.msra.mxu0 %v1141
    %v1143 = vand.u32 %v84, 4294901760
    %1144 = vmatpush.msra.mxu0 %v1143
    %v1145 = vand.u32 %v83, 4294901760
    %1146 = vmatpush.msra.mxu0 %v1145
    %v1147 = vand.u32 %v82, 4294901760
    %1148 = vmatpush.msra.mxu0 %v1147
    %v1149 = vand.u32 %v81, 4294901760
    %1150 = vmatpush.msra.mxu0 %v1149
    %v1151 = vand.u32 %v80, 4294901760
    %1152 = vmatpush.msra.mxu0 %v1151
    %v1153 = vand.u32 %v79, 4294901760
    %1154 = vmatpush.msra.mxu0 %v1153
    %v1155 = vand.u32 %v78, 4294901760
    %1156 = vmatpush.msra.mxu0 %v1155
    %v1157 = vand.u32 %v77, 4294901760
    %1158 = vmatpush.msra.mxu0 %v1157
    %v1159 = vand.u32 %v76, 4294901760
    %1160 = vmatpush.msra.mxu0 %v1159
    %v1161 = vand.u32 %v75, 4294901760
    %1162 = vmatpush.msra.mxu0 %v1161
    %v1163 = vand.u32 %v74, 4294901760
    %1164 = vmatpush.msra.mxu0 %v1163
    %v1165 = vand.u32 %v73, 4294901760
    %1166 = vmatpush.msra.mxu0 %v1165
    %v1167 = vand.u32 %v72, 4294901760
    %1168 = vmatpush.msra.mxu0 %v1167
    %v1169 = vand.u32 %v71, 4294901760
    %1170 = vmatpush.msra.mxu0 %v1169
    %v1171 = vand.u32 %v70, 4294901760
    %1172 = vmatpush.msra.mxu0 %v1171
    %v1173 = vand.u32 %v835, 4294901760
    %1174 = vmatmul.f32.gmra.mxu0 %v1173
    %v1175 = vpop.f32.mrf.mxu0
    %v1176 = vadd.f32 %v1139, %v1175
    %1177 = vdwg.mxu0
    %v1178 = vand.u32 %v101, 4294901760
    %1179 = vmatpush.msra.mxu0 %v1178
    %v1180 = vand.u32 %v100, 4294901760
    %1181 = vmatpush.msra.mxu0 %v1180
    %v1182 = vand.u32 %v99, 4294901760
    %1183 = vmatpush.msra.mxu0 %v1182
    %v1184 = vand.u32 %v98, 4294901760
    %1185 = vmatpush.msra.mxu0 %v1184
    %v1186 = vand.u32 %v97, 4294901760
    %1187 = vmatpush.msra.mxu0 %v1186
    %v1188 = vand.u32 %v96, 4294901760
    %1189 = vmatpush.msra.mxu0 %v1188
    %v1190 = vand.u32 %v95, 4294901760
    %1191 = vmatpush.msra.mxu0 %v1190
    %v1192 = vand.u32 %v94, 4294901760
    %1193 = vmatpush.msra.mxu0 %v1192
    %v1194 = vand.u32 %v93, 4294901760
    %1195 = vmatpush.msra.mxu0 %v1194
    %v1196 = vand.u32 %v92, 4294901760
    %1197 = vmatpush.msra.mxu0 %v1196
    %v1198 = vand.u32 %v91, 4294901760
    %1199 = vmatpush.msra.mxu0 %v1198
    %v1200 = vand.u32 %v90, 4294901760
    %1201 = vmatpush.msra.mxu0 %v1200
    %v1202 = vand.u32 %v89, 4294901760
    %1203 = vmatpush.msra.mxu0 %v1202
    %v1204 = vand.u32 %v88, 4294901760
    %1205 = vmatpush.msra.mxu0 %v1204
    %v1206 = vand.u32 %v87, 4294901760
    %1207 = vmatpush.msra.mxu0 %v1206
    %v1208 = vand.u32 %v86, 4294901760
    %1209 = vmatpush.msra.mxu0 %v1208
    %v1210 = vand.u32 %v836, 4294901760
    %v1211 = vsub.f32 %v836, %v1210
    %v1212 = vand.u32 %v1211, 4294901760
    %v1213 = vsub.f32 %v1211, %v1212
    %v1214 = vand.u32 %v1213, 4294901760
    %1215 = vmatmul.f32.gmra.mxu0 %v1214
    %v1216 = vpop.f32.mrf.mxu0
    %v1217 = vadd.f32 %v1176, %v1216
    %1218 = vdwg.mxu0
    %v1219 = vand.u32 %v101, 4294901760
    %v1220 = vsub.f32 %v101, %v1219
    %v1221 = vand.u32 %v1220, 4294901760
    %v1222 = vsub.f32 %v1220, %v1221
    %v1223 = vand.u32 %v1222, 4294901760
    %1224 = vmatpush.msra.mxu0 %v1223
    %v1225 = vand.u32 %v100, 4294901760
    %v1226 = vsub.f32 %v100, %v1225
    %v1227 = vand.u32 %v1226, 4294901760
    %v1228 = vsub.f32 %v1226, %v1227
    %v1229 = vand.u32 %v1228, 4294901760
    %1230 = vmatpush.msra.mxu0 %v1229
    %v1231 = vand.u32 %v99, 4294901760
    %v1232 = vsub.f32 %v99, %v1231
    %v1233 = vand.u32 %v1232, 4294901760
    %v1234 = vsub.f32 %v1232, %v1233
    %v1235 = vand.u32 %v1234, 4294901760
    %1236 = vmatpush.msra.mxu0 %v1235
    %v1237 = vand.u32 %v98, 4294901760
    %v1238 = vsub.f32 %v98, %v1237
    %v1239 = vand.u32 %v1238, 4294901760
    %v1240 = vsub.f32 %v1238, %v1239
    %v1241 = vand.u32 %v1240, 4294901760
    %1242 = vmatpush.msra.mxu0 %v1241
    %v1243 = vand.u32 %v97, 4294901760
    %v1244 = vsub.f32 %v97, %v1243
    %v1245 = vand.u32 %v1244, 4294901760
    %v1246 = vsub.f32 %v1244, %v1245
    %v1247 = vand.u32 %v1246, 4294901760
    %1248 = vmatpush.msra.mxu0 %v1247
    %v1249 = vand.u32 %v96, 4294901760
    %v1250 = vsub.f32 %v96, %v1249
    %v1251 = vand.u32 %v1250, 4294901760
    %v1252 = vsub.f32 %v1250, %v1251
    %v1253 = vand.u32 %v1252, 4294901760
    %1254 = vmatpush.msra.mxu0 %v1253
    %v1255 = vand.u32 %v95, 4294901760
    %v1256 = vsub.f32 %v95, %v1255
    %v1257 = vand.u32 %v1256, 4294901760
    %v1258 = vsub.f32 %v1256, %v1257
    %v1259 = vand.u32 %v1258, 4294901760
    %1260 = vmatpush.msra.mxu0 %v1259
    %v1261 = vand.u32 %v94, 4294901760
    %v1262 = vsub.f32 %v94, %v1261
    %v1263 = vand.u32 %v1262, 4294901760
    %v1264 = vsub.f32 %v1262, %v1263
    %v1265 = vand.u32 %v1264, 4294901760
    %1266 = vmatpush.msra.mxu0 %v1265
    %v1267 = vand.u32 %v93, 4294901760
    %v1268 = vsub.f32 %v93, %v1267
    %v1269 = vand.u32 %v1268, 4294901760
    %v1270 = vsub.f32 %v1268, %v1269
    %v1271 = vand.u32 %v1270, 4294901760
    %1272 = vmatpush.msra.mxu0 %v1271
    %v1273 = vand.u32 %v92, 4294901760
    %v1274 = vsub.f32 %v92, %v1273
    %v1275 = vand.u32 %v1274, 4294901760
    %v1276 = vsub.f32 %v1274, %v1275
    %v1277 = vand.u32 %v1276, 4294901760
    %1278 = vmatpush.msra.mxu0 %v1277
    %v1279 = vand.u32 %v91, 4294901760
    %v1280 = vsub.f32 %v91, %v1279
    %v1281 = vand.u32 %v1280, 4294901760
    %v1282 = vsub.f32 %v1280, %v1281
    %v1283 = vand.u32 %v1282, 4294901760
    %1284 = vmatpush.msra.mxu0 %v1283
    %v1285 = vand.u32 %v90, 4294901760
    %v1286 = vsub.f32 %v90, %v1285
    %v1287 = vand.u32 %v1286, 4294901760
    %v1288 = vsub.f32 %v1286, %v1287
    %v1289 = vand.u32 %v1288, 4294901760
    %1290 = vmatpush.msra.mxu0 %v1289
    %v1291 = vand.u32 %v89, 4294901760
    %v1292 = vsub.f32 %v89, %v1291
    %v1293 = vand.u32 %v1292, 4294901760
    %v1294 = vsub.f32 %v1292, %v1293
    %v1295 = vand.u32 %v1294, 4294901760
    %1296 = vmatpush.msra.mxu0 %v1295
    %v1297 = vand.u32 %v88, 4294901760
    %v1298 = vsub.f32 %v88, %v1297
    %v1299 = vand.u32 %v1298, 4294901760
    %v1300 = vsub.f32 %v1298, %v1299
    %v1301 = vand.u32 %v1300, 4294901760
    %1302 = vmatpush.msra.mxu0 %v1301
    %v1303 = vand.u32 %v87, 4294901760
    %v1304 = vsub.f32 %v87, %v1303
    %v1305 = vand.u32 %v1304, 4294901760
    %v1306 = vsub.f32 %v1304, %v1305
    %v1307 = vand.u32 %v1306, 4294901760
    %1308 = vmatpush.msra.mxu0 %v1307
    %v1309 = vand.u32 %v86, 4294901760
    %v1310 = vsub.f32 %v86, %v1309
    %v1311 = vand.u32 %v1310, 4294901760
    %v1312 = vsub.f32 %v1310, %v1311
    %v1313 = vand.u32 %v1312, 4294901760
    %1314 = vmatpush.msra.mxu0 %v1313
    %v1315 = vand.u32 %v836, 4294901760
    %1316 = vmatmul.f32.gmra.mxu0 %v1315
    %v1317 = vpop.f32.mrf.mxu0
    %v1318 = vadd.f32 %v1217, %v1317
    %1319 = vdwg.mxu0
    %v1320 = vand.u32 %v101, 4294901760
    %v1321 = vsub.f32 %v101, %v1320
    %1322 = vmatpush.msra.mxu0 %v1321
    %v1323 = vand.u32 %v100, 4294901760
    %v1324 = vsub.f32 %v100, %v1323
    %1325 = vmatpush.msra.mxu0 %v1324
    %v1326 = vand.u32 %v99, 4294901760
    %v1327 = vsub.f32 %v99, %v1326
    %1328 = vmatpush.msra.mxu0 %v1327
    %v1329 = vand.u32 %v98, 4294901760
    %v1330 = vsub.f32 %v98, %v1329
    %1331 = vmatpush.msra.mxu0 %v1330
    %v1332 = vand.u32 %v97, 4294901760
    %v1333 = vsub.f32 %v97, %v1332
    %1334 = vmatpush.msra.mxu0 %v1333
    %v1335 = vand.u32 %v96, 4294901760
    %v1336 = vsub.f32 %v96, %v1335
    %1337 = vmatpush.msra.mxu0 %v1336
    %v1338 = vand.u32 %v95, 4294901760
    %v1339 = vsub.f32 %v95, %v1338
    %1340 = vmatpush.msra.mxu0 %v1339
    %v1341 = vand.u32 %v94, 4294901760
    %v1342 = vsub.f32 %v94, %v1341
    %1343 = vmatpush.msra.mxu0 %v1342
    %v1344 = vand.u32 %v93, 4294901760
    %v1345 = vsub.f32 %v93, %v1344
    %1346 = vmatpush.msra.mxu0 %v1345
    %v1347 = vand.u32 %v92, 4294901760
    %v1348 = vsub.f32 %v92, %v1347
    %1349 = vmatpush.msra.mxu0 %v1348
    %v1350 = vand.u32 %v91, 4294901760
    %v1351 = vsub.f32 %v91, %v1350
    %1352 = vmatpush.msra.mxu0 %v1351
    %v1353 = vand.u32 %v90, 4294901760
    %v1354 = vsub.f32 %v90, %v1353
    %1355 = vmatpush.msra.mxu0 %v1354
    %v1356 = vand.u32 %v89, 4294901760
    %v1357 = vsub.f32 %v89, %v1356
    %1358 = vmatpush.msra.mxu0 %v1357
    %v1359 = vand.u32 %v88, 4294901760
    %v1360 = vsub.f32 %v88, %v1359
    %1361 = vmatpush.msra.mxu0 %v1360
    %v1362 = vand.u32 %v87, 4294901760
    %v1363 = vsub.f32 %v87, %v1362
    %1364 = vmatpush.msra.mxu0 %v1363
    %v1365 = vand.u32 %v86, 4294901760
    %v1366 = vsub.f32 %v86, %v1365
    %1367 = vmatpush.msra.mxu0 %v1366
    %v1368 = vand.u32 %v836, 4294901760
    %v1369 = vsub.f32 %v836, %v1368
    %1370 = vmatmul.f32.gmra.mxu0 %v1369
    %v1371 = vpop.f32.mrf.mxu0
    %v1372 = vadd.f32 %v1318, %v1371
    %1373 = vdwg.mxu0
    %v1374 = vand.u32 %v101, 4294901760
    %1375 = vmatpush.msra.mxu0 %v1374
    %v1376 = vand.u32 %v100, 4294901760
    %1377 = vmatpush.msra.mxu0 %v1376
    %v1378 = vand.u32 %v99, 4294901760
    %1379 = vmatpush.msra.mxu0 %v1378
    %v1380 = vand.u32 %v98, 4294901760
    %1381 = vmatpush.msra.mxu0 %v1380
    %v1382 = vand.u32 %v97, 4294901760
    %1383 = vmatpush.msra.mxu0 %v1382
    %v1384 = vand.u32 %v96, 4294901760
    %1385 = vmatpush.msra.mxu0 %v1384
    %v1386 = vand.u32 %v95, 4294901760
    %1387 = vmatpush.msra.mxu0 %v1386
    %v1388 = vand.u32 %v94, 4294901760
    %1389 = vmatpush.msra.mxu0 %v1388
    %v1390 = vand.u32 %v93, 4294901760
    %1391 = vmatpush.msra.mxu0 %v1390
    %v1392 = vand.u32 %v92, 4294901760
    %1393 = vmatpush.msra.mxu0 %v1392
    %v1394 = vand.u32 %v91, 4294901760
    %1395 = vmatpush.msra.mxu0 %v1394
    %v1396 = vand.u32 %v90, 4294901760
    %1397 = vmatpush.msra.mxu0 %v1396
    %v1398 = vand.u32 %v89, 4294901760
    %1399 = vmatpush.msra.mxu0 %v1398
    %v1400 = vand.u32 %v88, 4294901760
    %1401 = vmatpush.msra.mxu0 %v1400
    %v1402 = vand.u32 %v87, 4294901760
    %1403 = vmatpush.msra.mxu0 %v1402
    %v1404 = vand.u32 %v86, 4294901760
    %1405 = vmatpush.msra.mxu0 %v1404
    %v1406 = vand.u32 %v836, 4294901760
    %v1407 = vsub.f32 %v836, %v1406
    %v1408 = vand.u32 %v1407, 4294901760
    %1409 = vmatmul.f32.gmra.mxu0 %v1408
    %v1410 = vpop.f32.mrf.mxu0
    %v1411 = vadd.f32 %v1372, %v1410
    %1412 = vdwg.mxu0
    %v1413 = vand.u32 %v101, 4294901760
    %v1414 = vsub.f32 %v101, %v1413
    %v1415 = vand.u32 %v1414, 4294901760
    %1416 = vmatpush.msra.mxu0 %v1415
    %v1417 = vand.u32 %v100, 4294901760
    %v1418 = vsub.f32 %v100, %v1417
    %v1419 = vand.u32 %v1418, 4294901760
    %1420 = vmatpush.msra.mxu0 %v1419
    %v1421 = vand.u32 %v99, 4294901760
    %v1422 = vsub.f32 %v99, %v1421
    %v1423 = vand.u32 %v1422, 4294901760
    %1424 = vmatpush.msra.mxu0 %v1423
    %v1425 = vand.u32 %v98, 4294901760
    %v1426 = vsub.f32 %v98, %v1425
    %v1427 = vand.u32 %v1426, 4294901760
    %1428 = vmatpush.msra.mxu0 %v1427
    %v1429 = vand.u32 %v97, 4294901760
    %v1430 = vsub.f32 %v97, %v1429
    %v1431 = vand.u32 %v1430, 4294901760
    %1432 = vmatpush.msra.mxu0 %v1431
    %v1433 = vand.u32 %v96, 4294901760
    %v1434 = vsub.f32 %v96, %v1433
    %v1435 = vand.u32 %v1434, 4294901760
    %1436 = vmatpush.msra.mxu0 %v1435
    %v1437 = vand.u32 %v95, 4294901760
    %v1438 = vsub.f32 %v95, %v1437
    %v1439 = vand.u32 %v1438, 4294901760
    %1440 = vmatpush.msra.mxu0 %v1439
    %v1441 = vand.u32 %v94, 4294901760
    %v1442 = vsub.f32 %v94, %v1441
    %v1443 = vand.u32 %v1442, 4294901760
    %1444 = vmatpush.msra.mxu0 %v1443
    %v1445 = vand.u32 %v93, 4294901760
    %v1446 = vsub.f32 %v93, %v1445
    %v1447 = vand.u32 %v1446, 4294901760
    %1448 = vmatpush.msra.mxu0 %v1447
    %v1449 = vand.u32 %v92, 4294901760
    %v1450 = vsub.f32 %v92, %v1449
    %v1451 = vand.u32 %v1450, 4294901760
    %1452 = vmatpush.msra.mxu0 %v1451
    %v1453 = vand.u32 %v91, 4294901760
    %v1454 = vsub.f32 %v91, %v1453
    %v1455 = vand.u32 %v1454, 4294901760
    %1456 = vmatpush.msra.mxu0 %v1455
    %v1457 = vand.u32 %v90, 4294901760
    %v1458 = vsub.f32 %v90, %v1457
    %v1459 = vand.u32 %v1458, 4294901760
    %1460 = vmatpush.msra.mxu0 %v1459
    %v1461 = vand.u32 %v89, 4294901760
    %v1462 = vsub.f32 %v89, %v1461
    %v1463 = vand.u32 %v1462, 4294901760
    %1464 = vmatpush.msra.mxu0 %v1463
    %v1465 = vand.u32 %v88, 4294901760
    %v1466 = vsub.f32 %v88, %v1465
    %v1467 = vand.u32 %v1466, 4294901760
    %1468 = vmatpush.msra.mxu0 %v1467
    %v1469 = vand.u32 %v87, 4294901760
    %v1470 = vsub.f32 %v87, %v1469
    %v1471 = vand.u32 %v1470, 4294901760
    %1472 = vmatpush.msra.mxu0 %v1471
    %v1473 = vand.u32 %v86, 4294901760
    %v1474 = vsub.f32 %v86, %v1473
    %v1475 = vand.u32 %v1474, 4294901760
    %1476 = vmatpush.msra.mxu0 %v1475
    %v1477 = vand.u32 %v836, 4294901760
    %1478 = vmatmul.f32.gmra.mxu0 %v1477
    %v1479 = vpop.f32.mrf.mxu0
    %v1480 = vadd.f32 %v1411, %v1479
    %1481 = vdwg.mxu0
    %v1482 = vand.u32 %v101, 4294901760
    %1483 = vmatpush.msra.mxu0 %v1482
    %v1484 = vand.u32 %v100, 4294901760
    %1485 = vmatpush.msra.mxu0 %v1484
    %v1486 = vand.u32 %v99, 4294901760
    %1487 = vmatpush.msra.mxu0 %v1486
    %v1488 = vand.u32 %v98, 4294901760
    %1489 = vmatpush.msra.mxu0 %v1488
    %v1490 = vand.u32 %v97, 4294901760
    %1491 = vmatpush.msra.mxu0 %v1490
    %v1492 = vand.u32 %v96, 4294901760
    %1493 = vmatpush.msra.mxu0 %v1492
    %v1494 = vand.u32 %v95, 4294901760
    %1495 = vmatpush.msra.mxu0 %v1494
    %v1496 = vand.u32 %v94, 4294901760
    %1497 = vmatpush.msra.mxu0 %v1496
    %v1498 = vand.u32 %v93, 4294901760
    %1499 = vmatpush.msra.mxu0 %v1498
    %v1500 = vand.u32 %v92, 4294901760
    %1501 = vmatpush.msra.mxu0 %v1500
    %v1502 = vand.u32 %v91, 4294901760
    %1503 = vmatpush.msra.mxu0 %v1502
    %v1504 = vand.u32 %v90, 4294901760
    %1505 = vmatpush.msra.mxu0 %v1504
    %v1506 = vand.u32 %v89, 4294901760
    %1507 = vmatpush.msra.mxu0 %v1506
    %v1508 = vand.u32 %v88, 4294901760
    %1509 = vmatpush.msra.mxu0 %v1508
    %v1510 = vand.u32 %v87, 4294901760
    %1511 = vmatpush.msra.mxu0 %v1510
    %v1512 = vand.u32 %v86, 4294901760
    %1513 = vmatpush.msra.mxu0 %v1512
    %v1514 = vand.u32 %v836, 4294901760
    %1515 = vmatmul.f32.gmra.mxu0 %v1514
    %v1516 = vpop.f32.mrf.mxu0
    %v1517 = vadd.f32 %v1480, %v1516
    %1518 = vdwg.mxu0
    %1519 = vset.pattern.permute.xlu0 2
    %1520 = vperm.xlu0 %1519, %v69
    %v1521 = vpop.permute.xlu0 %1520
    %vm1522 = vcmp.eq.s32.totalorder %v135, %v1521
    %vm1523 = vcmp.eq.s32.totalorder %v136, %v1521
    %v1524 = vsel %vm1522, 1, 0
    %v1525 = vsel %vm1523, 1, 0
    %v1526 = vcvt.s32.f32 %v1524
    %v1527 = vcvt.s32.f32 %v1525
    %v1528 = vand.u32 %v117, 4294901760
    %1529 = vmatpush.msra.mxu0 %v1528
    %v1530 = vand.u32 %v116, 4294901760
    %1531 = vmatpush.msra.mxu0 %v1530
    %v1532 = vand.u32 %v115, 4294901760
    %1533 = vmatpush.msra.mxu0 %v1532
    %v1534 = vand.u32 %v114, 4294901760
    %1535 = vmatpush.msra.mxu0 %v1534
    %v1536 = vand.u32 %v113, 4294901760
    %1537 = vmatpush.msra.mxu0 %v1536
    %v1538 = vand.u32 %v112, 4294901760
    %1539 = vmatpush.msra.mxu0 %v1538
    %v1540 = vand.u32 %v111, 4294901760
    %1541 = vmatpush.msra.mxu0 %v1540
    %v1542 = vand.u32 %v110, 4294901760
    %1543 = vmatpush.msra.mxu0 %v1542
    %v1544 = vand.u32 %v109, 4294901760
    %1545 = vmatpush.msra.mxu0 %v1544
    %v1546 = vand.u32 %v108, 4294901760
    %1547 = vmatpush.msra.mxu0 %v1546
    %v1548 = vand.u32 %v107, 4294901760
    %1549 = vmatpush.msra.mxu0 %v1548
    %v1550 = vand.u32 %v106, 4294901760
    %1551 = vmatpush.msra.mxu0 %v1550
    %v1552 = vand.u32 %v105, 4294901760
    %1553 = vmatpush.msra.mxu0 %v1552
    %v1554 = vand.u32 %v104, 4294901760
    %1555 = vmatpush.msra.mxu0 %v1554
    %v1556 = vand.u32 %v103, 4294901760
    %1557 = vmatpush.msra.mxu0 %v1556
    %v1558 = vand.u32 %v102, 4294901760
    %1559 = vmatpush.msra.mxu0 %v1558
    %v1560 = vand.u32 %v1526, 4294901760
    %v1561 = vsub.f32 %v1526, %v1560
    %v1562 = vand.u32 %v1561, 4294901760
    %v1563 = vsub.f32 %v1561, %v1562
    %v1564 = vand.u32 %v1563, 4294901760
    %1565 = vmatmul.f32.gmra.mxu0 %v1564
    %v1566 = vpop.f32.mrf.mxu0
    %v1567 = vadd.f32 0.0, %v1566
    %1568 = vdwg.mxu0
    %v1569 = vand.u32 %v117, 4294901760
    %v1570 = vsub.f32 %v117, %v1569
    %v1571 = vand.u32 %v1570, 4294901760
    %v1572 = vsub.f32 %v1570, %v1571
    %v1573 = vand.u32 %v1572, 4294901760
    %1574 = vmatpush.msra.mxu0 %v1573
    %v1575 = vand.u32 %v116, 4294901760
    %v1576 = vsub.f32 %v116, %v1575
    %v1577 = vand.u32 %v1576, 4294901760
    %v1578 = vsub.f32 %v1576, %v1577
    %v1579 = vand.u32 %v1578, 4294901760
    %1580 = vmatpush.msra.mxu0 %v1579
    %v1581 = vand.u32 %v115, 4294901760
    %v1582 = vsub.f32 %v115, %v1581
    %v1583 = vand.u32 %v1582, 4294901760
    %v1584 = vsub.f32 %v1582, %v1583
    %v1585 = vand.u32 %v1584, 4294901760
    %1586 = vmatpush.msra.mxu0 %v1585
    %v1587 = vand.u32 %v114, 4294901760
    %v1588 = vsub.f32 %v114, %v1587
    %v1589 = vand.u32 %v1588, 4294901760
    %v1590 = vsub.f32 %v1588, %v1589
    %v1591 = vand.u32 %v1590, 4294901760
    %1592 = vmatpush.msra.mxu0 %v1591
    %v1593 = vand.u32 %v113, 4294901760
    %v1594 = vsub.f32 %v113, %v1593
    %v1595 = vand.u32 %v1594, 4294901760
    %v1596 = vsub.f32 %v1594, %v1595
    %v1597 = vand.u32 %v1596, 4294901760
    %1598 = vmatpush.msra.mxu0 %v1597
    %v1599 = vand.u32 %v112, 4294901760
    %v1600 = vsub.f32 %v112, %v1599
    %v1601 = vand.u32 %v1600, 4294901760
    %v1602 = vsub.f32 %v1600, %v1601
    %v1603 = vand.u32 %v1602, 4294901760
    %1604 = vmatpush.msra.mxu0 %v1603
    %v1605 = vand.u32 %v111, 4294901760
    %v1606 = vsub.f32 %v111, %v1605
    %v1607 = vand.u32 %v1606, 4294901760
    %v1608 = vsub.f32 %v1606, %v1607
    %v1609 = vand.u32 %v1608, 4294901760
    %1610 = vmatpush.msra.mxu0 %v1609
    %v1611 = vand.u32 %v110, 4294901760
    %v1612 = vsub.f32 %v110, %v1611
    %v1613 = vand.u32 %v1612, 4294901760
    %v1614 = vsub.f32 %v1612, %v1613
    %v1615 = vand.u32 %v1614, 4294901760
    %1616 = vmatpush.msra.mxu0 %v1615
    %v1617 = vand.u32 %v109, 4294901760
    %v1618 = vsub.f32 %v109, %v1617
    %v1619 = vand.u32 %v1618, 4294901760
    %v1620 = vsub.f32 %v1618, %v1619
    %v1621 = vand.u32 %v1620, 4294901760
    %1622 = vmatpush.msra.mxu0 %v1621
    %v1623 = vand.u32 %v108, 4294901760
    %v1624 = vsub.f32 %v108, %v1623
    %v1625 = vand.u32 %v1624, 4294901760
    %v1626 = vsub.f32 %v1624, %v1625
    %v1627 = vand.u32 %v1626, 4294901760
    %1628 = vmatpush.msra.mxu0 %v1627
    %v1629 = vand.u32 %v107, 4294901760
    %v1630 = vsub.f32 %v107, %v1629
    %v1631 = vand.u32 %v1630, 4294901760
    %v1632 = vsub.f32 %v1630, %v1631
    %v1633 = vand.u32 %v1632, 4294901760
    %1634 = vmatpush.msra.mxu0 %v1633
    %v1635 = vand.u32 %v106, 4294901760
    %v1636 = vsub.f32 %v106, %v1635
    %v1637 = vand.u32 %v1636, 4294901760
    %v1638 = vsub.f32 %v1636, %v1637
    %v1639 = vand.u32 %v1638, 4294901760
    %1640 = vmatpush.msra.mxu0 %v1639
    %v1641 = vand.u32 %v105, 4294901760
    %v1642 = vsub.f32 %v105, %v1641
    %v1643 = vand.u32 %v1642, 4294901760
    %v1644 = vsub.f32 %v1642, %v1643
    %v1645 = vand.u32 %v1644, 4294901760
    %1646 = vmatpush.msra.mxu0 %v1645
    %v1647 = vand.u32 %v104, 4294901760
    %v1648 = vsub.f32 %v104, %v1647
    %v1649 = vand.u32 %v1648, 4294901760
    %v1650 = vsub.f32 %v1648, %v1649
    %v1651 = vand.u32 %v1650, 4294901760
    %1652 = vmatpush.msra.mxu0 %v1651
    %v1653 = vand.u32 %v103, 4294901760
    %v1654 = vsub.f32 %v103, %v1653
    %v1655 = vand.u32 %v1654, 4294901760
    %v1656 = vsub.f32 %v1654, %v1655
    %v1657 = vand.u32 %v1656, 4294901760
    %1658 = vmatpush.msra.mxu0 %v1657
    %v1659 = vand.u32 %v102, 4294901760
    %v1660 = vsub.f32 %v102, %v1659
    %v1661 = vand.u32 %v1660, 4294901760
    %v1662 = vsub.f32 %v1660, %v1661
    %v1663 = vand.u32 %v1662, 4294901760
    %1664 = vmatpush.msra.mxu0 %v1663
    %v1665 = vand.u32 %v1526, 4294901760
    %1666 = vmatmul.f32.gmra.mxu0 %v1665
    %v1667 = vpop.f32.mrf.mxu0
    %v1668 = vadd.f32 %v1567, %v1667
    %1669 = vdwg.mxu0
    %v1670 = vand.u32 %v117, 4294901760
    %v1671 = vsub.f32 %v117, %v1670
    %1672 = vmatpush.msra.mxu0 %v1671
    %v1673 = vand.u32 %v116, 4294901760
    %v1674 = vsub.f32 %v116, %v1673
    %1675 = vmatpush.msra.mxu0 %v1674
    %v1676 = vand.u32 %v115, 4294901760
    %v1677 = vsub.f32 %v115, %v1676
    %1678 = vmatpush.msra.mxu0 %v1677
    %v1679 = vand.u32 %v114, 4294901760
    %v1680 = vsub.f32 %v114, %v1679
    %1681 = vmatpush.msra.mxu0 %v1680
    %v1682 = vand.u32 %v113, 4294901760
    %v1683 = vsub.f32 %v113, %v1682
    %1684 = vmatpush.msra.mxu0 %v1683
    %v1685 = vand.u32 %v112, 4294901760
    %v1686 = vsub.f32 %v112, %v1685
    %1687 = vmatpush.msra.mxu0 %v1686
    %v1688 = vand.u32 %v111, 4294901760
    %v1689 = vsub.f32 %v111, %v1688
    %1690 = vmatpush.msra.mxu0 %v1689
    %v1691 = vand.u32 %v110, 4294901760
    %v1692 = vsub.f32 %v110, %v1691
    %1693 = vmatpush.msra.mxu0 %v1692
    %v1694 = vand.u32 %v109, 4294901760
    %v1695 = vsub.f32 %v109, %v1694
    %1696 = vmatpush.msra.mxu0 %v1695
    %v1697 = vand.u32 %v108, 4294901760
    %v1698 = vsub.f32 %v108, %v1697
    %1699 = vmatpush.msra.mxu0 %v1698
    %v1700 = vand.u32 %v107, 4294901760
    %v1701 = vsub.f32 %v107, %v1700
    %1702 = vmatpush.msra.mxu0 %v1701
    %v1703 = vand.u32 %v106, 4294901760
    %v1704 = vsub.f32 %v106, %v1703
    %1705 = vmatpush.msra.mxu0 %v1704
    %v1706 = vand.u32 %v105, 4294901760
    %v1707 = vsub.f32 %v105, %v1706
    %1708 = vmatpush.msra.mxu0 %v1707
    %v1709 = vand.u32 %v104, 4294901760
    %v1710 = vsub.f32 %v104, %v1709
    %1711 = vmatpush.msra.mxu0 %v1710
    %v1712 = vand.u32 %v103, 4294901760
    %v1713 = vsub.f32 %v103, %v1712
    %1714 = vmatpush.msra.mxu0 %v1713
    %v1715 = vand.u32 %v102, 4294901760
    %v1716 = vsub.f32 %v102, %v1715
    %1717 = vmatpush.msra.mxu0 %v1716
    %v1718 = vand.u32 %v1526, 4294901760
    %v1719 = vsub.f32 %v1526, %v1718
    %1720 = vmatmul.f32.gmra.mxu0 %v1719
    %v1721 = vpop.f32.mrf.mxu0
    %v1722 = vadd.f32 %v1668, %v1721
    %1723 = vdwg.mxu0
    %v1724 = vand.u32 %v117, 4294901760
    %1725 = vmatpush.msra.mxu0 %v1724
    %v1726 = vand.u32 %v116, 4294901760
    %1727 = vmatpush.msra.mxu0 %v1726
    %v1728 = vand.u32 %v115, 4294901760
    %1729 = vmatpush.msra.mxu0 %v1728
    %v1730 = vand.u32 %v114, 4294901760
    %1731 = vmatpush.msra.mxu0 %v1730
    %v1732 = vand.u32 %v113, 4294901760
    %1733 = vmatpush.msra.mxu0 %v1732
    %v1734 = vand.u32 %v112, 4294901760
    %1735 = vmatpush.msra.mxu0 %v1734
    %v1736 = vand.u32 %v111, 4294901760
    %1737 = vmatpush.msra.mxu0 %v1736
    %v1738 = vand.u32 %v110, 4294901760
    %1739 = vmatpush.msra.mxu0 %v1738
    %v1740 = vand.u32 %v109, 4294901760
    %1741 = vmatpush.msra.mxu0 %v1740
    %v1742 = vand.u32 %v108, 4294901760
    %1743 = vmatpush.msra.mxu0 %v1742
    %v1744 = vand.u32 %v107, 4294901760
    %1745 = vmatpush.msra.mxu0 %v1744
    %v1746 = vand.u32 %v106, 4294901760
    %1747 = vmatpush.msra.mxu0 %v1746
    %v1748 = vand.u32 %v105, 4294901760
    %1749 = vmatpush.msra.mxu0 %v1748
    %v1750 = vand.u32 %v104, 4294901760
    %1751 = vmatpush.msra.mxu0 %v1750
    %v1752 = vand.u32 %v103, 4294901760
    %1753 = vmatpush.msra.mxu0 %v1752
    %v1754 = vand.u32 %v102, 4294901760
    %1755 = vmatpush.msra.mxu0 %v1754
    %v1756 = vand.u32 %v1526, 4294901760
    %v1757 = vsub.f32 %v1526, %v1756
    %v1758 = vand.u32 %v1757, 4294901760
    %1759 = vmatmul.f32.gmra.mxu0 %v1758
    %v1760 = vpop.f32.mrf.mxu0
    %v1761 = vadd.f32 %v1722, %v1760
    %1762 = vdwg.mxu0
    %v1763 = vand.u32 %v117, 4294901760
    %v1764 = vsub.f32 %v117, %v1763
    %v1765 = vand.u32 %v1764, 4294901760
    %1766 = vmatpush.msra.mxu0 %v1765
    %v1767 = vand.u32 %v116, 4294901760
    %v1768 = vsub.f32 %v116, %v1767
    %v1769 = vand.u32 %v1768, 4294901760
    %1770 = vmatpush.msra.mxu0 %v1769
    %v1771 = vand.u32 %v115, 4294901760
    %v1772 = vsub.f32 %v115, %v1771
    %v1773 = vand.u32 %v1772, 4294901760
    %1774 = vmatpush.msra.mxu0 %v1773
    %v1775 = vand.u32 %v114, 4294901760
    %v1776 = vsub.f32 %v114, %v1775
    %v1777 = vand.u32 %v1776, 4294901760
    %1778 = vmatpush.msra.mxu0 %v1777
    %v1779 = vand.u32 %v113, 4294901760
    %v1780 = vsub.f32 %v113, %v1779
    %v1781 = vand.u32 %v1780, 4294901760
    %1782 = vmatpush.msra.mxu0 %v1781
    %v1783 = vand.u32 %v112, 4294901760
    %v1784 = vsub.f32 %v112, %v1783
    %v1785 = vand.u32 %v1784, 4294901760
    %1786 = vmatpush.msra.mxu0 %v1785
    %v1787 = vand.u32 %v111, 4294901760
    %v1788 = vsub.f32 %v111, %v1787
    %v1789 = vand.u32 %v1788, 4294901760
    %1790 = vmatpush.msra.mxu0 %v1789
    %v1791 = vand.u32 %v110, 4294901760
    %v1792 = vsub.f32 %v110, %v1791
    %v1793 = vand.u32 %v1792, 4294901760
    %1794 = vmatpush.msra.mxu0 %v1793
    %v1795 = vand.u32 %v109, 4294901760
    %v1796 = vsub.f32 %v109, %v1795
    %v1797 = vand.u32 %v1796, 4294901760
    %1798 = vmatpush.msra.mxu0 %v1797
    %v1799 = vand.u32 %v108, 4294901760
    %v1800 = vsub.f32 %v108, %v1799
    %v1801 = vand.u32 %v1800, 4294901760
    %1802 = vmatpush.msra.mxu0 %v1801
    %v1803 = vand.u32 %v107, 4294901760
    %v1804 = vsub.f32 %v107, %v1803
    %v1805 = vand.u32 %v1804, 4294901760
    %1806 = vmatpush.msra.mxu0 %v1805
    %v1807 = vand.u32 %v106, 4294901760
    %v1808 = vsub.f32 %v106, %v1807
    %v1809 = vand.u32 %v1808, 4294901760
    %1810 = vmatpush.msra.mxu0 %v1809
    %v1811 = vand.u32 %v105, 4294901760
    %v1812 = vsub.f32 %v105, %v1811
    %v1813 = vand.u32 %v1812, 4294901760
    %1814 = vmatpush.msra.mxu0 %v1813
    %v1815 = vand.u32 %v104, 4294901760
    %v1816 = vsub.f32 %v104, %v1815
    %v1817 = vand.u32 %v1816, 4294901760
    %1818 = vmatpush.msra.mxu0 %v1817
    %v1819 = vand.u32 %v103, 4294901760
    %v1820 = vsub.f32 %v103, %v1819
    %v1821 = vand.u32 %v1820, 4294901760
    %1822 = vmatpush.msra.mxu0 %v1821
    %v1823 = vand.u32 %v102, 4294901760
    %v1824 = vsub.f32 %v102, %v1823
    %v1825 = vand.u32 %v1824, 4294901760
    %1826 = vmatpush.msra.mxu0 %v1825
    %v1827 = vand.u32 %v1526, 4294901760
    %1828 = vmatmul.f32.gmra.mxu0 %v1827
    %v1829 = vpop.f32.mrf.mxu0
    %v1830 = vadd.f32 %v1761, %v1829
    %1831 = vdwg.mxu0
    %v1832 = vand.u32 %v117, 4294901760
    %1833 = vmatpush.msra.mxu0 %v1832
    %v1834 = vand.u32 %v116, 4294901760
    %1835 = vmatpush.msra.mxu0 %v1834
    %v1836 = vand.u32 %v115, 4294901760
    %1837 = vmatpush.msra.mxu0 %v1836
    %v1838 = vand.u32 %v114, 4294901760
    %1839 = vmatpush.msra.mxu0 %v1838
    %v1840 = vand.u32 %v113, 4294901760
    %1841 = vmatpush.msra.mxu0 %v1840
    %v1842 = vand.u32 %v112, 4294901760
    %1843 = vmatpush.msra.mxu0 %v1842
    %v1844 = vand.u32 %v111, 4294901760
    %1845 = vmatpush.msra.mxu0 %v1844
    %v1846 = vand.u32 %v110, 4294901760
    %1847 = vmatpush.msra.mxu0 %v1846
    %v1848 = vand.u32 %v109, 4294901760
    %1849 = vmatpush.msra.mxu0 %v1848
    %v1850 = vand.u32 %v108, 4294901760
    %1851 = vmatpush.msra.mxu0 %v1850
    %v1852 = vand.u32 %v107, 4294901760
    %1853 = vmatpush.msra.mxu0 %v1852
    %v1854 = vand.u32 %v106, 4294901760
    %1855 = vmatpush.msra.mxu0 %v1854
    %v1856 = vand.u32 %v105, 4294901760
    %1857 = vmatpush.msra.mxu0 %v1856
    %v1858 = vand.u32 %v104, 4294901760
    %1859 = vmatpush.msra.mxu0 %v1858
    %v1860 = vand.u32 %v103, 4294901760
    %1861 = vmatpush.msra.mxu0 %v1860
    %v1862 = vand.u32 %v102, 4294901760
    %1863 = vmatpush.msra.mxu0 %v1862
    %v1864 = vand.u32 %v1526, 4294901760
    %1865 = vmatmul.f32.gmra.mxu0 %v1864
    %v1866 = vpop.f32.mrf.mxu0
    %v1867 = vadd.f32 %v1830, %v1866
    %1868 = vdwg.mxu0
    %v1869 = vand.u32 %v133, 4294901760
    %1870 = vmatpush.msra.mxu0 %v1869
    %v1871 = vand.u32 %v132, 4294901760
    %1872 = vmatpush.msra.mxu0 %v1871
    %v1873 = vand.u32 %v131, 4294901760
    %1874 = vmatpush.msra.mxu0 %v1873
    %v1875 = vand.u32 %v130, 4294901760
    %1876 = vmatpush.msra.mxu0 %v1875
    %v1877 = vand.u32 %v129, 4294901760
    %1878 = vmatpush.msra.mxu0 %v1877
    %v1879 = vand.u32 %v128, 4294901760
    %1880 = vmatpush.msra.mxu0 %v1879
    %v1881 = vand.u32 %v127, 4294901760
    %1882 = vmatpush.msra.mxu0 %v1881
    %v1883 = vand.u32 %v126, 4294901760
    %1884 = vmatpush.msra.mxu0 %v1883
    %v1885 = vand.u32 %v125, 4294901760
    %1886 = vmatpush.msra.mxu0 %v1885
    %v1887 = vand.u32 %v124, 4294901760
    %1888 = vmatpush.msra.mxu0 %v1887
    %v1889 = vand.u32 %v123, 4294901760
    %1890 = vmatpush.msra.mxu0 %v1889
    %v1891 = vand.u32 %v122, 4294901760
    %1892 = vmatpush.msra.mxu0 %v1891
    %v1893 = vand.u32 %v121, 4294901760
    %1894 = vmatpush.msra.mxu0 %v1893
    %v1895 = vand.u32 %v120, 4294901760
    %1896 = vmatpush.msra.mxu0 %v1895
    %v1897 = vand.u32 %v119, 4294901760
    %1898 = vmatpush.msra.mxu0 %v1897
    %v1899 = vand.u32 %v118, 4294901760
    %1900 = vmatpush.msra.mxu0 %v1899
    %v1901 = vand.u32 %v1527, 4294901760
    %v1902 = vsub.f32 %v1527, %v1901
    %v1903 = vand.u32 %v1902, 4294901760
    %v1904 = vsub.f32 %v1902, %v1903
    %v1905 = vand.u32 %v1904, 4294901760
    %1906 = vmatmul.f32.gmra.mxu0 %v1905
    %v1907 = vpop.f32.mrf.mxu0
    %v1908 = vadd.f32 %v1867, %v1907
    %1909 = vdwg.mxu0
    %v1910 = vand.u32 %v133, 4294901760
    %v1911 = vsub.f32 %v133, %v1910
    %v1912 = vand.u32 %v1911, 4294901760
    %v1913 = vsub.f32 %v1911, %v1912
    %v1914 = vand.u32 %v1913, 4294901760
    %1915 = vmatpush.msra.mxu0 %v1914
    %v1916 = vand.u32 %v132, 4294901760
    %v1917 = vsub.f32 %v132, %v1916
    %v1918 = vand.u32 %v1917, 4294901760
    %v1919 = vsub.f32 %v1917, %v1918
    %v1920 = vand.u32 %v1919, 4294901760
    %1921 = vmatpush.msra.mxu0 %v1920
    %v1922 = vand.u32 %v131, 4294901760
    %v1923 = vsub.f32 %v131, %v1922
    %v1924 = vand.u32 %v1923, 4294901760
    %v1925 = vsub.f32 %v1923, %v1924
    %v1926 = vand.u32 %v1925, 4294901760
    %1927 = vmatpush.msra.mxu0 %v1926
    %v1928 = vand.u32 %v130, 4294901760
    %v1929 = vsub.f32 %v130, %v1928
    %v1930 = vand.u32 %v1929, 4294901760
    %v1931 = vsub.f32 %v1929, %v1930
    %v1932 = vand.u32 %v1931, 4294901760
    %1933 = vmatpush.msra.mxu0 %v1932
    %v1934 = vand.u32 %v129, 4294901760
    %v1935 = vsub.f32 %v129, %v1934
    %v1936 = vand.u32 %v1935, 4294901760
    %v1937 = vsub.f32 %v1935, %v1936
    %v1938 = vand.u32 %v1937, 4294901760
    %1939 = vmatpush.msra.mxu0 %v1938
    %v1940 = vand.u32 %v128, 4294901760
    %v1941 = vsub.f32 %v128, %v1940
    %v1942 = vand.u32 %v1941, 4294901760
    %v1943 = vsub.f32 %v1941, %v1942
    %v1944 = vand.u32 %v1943, 4294901760
    %1945 = vmatpush.msra.mxu0 %v1944
    %v1946 = vand.u32 %v127, 4294901760
    %v1947 = vsub.f32 %v127, %v1946
    %v1948 = vand.u32 %v1947, 4294901760
    %v1949 = vsub.f32 %v1947, %v1948
    %v1950 = vand.u32 %v1949, 4294901760
    %1951 = vmatpush.msra.mxu0 %v1950
    %v1952 = vand.u32 %v126, 4294901760
    %v1953 = vsub.f32 %v126, %v1952
    %v1954 = vand.u32 %v1953, 4294901760
    %v1955 = vsub.f32 %v1953, %v1954
    %v1956 = vand.u32 %v1955, 4294901760
    %1957 = vmatpush.msra.mxu0 %v1956
    %v1958 = vand.u32 %v125, 4294901760
    %v1959 = vsub.f32 %v125, %v1958
    %v1960 = vand.u32 %v1959, 4294901760
    %v1961 = vsub.f32 %v1959, %v1960
    %v1962 = vand.u32 %v1961, 4294901760
    %1963 = vmatpush.msra.mxu0 %v1962
    %v1964 = vand.u32 %v124, 4294901760
    %v1965 = vsub.f32 %v124, %v1964
    %v1966 = vand.u32 %v1965, 4294901760
    %v1967 = vsub.f32 %v1965, %v1966
    %v1968 = vand.u32 %v1967, 4294901760
    %1969 = vmatpush.msra.mxu0 %v1968
    %v1970 = vand.u32 %v123, 4294901760
    %v1971 = vsub.f32 %v123, %v1970
    %v1972 = vand.u32 %v1971, 4294901760
    %v1973 = vsub.f32 %v1971, %v1972
    %v1974 = vand.u32 %v1973, 4294901760
    %1975 = vmatpush.msra.mxu0 %v1974
    %v1976 = vand.u32 %v122, 4294901760
    %v1977 = vsub.f32 %v122, %v1976
    %v1978 = vand.u32 %v1977, 4294901760
    %v1979 = vsub.f32 %v1977, %v1978
    %v1980 = vand.u32 %v1979, 4294901760
    %1981 = vmatpush.msra.mxu0 %v1980
    %v1982 = vand.u32 %v121, 4294901760
    %v1983 = vsub.f32 %v121, %v1982
    %v1984 = vand.u32 %v1983, 4294901760
    %v1985 = vsub.f32 %v1983, %v1984
    %v1986 = vand.u32 %v1985, 4294901760
    %1987 = vmatpush.msra.mxu0 %v1986
    %v1988 = vand.u32 %v120, 4294901760
    %v1989 = vsub.f32 %v120, %v1988
    %v1990 = vand.u32 %v1989, 4294901760
    %v1991 = vsub.f32 %v1989, %v1990
    %v1992 = vand.u32 %v1991, 4294901760
    %1993 = vmatpush.msra.mxu0 %v1992
    %v1994 = vand.u32 %v119, 4294901760
    %v1995 = vsub.f32 %v119, %v1994
    %v1996 = vand.u32 %v1995, 4294901760
    %v1997 = vsub.f32 %v1995, %v1996
    %v1998 = vand.u32 %v1997, 4294901760
    %1999 = vmatpush.msra.mxu0 %v1998
    %v2000 = vand.u32 %v118, 4294901760
    %v2001 = vsub.f32 %v118, %v2000
    %v2002 = vand.u32 %v2001, 4294901760
    %v2003 = vsub.f32 %v2001, %v2002
    %v2004 = vand.u32 %v2003, 4294901760
    %2005 = vmatpush.msra.mxu0 %v2004
    %v2006 = vand.u32 %v1527, 4294901760
    %2007 = vmatmul.f32.gmra.mxu0 %v2006
    %v2008 = vpop.f32.mrf.mxu0
    %v2009 = vadd.f32 %v1908, %v2008
    %2010 = vdwg.mxu0
    %v2011 = vand.u32 %v133, 4294901760
    %v2012 = vsub.f32 %v133, %v2011
    %2013 = vmatpush.msra.mxu0 %v2012
    %v2014 = vand.u32 %v132, 4294901760
    %v2015 = vsub.f32 %v132, %v2014
    %2016 = vmatpush.msra.mxu0 %v2015
    %v2017 = vand.u32 %v131, 4294901760
    %v2018 = vsub.f32 %v131, %v2017
    %2019 = vmatpush.msra.mxu0 %v2018
    %v2020 = vand.u32 %v130, 4294901760
    %v2021 = vsub.f32 %v130, %v2020
    %2022 = vmatpush.msra.mxu0 %v2021
    %v2023 = vand.u32 %v129, 4294901760
    %v2024 = vsub.f32 %v129, %v2023
    %2025 = vmatpush.msra.mxu0 %v2024
    %v2026 = vand.u32 %v128, 4294901760
    %v2027 = vsub.f32 %v128, %v2026
    %2028 = vmatpush.msra.mxu0 %v2027
    %v2029 = vand.u32 %v127, 4294901760
    %v2030 = vsub.f32 %v127, %v2029
    %2031 = vmatpush.msra.mxu0 %v2030
    %v2032 = vand.u32 %v126, 4294901760
    %v2033 = vsub.f32 %v126, %v2032
    %2034 = vmatpush.msra.mxu0 %v2033
    %v2035 = vand.u32 %v125, 4294901760
    %v2036 = vsub.f32 %v125, %v2035
    %2037 = vmatpush.msra.mxu0 %v2036
    %v2038 = vand.u32 %v124, 4294901760
    %v2039 = vsub.f32 %v124, %v2038
    %2040 = vmatpush.msra.mxu0 %v2039
    %v2041 = vand.u32 %v123, 4294901760
    %v2042 = vsub.f32 %v123, %v2041
    %2043 = vmatpush.msra.mxu0 %v2042
    %v2044 = vand.u32 %v122, 4294901760
    %v2045 = vsub.f32 %v122, %v2044
    %2046 = vmatpush.msra.mxu0 %v2045
    %v2047 = vand.u32 %v121, 4294901760
    %v2048 = vsub.f32 %v121, %v2047
    %2049 = vmatpush.msra.mxu0 %v2048
    %v2050 = vand.u32 %v120, 4294901760
    %v2051 = vsub.f32 %v120, %v2050
    %2052 = vmatpush.msra.mxu0 %v2051
    %v2053 = vand.u32 %v119, 4294901760
    %v2054 = vsub.f32 %v119, %v2053
    %2055 = vmatpush.msra.mxu0 %v2054
    %v2056 = vand.u32 %v118, 4294901760
    %v2057 = vsub.f32 %v118, %v2056
    %2058 = vmatpush.msra.mxu0 %v2057
    %v2059 = vand.u32 %v1527, 4294901760
    %v2060 = vsub.f32 %v1527, %v2059
    %2061 = vmatmul.f32.gmra.mxu0 %v2060
    %v2062 = vpop.f32.mrf.mxu0
    %v2063 = vadd.f32 %v2009, %v2062
    %2064 = vdwg.mxu0
    %v2065 = vand.u32 %v133, 4294901760
    %2066 = vmatpush.msra.mxu0 %v2065
    %v2067 = vand.u32 %v132, 4294901760
    %2068 = vmatpush.msra.mxu0 %v2067
    %v2069 = vand.u32 %v131, 4294901760
    %2070 = vmatpush.msra.mxu0 %v2069
    %v2071 = vand.u32 %v130, 4294901760
    %2072 = vmatpush.msra.mxu0 %v2071
    %v2073 = vand.u32 %v129, 4294901760
    %2074 = vmatpush.msra.mxu0 %v2073
    %v2075 = vand.u32 %v128, 4294901760
    %2076 = vmatpush.msra.mxu0 %v2075
    %v2077 = vand.u32 %v127, 4294901760
    %2078 = vmatpush.msra.mxu0 %v2077
    %v2079 = vand.u32 %v126, 4294901760
    %2080 = vmatpush.msra.mxu0 %v2079
    %v2081 = vand.u32 %v125, 4294901760
    %2082 = vmatpush.msra.mxu0 %v2081
    %v2083 = vand.u32 %v124, 4294901760
    %2084 = vmatpush.msra.mxu0 %v2083
    %v2085 = vand.u32 %v123, 4294901760
    %2086 = vmatpush.msra.mxu0 %v2085
    %v2087 = vand.u32 %v122, 4294901760
    %2088 = vmatpush.msra.mxu0 %v2087
    %v2089 = vand.u32 %v121, 4294901760
    %2090 = vmatpush.msra.mxu0 %v2089
    %v2091 = vand.u32 %v120, 4294901760
    %2092 = vmatpush.msra.mxu0 %v2091
    %v2093 = vand.u32 %v119, 4294901760
    %2094 = vmatpush.msra.mxu0 %v2093
    %v2095 = vand.u32 %v118, 4294901760
    %2096 = vmatpush.msra.mxu0 %v2095
    %v2097 = vand.u32 %v1527, 4294901760
    %v2098 = vsub.f32 %v1527, %v2097
    %v2099 = vand.u32 %v2098, 4294901760
    %2100 = vmatmul.f32.gmra.mxu0 %v2099
    %v2101 = vpop.f32.mrf.mxu0
    %v2102 = vadd.f32 %v2063, %v2101
    %2103 = vdwg.mxu0
    %v2104 = vand.u32 %v133, 4294901760
    %v2105 = vsub.f32 %v133, %v2104
    %v2106 = vand.u32 %v2105, 4294901760
    %2107 = vmatpush.msra.mxu0 %v2106
    %v2108 = vand.u32 %v132, 4294901760
    %v2109 = vsub.f32 %v132, %v2108
    %v2110 = vand.u32 %v2109, 4294901760
    %2111 = vmatpush.msra.mxu0 %v2110
    %v2112 = vand.u32 %v131, 4294901760
    %v2113 = vsub.f32 %v131, %v2112
    %v2114 = vand.u32 %v2113, 4294901760
    %2115 = vmatpush.msra.mxu0 %v2114
    %v2116 = vand.u32 %v130, 4294901760
    %v2117 = vsub.f32 %v130, %v2116
    %v2118 = vand.u32 %v2117, 4294901760
    %2119 = vmatpush.msra.mxu0 %v2118
    %v2120 = vand.u32 %v129, 4294901760
    %v2121 = vsub.f32 %v129, %v2120
    %v2122 = vand.u32 %v2121, 4294901760
    %2123 = vmatpush.msra.mxu0 %v2122
    %v2124 = vand.u32 %v128, 4294901760
    %v2125 = vsub.f32 %v128, %v2124
    %v2126 = vand.u32 %v2125, 4294901760
    %2127 = vmatpush.msra.mxu0 %v2126
    %v2128 = vand.u32 %v127, 4294901760
    %v2129 = vsub.f32 %v127, %v2128
    %v2130 = vand.u32 %v2129, 4294901760
    %2131 = vmatpush.msra.mxu0 %v2130
    %v2132 = vand.u32 %v126, 4294901760
    %v2133 = vsub.f32 %v126, %v2132
    %v2134 = vand.u32 %v2133, 4294901760
    %2135 = vmatpush.msra.mxu0 %v2134
    %v2136 = vand.u32 %v125, 4294901760
    %v2137 = vsub.f32 %v125, %v2136
    %v2138 = vand.u32 %v2137, 4294901760
    %2139 = vmatpush.msra.mxu0 %v2138
    %v2140 = vand.u32 %v124, 4294901760
    %v2141 = vsub.f32 %v124, %v2140
    %v2142 = vand.u32 %v2141, 4294901760
    %2143 = vmatpush.msra.mxu0 %v2142
    %v2144 = vand.u32 %v123, 4294901760
    %v2145 = vsub.f32 %v123, %v2144
    %v2146 = vand.u32 %v2145, 4294901760
    %2147 = vmatpush.msra.mxu0 %v2146
    %v2148 = vand.u32 %v122, 4294901760
    %v2149 = vsub.f32 %v122, %v2148
    %v2150 = vand.u32 %v2149, 4294901760
    %2151 = vmatpush.msra.mxu0 %v2150
    %v2152 = vand.u32 %v121, 4294901760
    %v2153 = vsub.f32 %v121, %v2152
    %v2154 = vand.u32 %v2153, 4294901760
    %2155 = vmatpush.msra.mxu0 %v2154
    %v2156 = vand.u32 %v120, 4294901760
    %v2157 = vsub.f32 %v120, %v2156
    %v2158 = vand.u32 %v2157, 4294901760
    %2159 = vmatpush.msra.mxu0 %v2158
    %v2160 = vand.u32 %v119, 4294901760
    %v2161 = vsub.f32 %v119, %v2160
    %v2162 = vand.u32 %v2161, 4294901760
    %2163 = vmatpush.msra.mxu0 %v2162
    %v2164 = vand.u32 %v118, 4294901760
    %v2165 = vsub.f32 %v118, %v2164
    %v2166 = vand.u32 %v2165, 4294901760
    %2167 = vmatpush.msra.mxu0 %v2166
    %v2168 = vand.u32 %v1527, 4294901760
    %2169 = vmatmul.f32.gmra.mxu0 %v2168
    %v2170 = vpop.f32.mrf.mxu0
    %v2171 = vadd.f32 %v2102, %v2170
    %2172 = vdwg.mxu0
    %v2173 = vand.u32 %v133, 4294901760
    %2174 = vmatpush.msra.mxu0 %v2173
    %v2175 = vand.u32 %v132, 4294901760
    %2176 = vmatpush.msra.mxu0 %v2175
    %v2177 = vand.u32 %v131, 4294901760
    %2178 = vmatpush.msra.mxu0 %v2177
    %v2179 = vand.u32 %v130, 4294901760
    %2180 = vmatpush.msra.mxu0 %v2179
    %v2181 = vand.u32 %v129, 4294901760
    %2182 = vmatpush.msra.mxu0 %v2181
    %v2183 = vand.u32 %v128, 4294901760
    %2184 = vmatpush.msra.mxu0 %v2183
    %v2185 = vand.u32 %v127, 4294901760
    %2186 = vmatpush.msra.mxu0 %v2185
    %v2187 = vand.u32 %v126, 4294901760
    %2188 = vmatpush.msra.mxu0 %v2187
    %v2189 = vand.u32 %v125, 4294901760
    %2190 = vmatpush.msra.mxu0 %v2189
    %v2191 = vand.u32 %v124, 4294901760
    %2192 = vmatpush.msra.mxu0 %v2191
    %v2193 = vand.u32 %v123, 4294901760
    %2194 = vmatpush.msra.mxu0 %v2193
    %v2195 = vand.u32 %v122, 4294901760
    %2196 = vmatpush.msra.mxu0 %v2195
    %v2197 = vand.u32 %v121, 4294901760
    %2198 = vmatpush.msra.mxu0 %v2197
    %v2199 = vand.u32 %v120, 4294901760
    %2200 = vmatpush.msra.mxu0 %v2199
    %v2201 = vand.u32 %v119, 4294901760
    %2202 = vmatpush.msra.mxu0 %v2201
    %v2203 = vand.u32 %v118, 4294901760
    %2204 = vmatpush.msra.mxu0 %v2203
    %v2205 = vand.u32 %v1527, 4294901760
    %2206 = vmatmul.f32.gmra.mxu0 %v2205
    %v2207 = vpop.f32.mrf.mxu0
    %v2208 = vadd.f32 %v2171, %v2207
    %2209 = vdwg.mxu0
    %2210 = vset.pattern.permute.xlu0 3
    %2211 = vperm.xlu0 %2210, %v69
    %v2212 = vpop.permute.xlu0 %2211
    %vm2213 = vcmp.eq.s32.totalorder %v135, %v2212
    %vm2214 = vcmp.eq.s32.totalorder %v136, %v2212
    %v2215 = vsel %vm2213, 1, 0
    %v2216 = vsel %vm2214, 1, 0
    %v2217 = vcvt.s32.f32 %v2215
    %v2218 = vcvt.s32.f32 %v2216
    %v2219 = vand.u32 %v85, 4294901760
    %2220 = vmatpush.msra.mxu0 %v2219
    %v2221 = vand.u32 %v84, 4294901760
    %2222 = vmatpush.msra.mxu0 %v2221
    %v2223 = vand.u32 %v83, 4294901760
    %2224 = vmatpush.msra.mxu0 %v2223
    %v2225 = vand.u32 %v82, 4294901760
    %2226 = vmatpush.msra.mxu0 %v2225
    %v2227 = vand.u32 %v81, 4294901760
    %2228 = vmatpush.msra.mxu0 %v2227
    %v2229 = vand.u32 %v80, 4294901760
    %2230 = vmatpush.msra.mxu0 %v2229
    %v2231 = vand.u32 %v79, 4294901760
    %2232 = vmatpush.msra.mxu0 %v2231
    %v2233 = vand.u32 %v78, 4294901760
    %2234 = vmatpush.msra.mxu0 %v2233
    %v2235 = vand.u32 %v77, 4294901760
    %2236 = vmatpush.msra.mxu0 %v2235
    %v2237 = vand.u32 %v76, 4294901760
    %2238 = vmatpush.msra.mxu0 %v2237
    %v2239 = vand.u32 %v75, 4294901760
    %2240 = vmatpush.msra.mxu0 %v2239
    %v2241 = vand.u32 %v74, 4294901760
    %2242 = vmatpush.msra.mxu0 %v2241
    %v2243 = vand.u32 %v73, 4294901760
    %2244 = vmatpush.msra.mxu0 %v2243
    %v2245 = vand.u32 %v72, 4294901760
    %2246 = vmatpush.msra.mxu0 %v2245
    %v2247 = vand.u32 %v71, 4294901760
    %2248 = vmatpush.msra.mxu0 %v2247
    %v2249 = vand.u32 %v70, 4294901760
    %2250 = vmatpush.msra.mxu0 %v2249
    %v2251 = vand.u32 %v2217, 4294901760
    %v2252 = vsub.f32 %v2217, %v2251
    %v2253 = vand.u32 %v2252, 4294901760
    %v2254 = vsub.f32 %v2252, %v2253
    %v2255 = vand.u32 %v2254, 4294901760
    %2256 = vmatmul.f32.gmra.mxu0 %v2255
    %v2257 = vpop.f32.mrf.mxu0
    %v2258 = vadd.f32 0.0, %v2257
    %2259 = vdwg.mxu0
    %v2260 = vand.u32 %v85, 4294901760
    %v2261 = vsub.f32 %v85, %v2260
    %v2262 = vand.u32 %v2261, 4294901760
    %v2263 = vsub.f32 %v2261, %v2262
    %v2264 = vand.u32 %v2263, 4294901760
    %2265 = vmatpush.msra.mxu0 %v2264
    %v2266 = vand.u32 %v84, 4294901760
    %v2267 = vsub.f32 %v84, %v2266
    %v2268 = vand.u32 %v2267, 4294901760
    %v2269 = vsub.f32 %v2267, %v2268
    %v2270 = vand.u32 %v2269, 4294901760
    %2271 = vmatpush.msra.mxu0 %v2270
    %v2272 = vand.u32 %v83, 4294901760
    %v2273 = vsub.f32 %v83, %v2272
    %v2274 = vand.u32 %v2273, 4294901760
    %v2275 = vsub.f32 %v2273, %v2274
    %v2276 = vand.u32 %v2275, 4294901760
    %2277 = vmatpush.msra.mxu0 %v2276
    %v2278 = vand.u32 %v82, 4294901760
    %v2279 = vsub.f32 %v82, %v2278
    %v2280 = vand.u32 %v2279, 4294901760
    %v2281 = vsub.f32 %v2279, %v2280
    %v2282 = vand.u32 %v2281, 4294901760
    %2283 = vmatpush.msra.mxu0 %v2282
    %v2284 = vand.u32 %v81, 4294901760
    %v2285 = vsub.f32 %v81, %v2284
    %v2286 = vand.u32 %v2285, 4294901760
    %v2287 = vsub.f32 %v2285, %v2286
    %v2288 = vand.u32 %v2287, 4294901760
    %2289 = vmatpush.msra.mxu0 %v2288
    %v2290 = vand.u32 %v80, 4294901760
    %v2291 = vsub.f32 %v80, %v2290
    %v2292 = vand.u32 %v2291, 4294901760
    %v2293 = vsub.f32 %v2291, %v2292
    %v2294 = vand.u32 %v2293, 4294901760
    %2295 = vmatpush.msra.mxu0 %v2294
    %v2296 = vand.u32 %v79, 4294901760
    %v2297 = vsub.f32 %v79, %v2296
    %v2298 = vand.u32 %v2297, 4294901760
    %v2299 = vsub.f32 %v2297, %v2298
    %v2300 = vand.u32 %v2299, 4294901760
    %2301 = vmatpush.msra.mxu0 %v2300
    %v2302 = vand.u32 %v78, 4294901760
    %v2303 = vsub.f32 %v78, %v2302
    %v2304 = vand.u32 %v2303, 4294901760
    %v2305 = vsub.f32 %v2303, %v2304
    %v2306 = vand.u32 %v2305, 4294901760
    %2307 = vmatpush.msra.mxu0 %v2306
    %v2308 = vand.u32 %v77, 4294901760
    %v2309 = vsub.f32 %v77, %v2308
    %v2310 = vand.u32 %v2309, 4294901760
    %v2311 = vsub.f32 %v2309, %v2310
    %v2312 = vand.u32 %v2311, 4294901760
    %2313 = vmatpush.msra.mxu0 %v2312
    %v2314 = vand.u32 %v76, 4294901760
    %v2315 = vsub.f32 %v76, %v2314
    %v2316 = vand.u32 %v2315, 4294901760
    %v2317 = vsub.f32 %v2315, %v2316
    %v2318 = vand.u32 %v2317, 4294901760
    %2319 = vmatpush.msra.mxu0 %v2318
    %v2320 = vand.u32 %v75, 4294901760
    %v2321 = vsub.f32 %v75, %v2320
    %v2322 = vand.u32 %v2321, 4294901760
    %v2323 = vsub.f32 %v2321, %v2322
    %v2324 = vand.u32 %v2323, 4294901760
    %2325 = vmatpush.msra.mxu0 %v2324
    %v2326 = vand.u32 %v74, 4294901760
    %v2327 = vsub.f32 %v74, %v2326
    %v2328 = vand.u32 %v2327, 4294901760
    %v2329 = vsub.f32 %v2327, %v2328
    %v2330 = vand.u32 %v2329, 4294901760
    %2331 = vmatpush.msra.mxu0 %v2330
    %v2332 = vand.u32 %v73, 4294901760
    %v2333 = vsub.f32 %v73, %v2332
    %v2334 = vand.u32 %v2333, 4294901760
    %v2335 = vsub.f32 %v2333, %v2334
    %v2336 = vand.u32 %v2335, 4294901760
    %2337 = vmatpush.msra.mxu0 %v2336
    %v2338 = vand.u32 %v72, 4294901760
    %v2339 = vsub.f32 %v72, %v2338
    %v2340 = vand.u32 %v2339, 4294901760
    %v2341 = vsub.f32 %v2339, %v2340
    %v2342 = vand.u32 %v2341, 4294901760
    %2343 = vmatpush.msra.mxu0 %v2342
    %v2344 = vand.u32 %v71, 4294901760
    %v2345 = vsub.f32 %v71, %v2344
    %v2346 = vand.u32 %v2345, 4294901760
    %v2347 = vsub.f32 %v2345, %v2346
    %v2348 = vand.u32 %v2347, 4294901760
    %2349 = vmatpush.msra.mxu0 %v2348
    %v2350 = vand.u32 %v70, 4294901760
    %v2351 = vsub.f32 %v70, %v2350
    %v2352 = vand.u32 %v2351, 4294901760
    %v2353 = vsub.f32 %v2351, %v2352
    %v2354 = vand.u32 %v2353, 4294901760
    %2355 = vmatpush.msra.mxu0 %v2354
    %v2356 = vand.u32 %v2217, 4294901760
    %2357 = vmatmul.f32.gmra.mxu0 %v2356
    %v2358 = vpop.f32.mrf.mxu0
    %v2359 = vadd.f32 %v2258, %v2358
    %2360 = vdwg.mxu0
    %v2361 = vand.u32 %v85, 4294901760
    %v2362 = vsub.f32 %v85, %v2361
    %2363 = vmatpush.msra.mxu0 %v2362
    %v2364 = vand.u32 %v84, 4294901760
    %v2365 = vsub.f32 %v84, %v2364
    %2366 = vmatpush.msra.mxu0 %v2365
    %v2367 = vand.u32 %v83, 4294901760
    %v2368 = vsub.f32 %v83, %v2367
    %2369 = vmatpush.msra.mxu0 %v2368
    %v2370 = vand.u32 %v82, 4294901760
    %v2371 = vsub.f32 %v82, %v2370
    %2372 = vmatpush.msra.mxu0 %v2371
    %v2373 = vand.u32 %v81, 4294901760
    %v2374 = vsub.f32 %v81, %v2373
    %2375 = vmatpush.msra.mxu0 %v2374
    %v2376 = vand.u32 %v80, 4294901760
    %v2377 = vsub.f32 %v80, %v2376
    %2378 = vmatpush.msra.mxu0 %v2377
    %v2379 = vand.u32 %v79, 4294901760
    %v2380 = vsub.f32 %v79, %v2379
    %2381 = vmatpush.msra.mxu0 %v2380
    %v2382 = vand.u32 %v78, 4294901760
    %v2383 = vsub.f32 %v78, %v2382
    %2384 = vmatpush.msra.mxu0 %v2383
    %v2385 = vand.u32 %v77, 4294901760
    %v2386 = vsub.f32 %v77, %v2385
    %2387 = vmatpush.msra.mxu0 %v2386
    %v2388 = vand.u32 %v76, 4294901760
    %v2389 = vsub.f32 %v76, %v2388
    %2390 = vmatpush.msra.mxu0 %v2389
    %v2391 = vand.u32 %v75, 4294901760
    %v2392 = vsub.f32 %v75, %v2391
    %2393 = vmatpush.msra.mxu0 %v2392
    %v2394 = vand.u32 %v74, 4294901760
    %v2395 = vsub.f32 %v74, %v2394
    %2396 = vmatpush.msra.mxu0 %v2395
    %v2397 = vand.u32 %v73, 4294901760
    %v2398 = vsub.f32 %v73, %v2397
    %2399 = vmatpush.msra.mxu0 %v2398
    %v2400 = vand.u32 %v72, 4294901760
    %v2401 = vsub.f32 %v72, %v2400
    %2402 = vmatpush.msra.mxu0 %v2401
    %v2403 = vand.u32 %v71, 4294901760
    %v2404 = vsub.f32 %v71, %v2403
    %2405 = vmatpush.msra.mxu0 %v2404
    %v2406 = vand.u32 %v70, 4294901760
    %v2407 = vsub.f32 %v70, %v2406
    %2408 = vmatpush.msra.mxu0 %v2407
    %v2409 = vand.u32 %v2217, 4294901760
    %v2410 = vsub.f32 %v2217, %v2409
    %2411 = vmatmul.f32.gmra.mxu0 %v2410
    %v2412 = vpop.f32.mrf.mxu0
    %v2413 = vadd.f32 %v2359, %v2412
    %2414 = vdwg.mxu0
    %v2415 = vand.u32 %v85, 4294901760
    %2416 = vmatpush.msra.mxu0 %v2415
    %v2417 = vand.u32 %v84, 4294901760
    %2418 = vmatpush.msra.mxu0 %v2417
    %v2419 = vand.u32 %v83, 4294901760
    %2420 = vmatpush.msra.mxu0 %v2419
    %v2421 = vand.u32 %v82, 4294901760
    %2422 = vmatpush.msra.mxu0 %v2421
    %v2423 = vand.u32 %v81, 4294901760
    %2424 = vmatpush.msra.mxu0 %v2423
    %v2425 = vand.u32 %v80, 4294901760
    %2426 = vmatpush.msra.mxu0 %v2425
    %v2427 = vand.u32 %v79, 4294901760
    %2428 = vmatpush.msra.mxu0 %v2427
    %v2429 = vand.u32 %v78, 4294901760
    %2430 = vmatpush.msra.mxu0 %v2429
    %v2431 = vand.u32 %v77, 4294901760
    %2432 = vmatpush.msra.mxu0 %v2431
    %v2433 = vand.u32 %v76, 4294901760
    %2434 = vmatpush.msra.mxu0 %v2433
    %v2435 = vand.u32 %v75, 4294901760
    %2436 = vmatpush.msra.mxu0 %v2435
    %v2437 = vand.u32 %v74, 4294901760
    %2438 = vmatpush.msra.mxu0 %v2437
    %v2439 = vand.u32 %v73, 4294901760
    %2440 = vmatpush.msra.mxu0 %v2439
    %v2441 = vand.u32 %v72, 4294901760
    %2442 = vmatpush.msra.mxu0 %v2441
    %v2443 = vand.u32 %v71, 4294901760
    %2444 = vmatpush.msra.mxu0 %v2443
    %v2445 = vand.u32 %v70, 4294901760
    %2446 = vmatpush.msra.mxu0 %v2445
    %v2447 = vand.u32 %v2217, 4294901760
    %v2448 = vsub.f32 %v2217, %v2447
    %v2449 = vand.u32 %v2448, 4294901760
    %2450 = vmatmul.f32.gmra.mxu0 %v2449
    %v2451 = vpop.f32.mrf.mxu0
    %v2452 = vadd.f32 %v2413, %v2451
    %2453 = vdwg.mxu0
    %v2454 = vand.u32 %v85, 4294901760
    %v2455 = vsub.f32 %v85, %v2454
    %v2456 = vand.u32 %v2455, 4294901760
    %2457 = vmatpush.msra.mxu0 %v2456
    %v2458 = vand.u32 %v84, 4294901760
    %v2459 = vsub.f32 %v84, %v2458
    %v2460 = vand.u32 %v2459, 4294901760
    %2461 = vmatpush.msra.mxu0 %v2460
    %v2462 = vand.u32 %v83, 4294901760
    %v2463 = vsub.f32 %v83, %v2462
    %v2464 = vand.u32 %v2463, 4294901760
    %2465 = vmatpush.msra.mxu0 %v2464
    %v2466 = vand.u32 %v82, 4294901760
    %v2467 = vsub.f32 %v82, %v2466
    %v2468 = vand.u32 %v2467, 4294901760
    %2469 = vmatpush.msra.mxu0 %v2468
    %v2470 = vand.u32 %v81, 4294901760
    %v2471 = vsub.f32 %v81, %v2470
    %v2472 = vand.u32 %v2471, 4294901760
    %2473 = vmatpush.msra.mxu0 %v2472
    %v2474 = vand.u32 %v80, 4294901760
    %v2475 = vsub.f32 %v80, %v2474
    %v2476 = vand.u32 %v2475, 4294901760
    %2477 = vmatpush.msra.mxu0 %v2476
    %v2478 = vand.u32 %v79, 4294901760
    %v2479 = vsub.f32 %v79, %v2478
    %v2480 = vand.u32 %v2479, 4294901760
    %2481 = vmatpush.msra.mxu0 %v2480
    %v2482 = vand.u32 %v78, 4294901760
    %v2483 = vsub.f32 %v78, %v2482
    %v2484 = vand.u32 %v2483, 4294901760
    %2485 = vmatpush.msra.mxu0 %v2484
    %v2486 = vand.u32 %v77, 4294901760
    %v2487 = vsub.f32 %v77, %v2486
    %v2488 = vand.u32 %v2487, 4294901760
    %2489 = vmatpush.msra.mxu0 %v2488
    %v2490 = vand.u32 %v76, 4294901760
    %v2491 = vsub.f32 %v76, %v2490
    %v2492 = vand.u32 %v2491, 4294901760
    %2493 = vmatpush.msra.mxu0 %v2492
    %v2494 = vand.u32 %v75, 4294901760
    %v2495 = vsub.f32 %v75, %v2494
    %v2496 = vand.u32 %v2495, 4294901760
    %2497 = vmatpush.msra.mxu0 %v2496
    %v2498 = vand.u32 %v74, 4294901760
    %v2499 = vsub.f32 %v74, %v2498
    %v2500 = vand.u32 %v2499, 4294901760
    %2501 = vmatpush.msra.mxu0 %v2500
    %v2502 = vand.u32 %v73, 4294901760
    %v2503 = vsub.f32 %v73, %v2502
    %v2504 = vand.u32 %v2503, 4294901760
    %2505 = vmatpush.msra.mxu0 %v2504
    %v2506 = vand.u32 %v72, 4294901760
    %v2507 = vsub.f32 %v72, %v2506
    %v2508 = vand.u32 %v2507, 4294901760
    %2509 = vmatpush.msra.mxu0 %v2508
    %v2510 = vand.u32 %v71, 4294901760
    %v2511 = vsub.f32 %v71, %v2510
    %v2512 = vand.u32 %v2511, 4294901760
    %2513 = vmatpush.msra.mxu0 %v2512
    %v2514 = vand.u32 %v70, 4294901760
    %v2515 = vsub.f32 %v70, %v2514
    %v2516 = vand.u32 %v2515, 4294901760
    %2517 = vmatpush.msra.mxu0 %v2516
    %v2518 = vand.u32 %v2217, 4294901760
    %2519 = vmatmul.f32.gmra.mxu0 %v2518
    %v2520 = vpop.f32.mrf.mxu0
    %v2521 = vadd.f32 %v2452, %v2520
    %2522 = vdwg.mxu0
    %v2523 = vand.u32 %v85, 4294901760
    %2524 = vmatpush.msra.mxu0 %v2523
    %v2525 = vand.u32 %v84, 4294901760
    %2526 = vmatpush.msra.mxu0 %v2525
    %v2527 = vand.u32 %v83, 4294901760
    %2528 = vmatpush.msra.mxu0 %v2527
    %v2529 = vand.u32 %v82, 4294901760
    %2530 = vmatpush.msra.mxu0 %v2529
    %v2531 = vand.u32 %v81, 4294901760
    %2532 = vmatpush.msra.mxu0 %v2531
    %v2533 = vand.u32 %v80, 4294901760
    %2534 = vmatpush.msra.mxu0 %v2533
    %v2535 = vand.u32 %v79, 4294901760
    %2536 = vmatpush.msra.mxu0 %v2535
    %v2537 = vand.u32 %v78, 4294901760
    %2538 = vmatpush.msra.mxu0 %v2537
    %v2539 = vand.u32 %v77, 4294901760
    %2540 = vmatpush.msra.mxu0 %v2539
    %v2541 = vand.u32 %v76, 4294901760
    %2542 = vmatpush.msra.mxu0 %v2541
    %v2543 = vand.u32 %v75, 4294901760
    %2544 = vmatpush.msra.mxu0 %v2543
    %v2545 = vand.u32 %v74, 4294901760
    %2546 = vmatpush.msra.mxu0 %v2545
    %v2547 = vand.u32 %v73, 4294901760
    %2548 = vmatpush.msra.mxu0 %v2547
    %v2549 = vand.u32 %v72, 4294901760
    %2550 = vmatpush.msra.mxu0 %v2549
    %v2551 = vand.u32 %v71, 4294901760
    %2552 = vmatpush.msra.mxu0 %v2551
    %v2553 = vand.u32 %v70, 4294901760
    %2554 = vmatpush.msra.mxu0 %v2553
    %v2555 = vand.u32 %v2217, 4294901760
    %2556 = vmatmul.f32.gmra.mxu0 %v2555
    %v2557 = vpop.f32.mrf.mxu0
    %v2558 = vadd.f32 %v2521, %v2557
    %2559 = vdwg.mxu0
    %v2560 = vand.u32 %v101, 4294901760
    %2561 = vmatpush.msra.mxu0 %v2560
    %v2562 = vand.u32 %v100, 4294901760
    %2563 = vmatpush.msra.mxu0 %v2562
    %v2564 = vand.u32 %v99, 4294901760
    %2565 = vmatpush.msra.mxu0 %v2564
    %v2566 = vand.u32 %v98, 4294901760
    %2567 = vmatpush.msra.mxu0 %v2566
    %v2568 = vand.u32 %v97, 4294901760
    %2569 = vmatpush.msra.mxu0 %v2568
    %v2570 = vand.u32 %v96, 4294901760
    %2571 = vmatpush.msra.mxu0 %v2570
    %v2572 = vand.u32 %v95, 4294901760
    %2573 = vmatpush.msra.mxu0 %v2572
    %v2574 = vand.u32 %v94, 4294901760
    %2575 = vmatpush.msra.mxu0 %v2574
    %v2576 = vand.u32 %v93, 4294901760
    %2577 = vmatpush.msra.mxu0 %v2576
    %v2578 = vand.u32 %v92, 4294901760
    %2579 = vmatpush.msra.mxu0 %v2578
    %v2580 = vand.u32 %v91, 4294901760
    %2581 = vmatpush.msra.mxu0 %v2580
    %v2582 = vand.u32 %v90, 4294901760
    %2583 = vmatpush.msra.mxu0 %v2582
    %v2584 = vand.u32 %v89, 4294901760
    %2585 = vmatpush.msra.mxu0 %v2584
    %v2586 = vand.u32 %v88, 4294901760
    %2587 = vmatpush.msra.mxu0 %v2586
    %v2588 = vand.u32 %v87, 4294901760
    %2589 = vmatpush.msra.mxu0 %v2588
    %v2590 = vand.u32 %v86, 4294901760
    %2591 = vmatpush.msra.mxu0 %v2590
    %v2592 = vand.u32 %v2218, 4294901760
    %v2593 = vsub.f32 %v2218, %v2592
    %v2594 = vand.u32 %v2593, 4294901760
    %v2595 = vsub.f32 %v2593, %v2594
    %v2596 = vand.u32 %v2595, 4294901760
    %2597 = vmatmul.f32.gmra.mxu0 %v2596
    %v2598 = vpop.f32.mrf.mxu0
    %v2599 = vadd.f32 %v2558, %v2598
    %2600 = vdwg.mxu0
    %v2601 = vand.u32 %v101, 4294901760
    %v2602 = vsub.f32 %v101, %v2601
    %v2603 = vand.u32 %v2602, 4294901760
    %v2604 = vsub.f32 %v2602, %v2603
    %v2605 = vand.u32 %v2604, 4294901760
    %2606 = vmatpush.msra.mxu0 %v2605
    %v2607 = vand.u32 %v100, 4294901760
    %v2608 = vsub.f32 %v100, %v2607
    %v2609 = vand.u32 %v2608, 4294901760
    %v2610 = vsub.f32 %v2608, %v2609
    %v2611 = vand.u32 %v2610, 4294901760
    %2612 = vmatpush.msra.mxu0 %v2611
    %v2613 = vand.u32 %v99, 4294901760
    %v2614 = vsub.f32 %v99, %v2613
    %v2615 = vand.u32 %v2614, 4294901760
    %v2616 = vsub.f32 %v2614, %v2615
    %v2617 = vand.u32 %v2616, 4294901760
    %2618 = vmatpush.msra.mxu0 %v2617
    %v2619 = vand.u32 %v98, 4294901760
    %v2620 = vsub.f32 %v98, %v2619
    %v2621 = vand.u32 %v2620, 4294901760
    %v2622 = vsub.f32 %v2620, %v2621
    %v2623 = vand.u32 %v2622, 4294901760
    %2624 = vmatpush.msra.mxu0 %v2623
    %v2625 = vand.u32 %v97, 4294901760
    %v2626 = vsub.f32 %v97, %v2625
    %v2627 = vand.u32 %v2626, 4294901760
    %v2628 = vsub.f32 %v2626, %v2627
    %v2629 = vand.u32 %v2628, 4294901760
    %2630 = vmatpush.msra.mxu0 %v2629
    %v2631 = vand.u32 %v96, 4294901760
    %v2632 = vsub.f32 %v96, %v2631
    %v2633 = vand.u32 %v2632, 4294901760
    %v2634 = vsub.f32 %v2632, %v2633
    %v2635 = vand.u32 %v2634, 4294901760
    %2636 = vmatpush.msra.mxu0 %v2635
    %v2637 = vand.u32 %v95, 4294901760
    %v2638 = vsub.f32 %v95, %v2637
    %v2639 = vand.u32 %v2638, 4294901760
    %v2640 = vsub.f32 %v2638, %v2639
    %v2641 = vand.u32 %v2640, 4294901760
    %2642 = vmatpush.msra.mxu0 %v2641
    %v2643 = vand.u32 %v94, 4294901760
    %v2644 = vsub.f32 %v94, %v2643
    %v2645 = vand.u32 %v2644, 4294901760
    %v2646 = vsub.f32 %v2644, %v2645
    %v2647 = vand.u32 %v2646, 4294901760
    %2648 = vmatpush.msra.mxu0 %v2647
    %v2649 = vand.u32 %v93, 4294901760
    %v2650 = vsub.f32 %v93, %v2649
    %v2651 = vand.u32 %v2650, 4294901760
    %v2652 = vsub.f32 %v2650, %v2651
    %v2653 = vand.u32 %v2652, 4294901760
    %2654 = vmatpush.msra.mxu0 %v2653
    %v2655 = vand.u32 %v92, 4294901760
    %v2656 = vsub.f32 %v92, %v2655
    %v2657 = vand.u32 %v2656, 4294901760
    %v2658 = vsub.f32 %v2656, %v2657
    %v2659 = vand.u32 %v2658, 4294901760
    %2660 = vmatpush.msra.mxu0 %v2659
    %v2661 = vand.u32 %v91, 4294901760
    %v2662 = vsub.f32 %v91, %v2661
    %v2663 = vand.u32 %v2662, 4294901760
    %v2664 = vsub.f32 %v2662, %v2663
    %v2665 = vand.u32 %v2664, 4294901760
    %2666 = vmatpush.msra.mxu0 %v2665
    %v2667 = vand.u32 %v90, 4294901760
    %v2668 = vsub.f32 %v90, %v2667
    %v2669 = vand.u32 %v2668, 4294901760
    %v2670 = vsub.f32 %v2668, %v2669
    %v2671 = vand.u32 %v2670, 4294901760
    %2672 = vmatpush.msra.mxu0 %v2671
    %v2673 = vand.u32 %v89, 4294901760
    %v2674 = vsub.f32 %v89, %v2673
    %v2675 = vand.u32 %v2674, 4294901760
    %v2676 = vsub.f32 %v2674, %v2675
    %v2677 = vand.u32 %v2676, 4294901760
    %2678 = vmatpush.msra.mxu0 %v2677
    %v2679 = vand.u32 %v88, 4294901760
    %v2680 = vsub.f32 %v88, %v2679
    %v2681 = vand.u32 %v2680, 4294901760
    %v2682 = vsub.f32 %v2680, %v2681
    %v2683 = vand.u32 %v2682, 4294901760
    %2684 = vmatpush.msra.mxu0 %v2683
    %v2685 = vand.u32 %v87, 4294901760
    %v2686 = vsub.f32 %v87, %v2685
    %v2687 = vand.u32 %v2686, 4294901760
    %v2688 = vsub.f32 %v2686, %v2687
    %v2689 = vand.u32 %v2688, 4294901760
    %2690 = vmatpush.msra.mxu0 %v2689
    %v2691 = vand.u32 %v86, 4294901760
    %v2692 = vsub.f32 %v86, %v2691
    %v2693 = vand.u32 %v2692, 4294901760
    %v2694 = vsub.f32 %v2692, %v2693
    %v2695 = vand.u32 %v2694, 4294901760
    %2696 = vmatpush.msra.mxu0 %v2695
    %v2697 = vand.u32 %v2218, 4294901760
    %2698 = vmatmul.f32.gmra.mxu0 %v2697
    %v2699 = vpop.f32.mrf.mxu0
    %v2700 = vadd.f32 %v2599, %v2699
    %2701 = vdwg.mxu0
    %v2702 = vand.u32 %v101, 4294901760
    %v2703 = vsub.f32 %v101, %v2702
    %2704 = vmatpush.msra.mxu0 %v2703
    %v2705 = vand.u32 %v100, 4294901760
    %v2706 = vsub.f32 %v100, %v2705
    %2707 = vmatpush.msra.mxu0 %v2706
    %v2708 = vand.u32 %v99, 4294901760
    %v2709 = vsub.f32 %v99, %v2708
    %2710 = vmatpush.msra.mxu0 %v2709
    %v2711 = vand.u32 %v98, 4294901760
    %v2712 = vsub.f32 %v98, %v2711
    %2713 = vmatpush.msra.mxu0 %v2712
    %v2714 = vand.u32 %v97, 4294901760
    %v2715 = vsub.f32 %v97, %v2714
    %2716 = vmatpush.msra.mxu0 %v2715
    %v2717 = vand.u32 %v96, 4294901760
    %v2718 = vsub.f32 %v96, %v2717
    %2719 = vmatpush.msra.mxu0 %v2718
    %v2720 = vand.u32 %v95, 4294901760
    %v2721 = vsub.f32 %v95, %v2720
    %2722 = vmatpush.msra.mxu0 %v2721
    %v2723 = vand.u32 %v94, 4294901760
    %v2724 = vsub.f32 %v94, %v2723
    %2725 = vmatpush.msra.mxu0 %v2724
    %v2726 = vand.u32 %v93, 4294901760
    %v2727 = vsub.f32 %v93, %v2726
    %2728 = vmatpush.msra.mxu0 %v2727
    %v2729 = vand.u32 %v92, 4294901760
    %v2730 = vsub.f32 %v92, %v2729
    %2731 = vmatpush.msra.mxu0 %v2730
    %v2732 = vand.u32 %v91, 4294901760
    %v2733 = vsub.f32 %v91, %v2732
    %2734 = vmatpush.msra.mxu0 %v2733
    %v2735 = vand.u32 %v90, 4294901760
    %v2736 = vsub.f32 %v90, %v2735
    %2737 = vmatpush.msra.mxu0 %v2736
    %v2738 = vand.u32 %v89, 4294901760
    %v2739 = vsub.f32 %v89, %v2738
    %2740 = vmatpush.msra.mxu0 %v2739
    %v2741 = vand.u32 %v88, 4294901760
    %v2742 = vsub.f32 %v88, %v2741
    %2743 = vmatpush.msra.mxu0 %v2742
    %v2744 = vand.u32 %v87, 4294901760
    %v2745 = vsub.f32 %v87, %v2744
    %2746 = vmatpush.msra.mxu0 %v2745
    %v2747 = vand.u32 %v86, 4294901760
    %v2748 = vsub.f32 %v86, %v2747
    %2749 = vmatpush.msra.mxu0 %v2748
    %v2750 = vand.u32 %v2218, 4294901760
    %v2751 = vsub.f32 %v2218, %v2750
    %2752 = vmatmul.f32.gmra.mxu0 %v2751
    %v2753 = vpop.f32.mrf.mxu0
    %v2754 = vadd.f32 %v2700, %v2753
    %2755 = vdwg.mxu0
    %v2756 = vand.u32 %v101, 4294901760
    %2757 = vmatpush.msra.mxu0 %v2756
    %v2758 = vand.u32 %v100, 4294901760
    %2759 = vmatpush.msra.mxu0 %v2758
    %v2760 = vand.u32 %v99, 4294901760
    %2761 = vmatpush.msra.mxu0 %v2760
    %v2762 = vand.u32 %v98, 4294901760
    %2763 = vmatpush.msra.mxu0 %v2762
    %v2764 = vand.u32 %v97, 4294901760
    %2765 = vmatpush.msra.mxu0 %v2764
    %v2766 = vand.u32 %v96, 4294901760
    %2767 = vmatpush.msra.mxu0 %v2766
    %v2768 = vand.u32 %v95, 4294901760
    %2769 = vmatpush.msra.mxu0 %v2768
    %v2770 = vand.u32 %v94, 4294901760
    %2771 = vmatpush.msra.mxu0 %v2770
    %v2772 = vand.u32 %v93, 4294901760
    %2773 = vmatpush.msra.mxu0 %v2772
    %v2774 = vand.u32 %v92, 4294901760
    %2775 = vmatpush.msra.mxu0 %v2774
    %v2776 = vand.u32 %v91, 4294901760
    %2777 = vmatpush.msra.mxu0 %v2776
    %v2778 = vand.u32 %v90, 4294901760
    %2779 = vmatpush.msra.mxu0 %v2778
    %v2780 = vand.u32 %v89, 4294901760
    %2781 = vmatpush.msra.mxu0 %v2780
    %v2782 = vand.u32 %v88, 4294901760
    %2783 = vmatpush.msra.mxu0 %v2782
    %v2784 = vand.u32 %v87, 4294901760
    %2785 = vmatpush.msra.mxu0 %v2784
    %v2786 = vand.u32 %v86, 4294901760
    %2787 = vmatpush.msra.mxu0 %v2786
    %v2788 = vand.u32 %v2218, 4294901760
    %v2789 = vsub.f32 %v2218, %v2788
    %v2790 = vand.u32 %v2789, 4294901760
    %2791 = vmatmul.f32.gmra.mxu0 %v2790
    %v2792 = vpop.f32.mrf.mxu0
    %v2793 = vadd.f32 %v2754, %v2792
    %2794 = vdwg.mxu0
    %v2795 = vand.u32 %v101, 4294901760
    %v2796 = vsub.f32 %v101, %v2795
    %v2797 = vand.u32 %v2796, 4294901760
    %2798 = vmatpush.msra.mxu0 %v2797
    %v2799 = vand.u32 %v100, 4294901760
    %v2800 = vsub.f32 %v100, %v2799
    %v2801 = vand.u32 %v2800, 4294901760
    %2802 = vmatpush.msra.mxu0 %v2801
    %v2803 = vand.u32 %v99, 4294901760
    %v2804 = vsub.f32 %v99, %v2803
    %v2805 = vand.u32 %v2804, 4294901760
    %2806 = vmatpush.msra.mxu0 %v2805
    %v2807 = vand.u32 %v98, 4294901760
    %v2808 = vsub.f32 %v98, %v2807
    %v2809 = vand.u32 %v2808, 4294901760
    %2810 = vmatpush.msra.mxu0 %v2809
    %v2811 = vand.u32 %v97, 4294901760
    %v2812 = vsub.f32 %v97, %v2811
    %v2813 = vand.u32 %v2812, 4294901760
    %2814 = vmatpush.msra.mxu0 %v2813
    %v2815 = vand.u32 %v96, 4294901760
    %v2816 = vsub.f32 %v96, %v2815
    %v2817 = vand.u32 %v2816, 4294901760
    %2818 = vmatpush.msra.mxu0 %v2817
    %v2819 = vand.u32 %v95, 4294901760
    %v2820 = vsub.f32 %v95, %v2819
    %v2821 = vand.u32 %v2820, 4294901760
    %2822 = vmatpush.msra.mxu0 %v2821
    %v2823 = vand.u32 %v94, 4294901760
    %v2824 = vsub.f32 %v94, %v2823
    %v2825 = vand.u32 %v2824, 4294901760
    %2826 = vmatpush.msra.mxu0 %v2825
    %v2827 = vand.u32 %v93, 4294901760
    %v2828 = vsub.f32 %v93, %v2827
    %v2829 = vand.u32 %v2828, 4294901760
    %2830 = vmatpush.msra.mxu0 %v2829
    %v2831 = vand.u32 %v92, 4294901760
    %v2832 = vsub.f32 %v92, %v2831
    %v2833 = vand.u32 %v2832, 4294901760
    %2834 = vmatpush.msra.mxu0 %v2833
    %v2835 = vand.u32 %v91, 4294901760
    %v2836 = vsub.f32 %v91, %v2835
    %v2837 = vand.u32 %v2836, 4294901760
    %2838 = vmatpush.msra.mxu0 %v2837
    %v2839 = vand.u32 %v90, 4294901760
    %v2840 = vsub.f32 %v90, %v2839
    %v2841 = vand.u32 %v2840, 4294901760
    %2842 = vmatpush.msra.mxu0 %v2841
    %v2843 = vand.u32 %v89, 4294901760
    %v2844 = vsub.f32 %v89, %v2843
    %v2845 = vand.u32 %v2844, 4294901760
    %2846 = vmatpush.msra.mxu0 %v2845
    %v2847 = vand.u32 %v88, 4294901760
    %v2848 = vsub.f32 %v88, %v2847
    %v2849 = vand.u32 %v2848, 4294901760
    %2850 = vmatpush.msra.mxu0 %v2849
    %v2851 = vand.u32 %v87, 4294901760
    %v2852 = vsub.f32 %v87, %v2851
    %v2853 = vand.u32 %v2852, 4294901760
    %2854 = vmatpush.msra.mxu0 %v2853
    %v2855 = vand.u32 %v86, 4294901760
    %v2856 = vsub.f32 %v86, %v2855
    %v2857 = vand.u32 %v2856, 4294901760
    %2858 = vmatpush.msra.mxu0 %v2857
    %v2859 = vand.u32 %v2218, 4294901760
    %2860 = vmatmul.f32.gmra.mxu0 %v2859
    %v2861 = vpop.f32.mrf.mxu0
    %v2862 = vadd.f32 %v2793, %v2861
    %2863 = vdwg.mxu0
    %v2864 = vand.u32 %v101, 4294901760
    %2865 = vmatpush.msra.mxu0 %v2864
    %v2866 = vand.u32 %v100, 4294901760
    %2867 = vmatpush.msra.mxu0 %v2866
    %v2868 = vand.u32 %v99, 4294901760
    %2869 = vmatpush.msra.mxu0 %v2868
    %v2870 = vand.u32 %v98, 4294901760
    %2871 = vmatpush.msra.mxu0 %v2870
    %v2872 = vand.u32 %v97, 4294901760
    %2873 = vmatpush.msra.mxu0 %v2872
    %v2874 = vand.u32 %v96, 4294901760
    %2875 = vmatpush.msra.mxu0 %v2874
    %v2876 = vand.u32 %v95, 4294901760
    %2877 = vmatpush.msra.mxu0 %v2876
    %v2878 = vand.u32 %v94, 4294901760
    %2879 = vmatpush.msra.mxu0 %v2878
    %v2880 = vand.u32 %v93, 4294901760
    %2881 = vmatpush.msra.mxu0 %v2880
    %v2882 = vand.u32 %v92, 4294901760
    %2883 = vmatpush.msra.mxu0 %v2882
    %v2884 = vand.u32 %v91, 4294901760
    %2885 = vmatpush.msra.mxu0 %v2884
    %v2886 = vand.u32 %v90, 4294901760
    %2887 = vmatpush.msra.mxu0 %v2886
    %v2888 = vand.u32 %v89, 4294901760
    %2889 = vmatpush.msra.mxu0 %v2888
    %v2890 = vand.u32 %v88, 4294901760
    %2891 = vmatpush.msra.mxu0 %v2890
    %v2892 = vand.u32 %v87, 4294901760
    %2893 = vmatpush.msra.mxu0 %v2892
    %v2894 = vand.u32 %v86, 4294901760
    %2895 = vmatpush.msra.mxu0 %v2894
    %v2896 = vand.u32 %v2218, 4294901760
    %2897 = vmatmul.f32.gmra.mxu0 %v2896
    %v2898 = vpop.f32.mrf.mxu0
    %v2899 = vadd.f32 %v2862, %v2898
    %2900 = vdwg.mxu0
    %2901 = vset.pattern.permute.xlu0 4
    %2902 = vperm.xlu0 %2901, %v69
    %v2903 = vpop.permute.xlu0 %2902
    %vm2904 = vcmp.eq.s32.totalorder %v135, %v2903
    %vm2905 = vcmp.eq.s32.totalorder %v136, %v2903
    %v2906 = vsel %vm2904, 1, 0
    %v2907 = vsel %vm2905, 1, 0
    %v2908 = vcvt.s32.f32 %v2906
    %v2909 = vcvt.s32.f32 %v2907
    %v2910 = vand.u32 %v85, 4294901760
    %2911 = vmatpush.msra.mxu0 %v2910
    %v2912 = vand.u32 %v84, 4294901760
    %2913 = vmatpush.msra.mxu0 %v2912
    %v2914 = vand.u32 %v83, 4294901760
    %2915 = vmatpush.msra.mxu0 %v2914
    %v2916 = vand.u32 %v82, 4294901760
    %2917 = vmatpush.msra.mxu0 %v2916
    %v2918 = vand.u32 %v81, 4294901760
    %2919 = vmatpush.msra.mxu0 %v2918
    %v2920 = vand.u32 %v80, 4294901760
    %2921 = vmatpush.msra.mxu0 %v2920
    %v2922 = vand.u32 %v79, 4294901760
    %2923 = vmatpush.msra.mxu0 %v2922
    %v2924 = vand.u32 %v78, 4294901760
    %2925 = vmatpush.msra.mxu0 %v2924
    %v2926 = vand.u32 %v77, 4294901760
    %2927 = vmatpush.msra.mxu0 %v2926
    %v2928 = vand.u32 %v76, 4294901760
    %2929 = vmatpush.msra.mxu0 %v2928
    %v2930 = vand.u32 %v75, 4294901760
    %2931 = vmatpush.msra.mxu0 %v2930
    %v2932 = vand.u32 %v74, 4294901760
    %2933 = vmatpush.msra.mxu0 %v2932
    %v2934 = vand.u32 %v73, 4294901760
    %2935 = vmatpush.msra.mxu0 %v2934
    %v2936 = vand.u32 %v72, 4294901760
    %2937 = vmatpush.msra.mxu0 %v2936
    %v2938 = vand.u32 %v71, 4294901760
    %2939 = vmatpush.msra.mxu0 %v2938
    %v2940 = vand.u32 %v70, 4294901760
    %2941 = vmatpush.msra.mxu0 %v2940
    %v2942 = vand.u32 %v2908, 4294901760
    %v2943 = vsub.f32 %v2908, %v2942
    %v2944 = vand.u32 %v2943, 4294901760
    %v2945 = vsub.f32 %v2943, %v2944
    %v2946 = vand.u32 %v2945, 4294901760
    %2947 = vmatmul.f32.gmra.mxu0 %v2946
    %v2948 = vpop.f32.mrf.mxu0
    %v2949 = vadd.f32 0.0, %v2948
    %2950 = vdwg.mxu0
    %v2951 = vand.u32 %v85, 4294901760
    %v2952 = vsub.f32 %v85, %v2951
    %v2953 = vand.u32 %v2952, 4294901760
    %v2954 = vsub.f32 %v2952, %v2953
    %v2955 = vand.u32 %v2954, 4294901760
    %2956 = vmatpush.msra.mxu0 %v2955
    %v2957 = vand.u32 %v84, 4294901760
    %v2958 = vsub.f32 %v84, %v2957
    %v2959 = vand.u32 %v2958, 4294901760
    %v2960 = vsub.f32 %v2958, %v2959
    %v2961 = vand.u32 %v2960, 4294901760
    %2962 = vmatpush.msra.mxu0 %v2961
    %v2963 = vand.u32 %v83, 4294901760
    %v2964 = vsub.f32 %v83, %v2963
    %v2965 = vand.u32 %v2964, 4294901760
    %v2966 = vsub.f32 %v2964, %v2965
    %v2967 = vand.u32 %v2966, 4294901760
    %2968 = vmatpush.msra.mxu0 %v2967
    %v2969 = vand.u32 %v82, 4294901760
    %v2970 = vsub.f32 %v82, %v2969
    %v2971 = vand.u32 %v2970, 4294901760
    %v2972 = vsub.f32 %v2970, %v2971
    %v2973 = vand.u32 %v2972, 4294901760
    %2974 = vmatpush.msra.mxu0 %v2973
    %v2975 = vand.u32 %v81, 4294901760
    %v2976 = vsub.f32 %v81, %v2975
    %v2977 = vand.u32 %v2976, 4294901760
    %v2978 = vsub.f32 %v2976, %v2977
    %v2979 = vand.u32 %v2978, 4294901760
    %2980 = vmatpush.msra.mxu0 %v2979
    %v2981 = vand.u32 %v80, 4294901760
    %v2982 = vsub.f32 %v80, %v2981
    %v2983 = vand.u32 %v2982, 4294901760
    %v2984 = vsub.f32 %v2982, %v2983
    %v2985 = vand.u32 %v2984, 4294901760
    %2986 = vmatpush.msra.mxu0 %v2985
    %v2987 = vand.u32 %v79, 4294901760
    %v2988 = vsub.f32 %v79, %v2987
    %v2989 = vand.u32 %v2988, 4294901760
    %v2990 = vsub.f32 %v2988, %v2989
    %v2991 = vand.u32 %v2990, 4294901760
    %2992 = vmatpush.msra.mxu0 %v2991
    %v2993 = vand.u32 %v78, 4294901760
    %v2994 = vsub.f32 %v78, %v2993
    %v2995 = vand.u32 %v2994, 4294901760
    %v2996 = vsub.f32 %v2994, %v2995
    %v2997 = vand.u32 %v2996, 4294901760
    %2998 = vmatpush.msra.mxu0 %v2997
    %v2999 = vand.u32 %v77, 4294901760
    %v3000 = vsub.f32 %v77, %v2999
    %v3001 = vand.u32 %v3000, 4294901760
    %v3002 = vsub.f32 %v3000, %v3001
    %v3003 = vand.u32 %v3002, 4294901760
    %3004 = vmatpush.msra.mxu0 %v3003
    %v3005 = vand.u32 %v76, 4294901760
    %v3006 = vsub.f32 %v76, %v3005
    %v3007 = vand.u32 %v3006, 4294901760
    %v3008 = vsub.f32 %v3006, %v3007
    %v3009 = vand.u32 %v3008, 4294901760
    %3010 = vmatpush.msra.mxu0 %v3009
    %v3011 = vand.u32 %v75, 4294901760
    %v3012 = vsub.f32 %v75, %v3011
    %v3013 = vand.u32 %v3012, 4294901760
    %v3014 = vsub.f32 %v3012, %v3013
    %v3015 = vand.u32 %v3014, 4294901760
    %3016 = vmatpush.msra.mxu0 %v3015
    %v3017 = vand.u32 %v74, 4294901760
    %v3018 = vsub.f32 %v74, %v3017
    %v3019 = vand.u32 %v3018, 4294901760
    %v3020 = vsub.f32 %v3018, %v3019
    %v3021 = vand.u32 %v3020, 4294901760
    %3022 = vmatpush.msra.mxu0 %v3021
    %v3023 = vand.u32 %v73, 4294901760
    %v3024 = vsub.f32 %v73, %v3023
    %v3025 = vand.u32 %v3024, 4294901760
    %v3026 = vsub.f32 %v3024, %v3025
    %v3027 = vand.u32 %v3026, 4294901760
    %3028 = vmatpush.msra.mxu0 %v3027
    %v3029 = vand.u32 %v72, 4294901760
    %v3030 = vsub.f32 %v72, %v3029
    %v3031 = vand.u32 %v3030, 4294901760
    %v3032 = vsub.f32 %v3030, %v3031
    %v3033 = vand.u32 %v3032, 4294901760
    %3034 = vmatpush.msra.mxu0 %v3033
    %v3035 = vand.u32 %v71, 4294901760
    %v3036 = vsub.f32 %v71, %v3035
    %v3037 = vand.u32 %v3036, 4294901760
    %v3038 = vsub.f32 %v3036, %v3037
    %v3039 = vand.u32 %v3038, 4294901760
    %3040 = vmatpush.msra.mxu0 %v3039
    %v3041 = vand.u32 %v70, 4294901760
    %v3042 = vsub.f32 %v70, %v3041
    %v3043 = vand.u32 %v3042, 4294901760
    %v3044 = vsub.f32 %v3042, %v3043
    %v3045 = vand.u32 %v3044, 4294901760
    %3046 = vmatpush.msra.mxu0 %v3045
    %v3047 = vand.u32 %v2908, 4294901760
    %3048 = vmatmul.f32.gmra.mxu0 %v3047
    %v3049 = vpop.f32.mrf.mxu0
    %v3050 = vadd.f32 %v2949, %v3049
    %3051 = vdwg.mxu0
    %v3052 = vand.u32 %v85, 4294901760
    %v3053 = vsub.f32 %v85, %v3052
    %3054 = vmatpush.msra.mxu0 %v3053
    %v3055 = vand.u32 %v84, 4294901760
    %v3056 = vsub.f32 %v84, %v3055
    %3057 = vmatpush.msra.mxu0 %v3056
    %v3058 = vand.u32 %v83, 4294901760
    %v3059 = vsub.f32 %v83, %v3058
    %3060 = vmatpush.msra.mxu0 %v3059
    %v3061 = vand.u32 %v82, 4294901760
    %v3062 = vsub.f32 %v82, %v3061
    %3063 = vmatpush.msra.mxu0 %v3062
    %v3064 = vand.u32 %v81, 4294901760
    %v3065 = vsub.f32 %v81, %v3064
    %3066 = vmatpush.msra.mxu0 %v3065
    %v3067 = vand.u32 %v80, 4294901760
    %v3068 = vsub.f32 %v80, %v3067
    %3069 = vmatpush.msra.mxu0 %v3068
    %v3070 = vand.u32 %v79, 4294901760
    %v3071 = vsub.f32 %v79, %v3070
    %3072 = vmatpush.msra.mxu0 %v3071
    %v3073 = vand.u32 %v78, 4294901760
    %v3074 = vsub.f32 %v78, %v3073
    %3075 = vmatpush.msra.mxu0 %v3074
    %v3076 = vand.u32 %v77, 4294901760
    %v3077 = vsub.f32 %v77, %v3076
    %3078 = vmatpush.msra.mxu0 %v3077
    %v3079 = vand.u32 %v76, 4294901760
    %v3080 = vsub.f32 %v76, %v3079
    %3081 = vmatpush.msra.mxu0 %v3080
    %v3082 = vand.u32 %v75, 4294901760
    %v3083 = vsub.f32 %v75, %v3082
    %3084 = vmatpush.msra.mxu0 %v3083
    %v3085 = vand.u32 %v74, 4294901760
    %v3086 = vsub.f32 %v74, %v3085
    %3087 = vmatpush.msra.mxu0 %v3086
    %v3088 = vand.u32 %v73, 4294901760
    %v3089 = vsub.f32 %v73, %v3088
    %3090 = vmatpush.msra.mxu0 %v3089
    %v3091 = vand.u32 %v72, 4294901760
    %v3092 = vsub.f32 %v72, %v3091
    %3093 = vmatpush.msra.mxu0 %v3092
    %v3094 = vand.u32 %v71, 4294901760
    %v3095 = vsub.f32 %v71, %v3094
    %3096 = vmatpush.msra.mxu0 %v3095
    %v3097 = vand.u32 %v70, 4294901760
    %v3098 = vsub.f32 %v70, %v3097
    %3099 = vmatpush.msra.mxu0 %v3098
    %v3100 = vand.u32 %v2908, 4294901760
    %v3101 = vsub.f32 %v2908, %v3100
    %3102 = vmatmul.f32.gmra.mxu0 %v3101
    %v3103 = vpop.f32.mrf.mxu0
    %v3104 = vadd.f32 %v3050, %v3103
    %3105 = vdwg.mxu0
    %v3106 = vand.u32 %v85, 4294901760
    %3107 = vmatpush.msra.mxu0 %v3106
    %v3108 = vand.u32 %v84, 4294901760
    %3109 = vmatpush.msra.mxu0 %v3108
    %v3110 = vand.u32 %v83, 4294901760
    %3111 = vmatpush.msra.mxu0 %v3110
    %v3112 = vand.u32 %v82, 4294901760
    %3113 = vmatpush.msra.mxu0 %v3112
    %v3114 = vand.u32 %v81, 4294901760
    %3115 = vmatpush.msra.mxu0 %v3114
    %v3116 = vand.u32 %v80, 4294901760
    %3117 = vmatpush.msra.mxu0 %v3116
    %v3118 = vand.u32 %v79, 4294901760
    %3119 = vmatpush.msra.mxu0 %v3118
    %v3120 = vand.u32 %v78, 4294901760
    %3121 = vmatpush.msra.mxu0 %v3120
    %v3122 = vand.u32 %v77, 4294901760
    %3123 = vmatpush.msra.mxu0 %v3122
    %v3124 = vand.u32 %v76, 4294901760
    %3125 = vmatpush.msra.mxu0 %v3124
    %v3126 = vand.u32 %v75, 4294901760
    %3127 = vmatpush.msra.mxu0 %v3126
    %v3128 = vand.u32 %v74, 4294901760
    %3129 = vmatpush.msra.mxu0 %v3128
    %v3130 = vand.u32 %v73, 4294901760
    %3131 = vmatpush.msra.mxu0 %v3130
    %v3132 = vand.u32 %v72, 4294901760
    %3133 = vmatpush.msra.mxu0 %v3132
    %v3134 = vand.u32 %v71, 4294901760
    %3135 = vmatpush.msra.mxu0 %v3134
    %v3136 = vand.u32 %v70, 4294901760
    %3137 = vmatpush.msra.mxu0 %v3136
    %v3138 = vand.u32 %v2908, 4294901760
    %v3139 = vsub.f32 %v2908, %v3138
    %v3140 = vand.u32 %v3139, 4294901760
    %3141 = vmatmul.f32.gmra.mxu0 %v3140
    %v3142 = vpop.f32.mrf.mxu0
    %v3143 = vadd.f32 %v3104, %v3142
    %3144 = vdwg.mxu0
    %v3145 = vand.u32 %v85, 4294901760
    %v3146 = vsub.f32 %v85, %v3145
    %v3147 = vand.u32 %v3146, 4294901760
    %3148 = vmatpush.msra.mxu0 %v3147
    %v3149 = vand.u32 %v84, 4294901760
    %v3150 = vsub.f32 %v84, %v3149
    %v3151 = vand.u32 %v3150, 4294901760
    %3152 = vmatpush.msra.mxu0 %v3151
    %v3153 = vand.u32 %v83, 4294901760
    %v3154 = vsub.f32 %v83, %v3153
    %v3155 = vand.u32 %v3154, 4294901760
    %3156 = vmatpush.msra.mxu0 %v3155
    %v3157 = vand.u32 %v82, 4294901760
    %v3158 = vsub.f32 %v82, %v3157
    %v3159 = vand.u32 %v3158, 4294901760
    %3160 = vmatpush.msra.mxu0 %v3159
    %v3161 = vand.u32 %v81, 4294901760
    %v3162 = vsub.f32 %v81, %v3161
    %v3163 = vand.u32 %v3162, 4294901760
    %3164 = vmatpush.msra.mxu0 %v3163
    %v3165 = vand.u32 %v80, 4294901760
    %v3166 = vsub.f32 %v80, %v3165
    %v3167 = vand.u32 %v3166, 4294901760
    %3168 = vmatpush.msra.mxu0 %v3167
    %v3169 = vand.u32 %v79, 4294901760
    %v3170 = vsub.f32 %v79, %v3169
    %v3171 = vand.u32 %v3170, 4294901760
    %3172 = vmatpush.msra.mxu0 %v3171
    %v3173 = vand.u32 %v78, 4294901760
    %v3174 = vsub.f32 %v78, %v3173
    %v3175 = vand.u32 %v3174, 4294901760
    %3176 = vmatpush.msra.mxu0 %v3175
    %v3177 = vand.u32 %v77, 4294901760
    %v3178 = vsub.f32 %v77, %v3177
    %v3179 = vand.u32 %v3178, 4294901760
    %3180 = vmatpush.msra.mxu0 %v3179
    %v3181 = vand.u32 %v76, 4294901760
    %v3182 = vsub.f32 %v76, %v3181
    %v3183 = vand.u32 %v3182, 4294901760
    %3184 = vmatpush.msra.mxu0 %v3183
    %v3185 = vand.u32 %v75, 4294901760
    %v3186 = vsub.f32 %v75, %v3185
    %v3187 = vand.u32 %v3186, 4294901760
    %3188 = vmatpush.msra.mxu0 %v3187
    %v3189 = vand.u32 %v74, 4294901760
    %v3190 = vsub.f32 %v74, %v3189
    %v3191 = vand.u32 %v3190, 4294901760
    %3192 = vmatpush.msra.mxu0 %v3191
    %v3193 = vand.u32 %v73, 4294901760
    %v3194 = vsub.f32 %v73, %v3193
    %v3195 = vand.u32 %v3194, 4294901760
    %3196 = vmatpush.msra.mxu0 %v3195
    %v3197 = vand.u32 %v72, 4294901760
    %v3198 = vsub.f32 %v72, %v3197
    %v3199 = vand.u32 %v3198, 4294901760
    %3200 = vmatpush.msra.mxu0 %v3199
    %v3201 = vand.u32 %v71, 4294901760
    %v3202 = vsub.f32 %v71, %v3201
    %v3203 = vand.u32 %v3202, 4294901760
    %3204 = vmatpush.msra.mxu0 %v3203
    %v3205 = vand.u32 %v70, 4294901760
    %v3206 = vsub.f32 %v70, %v3205
    %v3207 = vand.u32 %v3206, 4294901760
    %3208 = vmatpush.msra.mxu0 %v3207
    %v3209 = vand.u32 %v2908, 4294901760
    %3210 = vmatmul.f32.gmra.mxu0 %v3209
    %v3211 = vpop.f32.mrf.mxu0
    %v3212 = vadd.f32 %v3143, %v3211
    %3213 = vdwg.mxu0
    %v3214 = vand.u32 %v85, 4294901760
    %3215 = vmatpush.msra.mxu0 %v3214
    %v3216 = vand.u32 %v84, 4294901760
    %3217 = vmatpush.msra.mxu0 %v3216
    %v3218 = vand.u32 %v83, 4294901760
    %3219 = vmatpush.msra.mxu0 %v3218
    %v3220 = vand.u32 %v82, 4294901760
    %3221 = vmatpush.msra.mxu0 %v3220
    %v3222 = vand.u32 %v81, 4294901760
    %3223 = vmatpush.msra.mxu0 %v3222
    %v3224 = vand.u32 %v80, 4294901760
    %3225 = vmatpush.msra.mxu0 %v3224
    %v3226 = vand.u32 %v79, 4294901760
    %3227 = vmatpush.msra.mxu0 %v3226
    %v3228 = vand.u32 %v78, 4294901760
    %3229 = vmatpush.msra.mxu0 %v3228
    %v3230 = vand.u32 %v77, 4294901760
    %3231 = vmatpush.msra.mxu0 %v3230
    %v3232 = vand.u32 %v76, 4294901760
    %3233 = vmatpush.msra.mxu0 %v3232
    %v3234 = vand.u32 %v75, 4294901760
    %3235 = vmatpush.msra.mxu0 %v3234
    %v3236 = vand.u32 %v74, 4294901760
    %3237 = vmatpush.msra.mxu0 %v3236
    %v3238 = vand.u32 %v73, 4294901760
    %3239 = vmatpush.msra.mxu0 %v3238
    %v3240 = vand.u32 %v72, 4294901760
    %3241 = vmatpush.msra.mxu0 %v3240
    %v3242 = vand.u32 %v71, 4294901760
    %3243 = vmatpush.msra.mxu0 %v3242
    %v3244 = vand.u32 %v70, 4294901760
    %3245 = vmatpush.msra.mxu0 %v3244
    %v3246 = vand.u32 %v2908, 4294901760
    %3247 = vmatmul.f32.gmra.mxu0 %v3246
    %v3248 = vpop.f32.mrf.mxu0
    %v3249 = vadd.f32 %v3212, %v3248
    %3250 = vdwg.mxu0
    %v3251 = vand.u32 %v101, 4294901760
    %3252 = vmatpush.msra.mxu0 %v3251
    %v3253 = vand.u32 %v100, 4294901760
    %3254 = vmatpush.msra.mxu0 %v3253
    %v3255 = vand.u32 %v99, 4294901760
    %3256 = vmatpush.msra.mxu0 %v3255
    %v3257 = vand.u32 %v98, 4294901760
    %3258 = vmatpush.msra.mxu0 %v3257
    %v3259 = vand.u32 %v97, 4294901760
    %3260 = vmatpush.msra.mxu0 %v3259
    %v3261 = vand.u32 %v96, 4294901760
    %3262 = vmatpush.msra.mxu0 %v3261
    %v3263 = vand.u32 %v95, 4294901760
    %3264 = vmatpush.msra.mxu0 %v3263
    %v3265 = vand.u32 %v94, 4294901760
    %3266 = vmatpush.msra.mxu0 %v3265
    %v3267 = vand.u32 %v93, 4294901760
    %3268 = vmatpush.msra.mxu0 %v3267
    %v3269 = vand.u32 %v92, 4294901760
    %3270 = vmatpush.msra.mxu0 %v3269
    %v3271 = vand.u32 %v91, 4294901760
    %3272 = vmatpush.msra.mxu0 %v3271
    %v3273 = vand.u32 %v90, 4294901760
    %3274 = vmatpush.msra.mxu0 %v3273
    %v3275 = vand.u32 %v89, 4294901760
    %3276 = vmatpush.msra.mxu0 %v3275
    %v3277 = vand.u32 %v88, 4294901760
    %3278 = vmatpush.msra.mxu0 %v3277
    %v3279 = vand.u32 %v87, 4294901760
    %3280 = vmatpush.msra.mxu0 %v3279
    %v3281 = vand.u32 %v86, 4294901760
    %3282 = vmatpush.msra.mxu0 %v3281
    %v3283 = vand.u32 %v2909, 4294901760
    %v3284 = vsub.f32 %v2909, %v3283
    %v3285 = vand.u32 %v3284, 4294901760
    %v3286 = vsub.f32 %v3284, %v3285
    %v3287 = vand.u32 %v3286, 4294901760
    %3288 = vmatmul.f32.gmra.mxu0 %v3287
    %v3289 = vpop.f32.mrf.mxu0
    %v3290 = vadd.f32 %v3249, %v3289
    %3291 = vdwg.mxu0
    %v3292 = vand.u32 %v101, 4294901760
    %v3293 = vsub.f32 %v101, %v3292
    %v3294 = vand.u32 %v3293, 4294901760
    %v3295 = vsub.f32 %v3293, %v3294
    %v3296 = vand.u32 %v3295, 4294901760
    %3297 = vmatpush.msra.mxu0 %v3296
    %v3298 = vand.u32 %v100, 4294901760
    %v3299 = vsub.f32 %v100, %v3298
    %v3300 = vand.u32 %v3299, 4294901760
    %v3301 = vsub.f32 %v3299, %v3300
    %v3302 = vand.u32 %v3301, 4294901760
    %3303 = vmatpush.msra.mxu0 %v3302
    %v3304 = vand.u32 %v99, 4294901760
    %v3305 = vsub.f32 %v99, %v3304
    %v3306 = vand.u32 %v3305, 4294901760
    %v3307 = vsub.f32 %v3305, %v3306
    %v3308 = vand.u32 %v3307, 4294901760
    %3309 = vmatpush.msra.mxu0 %v3308
    %v3310 = vand.u32 %v98, 4294901760
    %v3311 = vsub.f32 %v98, %v3310
    %v3312 = vand.u32 %v3311, 4294901760
    %v3313 = vsub.f32 %v3311, %v3312
    %v3314 = vand.u32 %v3313, 4294901760
    %3315 = vmatpush.msra.mxu0 %v3314
    %v3316 = vand.u32 %v97, 4294901760
    %v3317 = vsub.f32 %v97, %v3316
    %v3318 = vand.u32 %v3317, 4294901760
    %v3319 = vsub.f32 %v3317, %v3318
    %v3320 = vand.u32 %v3319, 4294901760
    %3321 = vmatpush.msra.mxu0 %v3320
    %v3322 = vand.u32 %v96, 4294901760
    %v3323 = vsub.f32 %v96, %v3322
    %v3324 = vand.u32 %v3323, 4294901760
    %v3325 = vsub.f32 %v3323, %v3324
    %v3326 = vand.u32 %v3325, 4294901760
    %3327 = vmatpush.msra.mxu0 %v3326
    %v3328 = vand.u32 %v95, 4294901760
    %v3329 = vsub.f32 %v95, %v3328
    %v3330 = vand.u32 %v3329, 4294901760
    %v3331 = vsub.f32 %v3329, %v3330
    %v3332 = vand.u32 %v3331, 4294901760
    %3333 = vmatpush.msra.mxu0 %v3332
    %v3334 = vand.u32 %v94, 4294901760
    %v3335 = vsub.f32 %v94, %v3334
    %v3336 = vand.u32 %v3335, 4294901760
    %v3337 = vsub.f32 %v3335, %v3336
    %v3338 = vand.u32 %v3337, 4294901760
    %3339 = vmatpush.msra.mxu0 %v3338
    %v3340 = vand.u32 %v93, 4294901760
    %v3341 = vsub.f32 %v93, %v3340
    %v3342 = vand.u32 %v3341, 4294901760
    %v3343 = vsub.f32 %v3341, %v3342
    %v3344 = vand.u32 %v3343, 4294901760
    %3345 = vmatpush.msra.mxu0 %v3344
    %v3346 = vand.u32 %v92, 4294901760
    %v3347 = vsub.f32 %v92, %v3346
    %v3348 = vand.u32 %v3347, 4294901760
    %v3349 = vsub.f32 %v3347, %v3348
    %v3350 = vand.u32 %v3349, 4294901760
    %3351 = vmatpush.msra.mxu0 %v3350
    %v3352 = vand.u32 %v91, 4294901760
    %v3353 = vsub.f32 %v91, %v3352
    %v3354 = vand.u32 %v3353, 4294901760
    %v3355 = vsub.f32 %v3353, %v3354
    %v3356 = vand.u32 %v3355, 4294901760
    %3357 = vmatpush.msra.mxu0 %v3356
    %v3358 = vand.u32 %v90, 4294901760
    %v3359 = vsub.f32 %v90, %v3358
    %v3360 = vand.u32 %v3359, 4294901760
    %v3361 = vsub.f32 %v3359, %v3360
    %v3362 = vand.u32 %v3361, 4294901760
    %3363 = vmatpush.msra.mxu0 %v3362
    %v3364 = vand.u32 %v89, 4294901760
    %v3365 = vsub.f32 %v89, %v3364
    %v3366 = vand.u32 %v3365, 4294901760
    %v3367 = vsub.f32 %v3365, %v3366
    %v3368 = vand.u32 %v3367, 4294901760
    %3369 = vmatpush.msra.mxu0 %v3368
    %v3370 = vand.u32 %v88, 4294901760
    %v3371 = vsub.f32 %v88, %v3370
    %v3372 = vand.u32 %v3371, 4294901760
    %v3373 = vsub.f32 %v3371, %v3372
    %v3374 = vand.u32 %v3373, 4294901760
    %3375 = vmatpush.msra.mxu0 %v3374
    %v3376 = vand.u32 %v87, 4294901760
    %v3377 = vsub.f32 %v87, %v3376
    %v3378 = vand.u32 %v3377, 4294901760
    %v3379 = vsub.f32 %v3377, %v3378
    %v3380 = vand.u32 %v3379, 4294901760
    %3381 = vmatpush.msra.mxu0 %v3380
    %v3382 = vand.u32 %v86, 4294901760
    %v3383 = vsub.f32 %v86, %v3382
    %v3384 = vand.u32 %v3383, 4294901760
    %v3385 = vsub.f32 %v3383, %v3384
    %v3386 = vand.u32 %v3385, 4294901760
    %3387 = vmatpush.msra.mxu0 %v3386
    %v3388 = vand.u32 %v2909, 4294901760
    %3389 = vmatmul.f32.gmra.mxu0 %v3388
    %v3390 = vpop.f32.mrf.mxu0
    %v3391 = vadd.f32 %v3290, %v3390
    %3392 = vdwg.mxu0
    %v3393 = vand.u32 %v101, 4294901760
    %v3394 = vsub.f32 %v101, %v3393
    %3395 = vmatpush.msra.mxu0 %v3394
    %v3396 = vand.u32 %v100, 4294901760
    %v3397 = vsub.f32 %v100, %v3396
    %3398 = vmatpush.msra.mxu0 %v3397
    %v3399 = vand.u32 %v99, 4294901760
    %v3400 = vsub.f32 %v99, %v3399
    %3401 = vmatpush.msra.mxu0 %v3400
    %v3402 = vand.u32 %v98, 4294901760
    %v3403 = vsub.f32 %v98, %v3402
    %3404 = vmatpush.msra.mxu0 %v3403
    %v3405 = vand.u32 %v97, 4294901760
    %v3406 = vsub.f32 %v97, %v3405
    %3407 = vmatpush.msra.mxu0 %v3406
    %v3408 = vand.u32 %v96, 4294901760
    %v3409 = vsub.f32 %v96, %v3408
    %3410 = vmatpush.msra.mxu0 %v3409
    %v3411 = vand.u32 %v95, 4294901760
    %v3412 = vsub.f32 %v95, %v3411
    %3413 = vmatpush.msra.mxu0 %v3412
    %v3414 = vand.u32 %v94, 4294901760
    %v3415 = vsub.f32 %v94, %v3414
    %3416 = vmatpush.msra.mxu0 %v3415
    %v3417 = vand.u32 %v93, 4294901760
    %v3418 = vsub.f32 %v93, %v3417
    %3419 = vmatpush.msra.mxu0 %v3418
    %v3420 = vand.u32 %v92, 4294901760
    %v3421 = vsub.f32 %v92, %v3420
    %3422 = vmatpush.msra.mxu0 %v3421
    %v3423 = vand.u32 %v91, 4294901760
    %v3424 = vsub.f32 %v91, %v3423
    %3425 = vmatpush.msra.mxu0 %v3424
    %v3426 = vand.u32 %v90, 4294901760
    %v3427 = vsub.f32 %v90, %v3426
    %3428 = vmatpush.msra.mxu0 %v3427
    %v3429 = vand.u32 %v89, 4294901760
    %v3430 = vsub.f32 %v89, %v3429
    %3431 = vmatpush.msra.mxu0 %v3430
    %v3432 = vand.u32 %v88, 4294901760
    %v3433 = vsub.f32 %v88, %v3432
    %3434 = vmatpush.msra.mxu0 %v3433
    %v3435 = vand.u32 %v87, 4294901760
    %v3436 = vsub.f32 %v87, %v3435
    %3437 = vmatpush.msra.mxu0 %v3436
    %v3438 = vand.u32 %v86, 4294901760
    %v3439 = vsub.f32 %v86, %v3438
    %3440 = vmatpush.msra.mxu0 %v3439
    %v3441 = vand.u32 %v2909, 4294901760
    %v3442 = vsub.f32 %v2909, %v3441
    %3443 = vmatmul.f32.gmra.mxu0 %v3442
    %v3444 = vpop.f32.mrf.mxu0
    %v3445 = vadd.f32 %v3391, %v3444
    %3446 = vdwg.mxu0
    %v3447 = vand.u32 %v101, 4294901760
    %3448 = vmatpush.msra.mxu0 %v3447
    %v3449 = vand.u32 %v100, 4294901760
    %3450 = vmatpush.msra.mxu0 %v3449
    %v3451 = vand.u32 %v99, 4294901760
    %3452 = vmatpush.msra.mxu0 %v3451
    %v3453 = vand.u32 %v98, 4294901760
    %3454 = vmatpush.msra.mxu0 %v3453
    %v3455 = vand.u32 %v97, 4294901760
    %3456 = vmatpush.msra.mxu0 %v3455
    %v3457 = vand.u32 %v96, 4294901760
    %3458 = vmatpush.msra.mxu0 %v3457
    %v3459 = vand.u32 %v95, 4294901760
    %3460 = vmatpush.msra.mxu0 %v3459
    %v3461 = vand.u32 %v94, 4294901760
    %3462 = vmatpush.msra.mxu0 %v3461
    %v3463 = vand.u32 %v93, 4294901760
    %3464 = vmatpush.msra.mxu0 %v3463
    %v3465 = vand.u32 %v92, 4294901760
    %3466 = vmatpush.msra.mxu0 %v3465
    %v3467 = vand.u32 %v91, 4294901760
    %3468 = vmatpush.msra.mxu0 %v3467
    %v3469 = vand.u32 %v90, 4294901760
    %3470 = vmatpush.msra.mxu0 %v3469
    %v3471 = vand.u32 %v89, 4294901760
    %3472 = vmatpush.msra.mxu0 %v3471
    %v3473 = vand.u32 %v88, 4294901760
    %3474 = vmatpush.msra.mxu0 %v3473
    %v3475 = vand.u32 %v87, 4294901760
    %3476 = vmatpush.msra.mxu0 %v3475
    %v3477 = vand.u32 %v86, 4294901760
    %3478 = vmatpush.msra.mxu0 %v3477
    %v3479 = vand.u32 %v2909, 4294901760
    %v3480 = vsub.f32 %v2909, %v3479
    %v3481 = vand.u32 %v3480, 4294901760
    %3482 = vmatmul.f32.gmra.mxu0 %v3481
    %v3483 = vpop.f32.mrf.mxu0
    %v3484 = vadd.f32 %v3445, %v3483
    %3485 = vdwg.mxu0
    %v3486 = vand.u32 %v101, 4294901760
    %v3487 = vsub.f32 %v101, %v3486
    %v3488 = vand.u32 %v3487, 4294901760
    %3489 = vmatpush.msra.mxu0 %v3488
    %v3490 = vand.u32 %v100, 4294901760
    %v3491 = vsub.f32 %v100, %v3490
    %v3492 = vand.u32 %v3491, 4294901760
    %3493 = vmatpush.msra.mxu0 %v3492
    %v3494 = vand.u32 %v99, 4294901760
    %v3495 = vsub.f32 %v99, %v3494
    %v3496 = vand.u32 %v3495, 4294901760
    %3497 = vmatpush.msra.mxu0 %v3496
    %v3498 = vand.u32 %v98, 4294901760
    %v3499 = vsub.f32 %v98, %v3498
    %v3500 = vand.u32 %v3499, 4294901760
    %3501 = vmatpush.msra.mxu0 %v3500
    %v3502 = vand.u32 %v97, 4294901760
    %v3503 = vsub.f32 %v97, %v3502
    %v3504 = vand.u32 %v3503, 4294901760
    %3505 = vmatpush.msra.mxu0 %v3504
    %v3506 = vand.u32 %v96, 4294901760
    %v3507 = vsub.f32 %v96, %v3506
    %v3508 = vand.u32 %v3507, 4294901760
    %3509 = vmatpush.msra.mxu0 %v3508
    %v3510 = vand.u32 %v95, 4294901760
    %v3511 = vsub.f32 %v95, %v3510
    %v3512 = vand.u32 %v3511, 4294901760
    %3513 = vmatpush.msra.mxu0 %v3512
    %v3514 = vand.u32 %v94, 4294901760
    %v3515 = vsub.f32 %v94, %v3514
    %v3516 = vand.u32 %v3515, 4294901760
    %3517 = vmatpush.msra.mxu0 %v3516
    %v3518 = vand.u32 %v93, 4294901760
    %v3519 = vsub.f32 %v93, %v3518
    %v3520 = vand.u32 %v3519, 4294901760
    %3521 = vmatpush.msra.mxu0 %v3520
    %v3522 = vand.u32 %v92, 4294901760
    %v3523 = vsub.f32 %v92, %v3522
    %v3524 = vand.u32 %v3523, 4294901760
    %3525 = vmatpush.msra.mxu0 %v3524
    %v3526 = vand.u32 %v91, 4294901760
    %v3527 = vsub.f32 %v91, %v3526
    %v3528 = vand.u32 %v3527, 4294901760
    %3529 = vmatpush.msra.mxu0 %v3528
    %v3530 = vand.u32 %v90, 4294901760
    %v3531 = vsub.f32 %v90, %v3530
    %v3532 = vand.u32 %v3531, 4294901760
    %3533 = vmatpush.msra.mxu0 %v3532
    %v3534 = vand.u32 %v89, 4294901760
    %v3535 = vsub.f32 %v89, %v3534
    %v3536 = vand.u32 %v3535, 4294901760
    %3537 = vmatpush.msra.mxu0 %v3536
    %v3538 = vand.u32 %v88, 4294901760
    %v3539 = vsub.f32 %v88, %v3538
    %v3540 = vand.u32 %v3539, 4294901760
    %3541 = vmatpush.msra.mxu0 %v3540
    %v3542 = vand.u32 %v87, 4294901760
    %v3543 = vsub.f32 %v87, %v3542
    %v3544 = vand.u32 %v3543, 4294901760
    %3545 = vmatpush.msra.mxu0 %v3544
    %v3546 = vand.u32 %v86, 4294901760
    %v3547 = vsub.f32 %v86, %v3546
    %v3548 = vand.u32 %v3547, 4294901760
    %3549 = vmatpush.msra.mxu0 %v3548
    %v3550 = vand.u32 %v2909, 4294901760
    %3551 = vmatmul.f32.gmra.mxu0 %v3550
    %v3552 = vpop.f32.mrf.mxu0
    %v3553 = vadd.f32 %v3484, %v3552
    %3554 = vdwg.mxu0
    %v3555 = vand.u32 %v101, 4294901760
    %3556 = vmatpush.msra.mxu0 %v3555
    %v3557 = vand.u32 %v100, 4294901760
    %3558 = vmatpush.msra.mxu0 %v3557
    %v3559 = vand.u32 %v99, 4294901760
    %3560 = vmatpush.msra.mxu0 %v3559
    %v3561 = vand.u32 %v98, 4294901760
    %3562 = vmatpush.msra.mxu0 %v3561
    %v3563 = vand.u32 %v97, 4294901760
    %3564 = vmatpush.msra.mxu0 %v3563
    %v3565 = vand.u32 %v96, 4294901760
    %3566 = vmatpush.msra.mxu0 %v3565
    %v3567 = vand.u32 %v95, 4294901760
    %3568 = vmatpush.msra.mxu0 %v3567
    %v3569 = vand.u32 %v94, 4294901760
    %3570 = vmatpush.msra.mxu0 %v3569
    %v3571 = vand.u32 %v93, 4294901760
    %3572 = vmatpush.msra.mxu0 %v3571
    %v3573 = vand.u32 %v92, 4294901760
    %3574 = vmatpush.msra.mxu0 %v3573
    %v3575 = vand.u32 %v91, 4294901760
    %3576 = vmatpush.msra.mxu0 %v3575
    %v3577 = vand.u32 %v90, 4294901760
    %3578 = vmatpush.msra.mxu0 %v3577
    %v3579 = vand.u32 %v89, 4294901760
    %3580 = vmatpush.msra.mxu0 %v3579
    %v3581 = vand.u32 %v88, 4294901760
    %3582 = vmatpush.msra.mxu0 %v3581
    %v3583 = vand.u32 %v87, 4294901760
    %3584 = vmatpush.msra.mxu0 %v3583
    %v3585 = vand.u32 %v86, 4294901760
    %3586 = vmatpush.msra.mxu0 %v3585
    %v3587 = vand.u32 %v2909, 4294901760
    %3588 = vmatmul.f32.gmra.mxu0 %v3587
    %v3589 = vpop.f32.mrf.mxu0
    %v3590 = vadd.f32 %v3553, %v3589
    %3591 = vdwg.mxu0
    %3592 = vset.pattern.permute.xlu0 5
    %3593 = vperm.xlu0 %3592, %v69
    %v3594 = vpop.permute.xlu0 %3593
    %vm3595 = vcmp.eq.s32.totalorder %v135, %v3594
    %vm3596 = vcmp.eq.s32.totalorder %v136, %v3594
    %v3597 = vsel %vm3595, 1, 0
    %v3598 = vsel %vm3596, 1, 0
    %v3599 = vcvt.s32.f32 %v3597
    %v3600 = vcvt.s32.f32 %v3598
    %v3601 = vand.u32 %v117, 4294901760
    %3602 = vmatpush.msra.mxu0 %v3601
    %v3603 = vand.u32 %v116, 4294901760
    %3604 = vmatpush.msra.mxu0 %v3603
    %v3605 = vand.u32 %v115, 4294901760
    %3606 = vmatpush.msra.mxu0 %v3605
    %v3607 = vand.u32 %v114, 4294901760
    %3608 = vmatpush.msra.mxu0 %v3607
    %v3609 = vand.u32 %v113, 4294901760
    %3610 = vmatpush.msra.mxu0 %v3609
    %v3611 = vand.u32 %v112, 4294901760
    %3612 = vmatpush.msra.mxu0 %v3611
    %v3613 = vand.u32 %v111, 4294901760
    %3614 = vmatpush.msra.mxu0 %v3613
    %v3615 = vand.u32 %v110, 4294901760
    %3616 = vmatpush.msra.mxu0 %v3615
    %v3617 = vand.u32 %v109, 4294901760
    %3618 = vmatpush.msra.mxu0 %v3617
    %v3619 = vand.u32 %v108, 4294901760
    %3620 = vmatpush.msra.mxu0 %v3619
    %v3621 = vand.u32 %v107, 4294901760
    %3622 = vmatpush.msra.mxu0 %v3621
    %v3623 = vand.u32 %v106, 4294901760
    %3624 = vmatpush.msra.mxu0 %v3623
    %v3625 = vand.u32 %v105, 4294901760
    %3626 = vmatpush.msra.mxu0 %v3625
    %v3627 = vand.u32 %v104, 4294901760
    %3628 = vmatpush.msra.mxu0 %v3627
    %v3629 = vand.u32 %v103, 4294901760
    %3630 = vmatpush.msra.mxu0 %v3629
    %v3631 = vand.u32 %v102, 4294901760
    %3632 = vmatpush.msra.mxu0 %v3631
    %v3633 = vand.u32 %v3599, 4294901760
    %v3634 = vsub.f32 %v3599, %v3633
    %v3635 = vand.u32 %v3634, 4294901760
    %v3636 = vsub.f32 %v3634, %v3635
    %v3637 = vand.u32 %v3636, 4294901760
    %3638 = vmatmul.f32.gmra.mxu0 %v3637
    %v3639 = vpop.f32.mrf.mxu0
    %v3640 = vadd.f32 0.0, %v3639
    %3641 = vdwg.mxu0
    %v3642 = vand.u32 %v117, 4294901760
    %v3643 = vsub.f32 %v117, %v3642
    %v3644 = vand.u32 %v3643, 4294901760
    %v3645 = vsub.f32 %v3643, %v3644
    %v3646 = vand.u32 %v3645, 4294901760
    %3647 = vmatpush.msra.mxu0 %v3646
    %v3648 = vand.u32 %v116, 4294901760
    %v3649 = vsub.f32 %v116, %v3648
    %v3650 = vand.u32 %v3649, 4294901760
    %v3651 = vsub.f32 %v3649, %v3650
    %v3652 = vand.u32 %v3651, 4294901760
    %3653 = vmatpush.msra.mxu0 %v3652
    %v3654 = vand.u32 %v115, 4294901760
    %v3655 = vsub.f32 %v115, %v3654
    %v3656 = vand.u32 %v3655, 4294901760
    %v3657 = vsub.f32 %v3655, %v3656
    %v3658 = vand.u32 %v3657, 4294901760
    %3659 = vmatpush.msra.mxu0 %v3658
    %v3660 = vand.u32 %v114, 4294901760
    %v3661 = vsub.f32 %v114, %v3660
    %v3662 = vand.u32 %v3661, 4294901760
    %v3663 = vsub.f32 %v3661, %v3662
    %v3664 = vand.u32 %v3663, 4294901760
    %3665 = vmatpush.msra.mxu0 %v3664
    %v3666 = vand.u32 %v113, 4294901760
    %v3667 = vsub.f32 %v113, %v3666
    %v3668 = vand.u32 %v3667, 4294901760
    %v3669 = vsub.f32 %v3667, %v3668
    %v3670 = vand.u32 %v3669, 4294901760
    %3671 = vmatpush.msra.mxu0 %v3670
    %v3672 = vand.u32 %v112, 4294901760
    %v3673 = vsub.f32 %v112, %v3672
    %v3674 = vand.u32 %v3673, 4294901760
    %v3675 = vsub.f32 %v3673, %v3674
    %v3676 = vand.u32 %v3675, 4294901760
    %3677 = vmatpush.msra.mxu0 %v3676
    %v3678 = vand.u32 %v111, 4294901760
    %v3679 = vsub.f32 %v111, %v3678
    %v3680 = vand.u32 %v3679, 4294901760
    %v3681 = vsub.f32 %v3679, %v3680
    %v3682 = vand.u32 %v3681, 4294901760
    %3683 = vmatpush.msra.mxu0 %v3682
    %v3684 = vand.u32 %v110, 4294901760
    %v3685 = vsub.f32 %v110, %v3684
    %v3686 = vand.u32 %v3685, 4294901760
    %v3687 = vsub.f32 %v3685, %v3686
    %v3688 = vand.u32 %v3687, 4294901760
    %3689 = vmatpush.msra.mxu0 %v3688
    %v3690 = vand.u32 %v109, 4294901760
    %v3691 = vsub.f32 %v109, %v3690
    %v3692 = vand.u32 %v3691, 4294901760
    %v3693 = vsub.f32 %v3691, %v3692
    %v3694 = vand.u32 %v3693, 4294901760
    %3695 = vmatpush.msra.mxu0 %v3694
    %v3696 = vand.u32 %v108, 4294901760
    %v3697 = vsub.f32 %v108, %v3696
    %v3698 = vand.u32 %v3697, 4294901760
    %v3699 = vsub.f32 %v3697, %v3698
    %v3700 = vand.u32 %v3699, 4294901760
    %3701 = vmatpush.msra.mxu0 %v3700
    %v3702 = vand.u32 %v107, 4294901760
    %v3703 = vsub.f32 %v107, %v3702
    %v3704 = vand.u32 %v3703, 4294901760
    %v3705 = vsub.f32 %v3703, %v3704
    %v3706 = vand.u32 %v3705, 4294901760
    %3707 = vmatpush.msra.mxu0 %v3706
    %v3708 = vand.u32 %v106, 4294901760
    %v3709 = vsub.f32 %v106, %v3708
    %v3710 = vand.u32 %v3709, 4294901760
    %v3711 = vsub.f32 %v3709, %v3710
    %v3712 = vand.u32 %v3711, 4294901760
    %3713 = vmatpush.msra.mxu0 %v3712
    %v3714 = vand.u32 %v105, 4294901760
    %v3715 = vsub.f32 %v105, %v3714
    %v3716 = vand.u32 %v3715, 4294901760
    %v3717 = vsub.f32 %v3715, %v3716
    %v3718 = vand.u32 %v3717, 4294901760
    %3719 = vmatpush.msra.mxu0 %v3718
    %v3720 = vand.u32 %v104, 4294901760
    %v3721 = vsub.f32 %v104, %v3720
    %v3722 = vand.u32 %v3721, 4294901760
    %v3723 = vsub.f32 %v3721, %v3722
    %v3724 = vand.u32 %v3723, 4294901760
    %3725 = vmatpush.msra.mxu0 %v3724
    %v3726 = vand.u32 %v103, 4294901760
    %v3727 = vsub.f32 %v103, %v3726
    %v3728 = vand.u32 %v3727, 4294901760
    %v3729 = vsub.f32 %v3727, %v3728
    %v3730 = vand.u32 %v3729, 4294901760
    %3731 = vmatpush.msra.mxu0 %v3730
    %v3732 = vand.u32 %v102, 4294901760
    %v3733 = vsub.f32 %v102, %v3732
    %v3734 = vand.u32 %v3733, 4294901760
    %v3735 = vsub.f32 %v3733, %v3734
    %v3736 = vand.u32 %v3735, 4294901760
    %3737 = vmatpush.msra.mxu0 %v3736
    %v3738 = vand.u32 %v3599, 4294901760
    %3739 = vmatmul.f32.gmra.mxu0 %v3738
    %v3740 = vpop.f32.mrf.mxu0
    %v3741 = vadd.f32 %v3640, %v3740
    %3742 = vdwg.mxu0
    %v3743 = vand.u32 %v117, 4294901760
    %v3744 = vsub.f32 %v117, %v3743
    %3745 = vmatpush.msra.mxu0 %v3744
    %v3746 = vand.u32 %v116, 4294901760
    %v3747 = vsub.f32 %v116, %v3746
    %3748 = vmatpush.msra.mxu0 %v3747
    %v3749 = vand.u32 %v115, 4294901760
    %v3750 = vsub.f32 %v115, %v3749
    %3751 = vmatpush.msra.mxu0 %v3750
    %v3752 = vand.u32 %v114, 4294901760
    %v3753 = vsub.f32 %v114, %v3752
    %3754 = vmatpush.msra.mxu0 %v3753
    %v3755 = vand.u32 %v113, 4294901760
    %v3756 = vsub.f32 %v113, %v3755
    %3757 = vmatpush.msra.mxu0 %v3756
    %v3758 = vand.u32 %v112, 4294901760
    %v3759 = vsub.f32 %v112, %v3758
    %3760 = vmatpush.msra.mxu0 %v3759
    %v3761 = vand.u32 %v111, 4294901760
    %v3762 = vsub.f32 %v111, %v3761
    %3763 = vmatpush.msra.mxu0 %v3762
    %v3764 = vand.u32 %v110, 4294901760
    %v3765 = vsub.f32 %v110, %v3764
    %3766 = vmatpush.msra.mxu0 %v3765
    %v3767 = vand.u32 %v109, 4294901760
    %v3768 = vsub.f32 %v109, %v3767
    %3769 = vmatpush.msra.mxu0 %v3768
    %v3770 = vand.u32 %v108, 4294901760
    %v3771 = vsub.f32 %v108, %v3770
    %3772 = vmatpush.msra.mxu0 %v3771
    %v3773 = vand.u32 %v107, 4294901760
    %v3774 = vsub.f32 %v107, %v3773
    %3775 = vmatpush.msra.mxu0 %v3774
    %v3776 = vand.u32 %v106, 4294901760
    %v3777 = vsub.f32 %v106, %v3776
    %3778 = vmatpush.msra.mxu0 %v3777
    %v3779 = vand.u32 %v105, 4294901760
    %v3780 = vsub.f32 %v105, %v3779
    %3781 = vmatpush.msra.mxu0 %v3780
    %v3782 = vand.u32 %v104, 4294901760
    %v3783 = vsub.f32 %v104, %v3782
    %3784 = vmatpush.msra.mxu0 %v3783
    %v3785 = vand.u32 %v103, 4294901760
    %v3786 = vsub.f32 %v103, %v3785
    %3787 = vmatpush.msra.mxu0 %v3786
    %v3788 = vand.u32 %v102, 4294901760
    %v3789 = vsub.f32 %v102, %v3788
    %3790 = vmatpush.msra.mxu0 %v3789
    %v3791 = vand.u32 %v3599, 4294901760
    %v3792 = vsub.f32 %v3599, %v3791
    %3793 = vmatmul.f32.gmra.mxu0 %v3792
    %v3794 = vpop.f32.mrf.mxu0
    %v3795 = vadd.f32 %v3741, %v3794
    %3796 = vdwg.mxu0
    %v3797 = vand.u32 %v117, 4294901760
    %3798 = vmatpush.msra.mxu0 %v3797
    %v3799 = vand.u32 %v116, 4294901760
    %3800 = vmatpush.msra.mxu0 %v3799
    %v3801 = vand.u32 %v115, 4294901760
    %3802 = vmatpush.msra.mxu0 %v3801
    %v3803 = vand.u32 %v114, 4294901760
    %3804 = vmatpush.msra.mxu0 %v3803
    %v3805 = vand.u32 %v113, 4294901760
    %3806 = vmatpush.msra.mxu0 %v3805
    %v3807 = vand.u32 %v112, 4294901760
    %3808 = vmatpush.msra.mxu0 %v3807
    %v3809 = vand.u32 %v111, 4294901760
    %3810 = vmatpush.msra.mxu0 %v3809
    %v3811 = vand.u32 %v110, 4294901760
    %3812 = vmatpush.msra.mxu0 %v3811
    %v3813 = vand.u32 %v109, 4294901760
    %3814 = vmatpush.msra.mxu0 %v3813
    %v3815 = vand.u32 %v108, 4294901760
    %3816 = vmatpush.msra.mxu0 %v3815
    %v3817 = vand.u32 %v107, 4294901760
    %3818 = vmatpush.msra.mxu0 %v3817
    %v3819 = vand.u32 %v106, 4294901760
    %3820 = vmatpush.msra.mxu0 %v3819
    %v3821 = vand.u32 %v105, 4294901760
    %3822 = vmatpush.msra.mxu0 %v3821
    %v3823 = vand.u32 %v104, 4294901760
    %3824 = vmatpush.msra.mxu0 %v3823
    %v3825 = vand.u32 %v103, 4294901760
    %3826 = vmatpush.msra.mxu0 %v3825
    %v3827 = vand.u32 %v102, 4294901760
    %3828 = vmatpush.msra.mxu0 %v3827
    %v3829 = vand.u32 %v3599, 4294901760
    %v3830 = vsub.f32 %v3599, %v3829
    %v3831 = vand.u32 %v3830, 4294901760
    %3832 = vmatmul.f32.gmra.mxu0 %v3831
    %v3833 = vpop.f32.mrf.mxu0
    %v3834 = vadd.f32 %v3795, %v3833
    %3835 = vdwg.mxu0
    %v3836 = vand.u32 %v117, 4294901760
    %v3837 = vsub.f32 %v117, %v3836
    %v3838 = vand.u32 %v3837, 4294901760
    %3839 = vmatpush.msra.mxu0 %v3838
    %v3840 = vand.u32 %v116, 4294901760
    %v3841 = vsub.f32 %v116, %v3840
    %v3842 = vand.u32 %v3841, 4294901760
    %3843 = vmatpush.msra.mxu0 %v3842
    %v3844 = vand.u32 %v115, 4294901760
    %v3845 = vsub.f32 %v115, %v3844
    %v3846 = vand.u32 %v3845, 4294901760
    %3847 = vmatpush.msra.mxu0 %v3846
    %v3848 = vand.u32 %v114, 4294901760
    %v3849 = vsub.f32 %v114, %v3848
    %v3850 = vand.u32 %v3849, 4294901760
    %3851 = vmatpush.msra.mxu0 %v3850
    %v3852 = vand.u32 %v113, 4294901760
    %v3853 = vsub.f32 %v113, %v3852
    %v3854 = vand.u32 %v3853, 4294901760
    %3855 = vmatpush.msra.mxu0 %v3854
    %v3856 = vand.u32 %v112, 4294901760
    %v3857 = vsub.f32 %v112, %v3856
    %v3858 = vand.u32 %v3857, 4294901760
    %3859 = vmatpush.msra.mxu0 %v3858
    %v3860 = vand.u32 %v111, 4294901760
    %v3861 = vsub.f32 %v111, %v3860
    %v3862 = vand.u32 %v3861, 4294901760
    %3863 = vmatpush.msra.mxu0 %v3862
    %v3864 = vand.u32 %v110, 4294901760
    %v3865 = vsub.f32 %v110, %v3864
    %v3866 = vand.u32 %v3865, 4294901760
    %3867 = vmatpush.msra.mxu0 %v3866
    %v3868 = vand.u32 %v109, 4294901760
    %v3869 = vsub.f32 %v109, %v3868
    %v3870 = vand.u32 %v3869, 4294901760
    %3871 = vmatpush.msra.mxu0 %v3870
    %v3872 = vand.u32 %v108, 4294901760
    %v3873 = vsub.f32 %v108, %v3872
    %v3874 = vand.u32 %v3873, 4294901760
    %3875 = vmatpush.msra.mxu0 %v3874
    %v3876 = vand.u32 %v107, 4294901760
    %v3877 = vsub.f32 %v107, %v3876
    %v3878 = vand.u32 %v3877, 4294901760
    %3879 = vmatpush.msra.mxu0 %v3878
    %v3880 = vand.u32 %v106, 4294901760
    %v3881 = vsub.f32 %v106, %v3880
    %v3882 = vand.u32 %v3881, 4294901760
    %3883 = vmatpush.msra.mxu0 %v3882
    %v3884 = vand.u32 %v105, 4294901760
    %v3885 = vsub.f32 %v105, %v3884
    %v3886 = vand.u32 %v3885, 4294901760
    %3887 = vmatpush.msra.mxu0 %v3886
    %v3888 = vand.u32 %v104, 4294901760
    %v3889 = vsub.f32 %v104, %v3888
    %v3890 = vand.u32 %v3889, 4294901760
    %3891 = vmatpush.msra.mxu0 %v3890
    %v3892 = vand.u32 %v103, 4294901760
    %v3893 = vsub.f32 %v103, %v3892
    %v3894 = vand.u32 %v3893, 4294901760
    %3895 = vmatpush.msra.mxu0 %v3894
    %v3896 = vand.u32 %v102, 4294901760
    %v3897 = vsub.f32 %v102, %v3896
    %v3898 = vand.u32 %v3897, 4294901760
    %3899 = vmatpush.msra.mxu0 %v3898
    %v3900 = vand.u32 %v3599, 4294901760
    %3901 = vmatmul.f32.gmra.mxu0 %v3900
    %v3902 = vpop.f32.mrf.mxu0
    %v3903 = vadd.f32 %v3834, %v3902
    %3904 = vdwg.mxu0
    %v3905 = vand.u32 %v117, 4294901760
    %3906 = vmatpush.msra.mxu0 %v3905
    %v3907 = vand.u32 %v116, 4294901760
    %3908 = vmatpush.msra.mxu0 %v3907
    %v3909 = vand.u32 %v115, 4294901760
    %3910 = vmatpush.msra.mxu0 %v3909
    %v3911 = vand.u32 %v114, 4294901760
    %3912 = vmatpush.msra.mxu0 %v3911
    %v3913 = vand.u32 %v113, 4294901760
    %3914 = vmatpush.msra.mxu0 %v3913
    %v3915 = vand.u32 %v112, 4294901760
    %3916 = vmatpush.msra.mxu0 %v3915
    %v3917 = vand.u32 %v111, 4294901760
    %3918 = vmatpush.msra.mxu0 %v3917
    %v3919 = vand.u32 %v110, 4294901760
    %3920 = vmatpush.msra.mxu0 %v3919
    %v3921 = vand.u32 %v109, 4294901760
    %3922 = vmatpush.msra.mxu0 %v3921
    %v3923 = vand.u32 %v108, 4294901760
    %3924 = vmatpush.msra.mxu0 %v3923
    %v3925 = vand.u32 %v107, 4294901760
    %3926 = vmatpush.msra.mxu0 %v3925
    %v3927 = vand.u32 %v106, 4294901760
    %3928 = vmatpush.msra.mxu0 %v3927
    %v3929 = vand.u32 %v105, 4294901760
    %3930 = vmatpush.msra.mxu0 %v3929
    %v3931 = vand.u32 %v104, 4294901760
    %3932 = vmatpush.msra.mxu0 %v3931
    %v3933 = vand.u32 %v103, 4294901760
    %3934 = vmatpush.msra.mxu0 %v3933
    %v3935 = vand.u32 %v102, 4294901760
    %3936 = vmatpush.msra.mxu0 %v3935
    %v3937 = vand.u32 %v3599, 4294901760
    %3938 = vmatmul.f32.gmra.mxu0 %v3937
    %v3939 = vpop.f32.mrf.mxu0
    %v3940 = vadd.f32 %v3903, %v3939
    %3941 = vdwg.mxu0
    %v3942 = vand.u32 %v133, 4294901760
    %3943 = vmatpush.msra.mxu0 %v3942
    %v3944 = vand.u32 %v132, 4294901760
    %3945 = vmatpush.msra.mxu0 %v3944
    %v3946 = vand.u32 %v131, 4294901760
    %3947 = vmatpush.msra.mxu0 %v3946
    %v3948 = vand.u32 %v130, 4294901760
    %3949 = vmatpush.msra.mxu0 %v3948
    %v3950 = vand.u32 %v129, 4294901760
    %3951 = vmatpush.msra.mxu0 %v3950
    %v3952 = vand.u32 %v128, 4294901760
    %3953 = vmatpush.msra.mxu0 %v3952
    %v3954 = vand.u32 %v127, 4294901760
    %3955 = vmatpush.msra.mxu0 %v3954
    %v3956 = vand.u32 %v126, 4294901760
    %3957 = vmatpush.msra.mxu0 %v3956
    %v3958 = vand.u32 %v125, 4294901760
    %3959 = vmatpush.msra.mxu0 %v3958
    %v3960 = vand.u32 %v124, 4294901760
    %3961 = vmatpush.msra.mxu0 %v3960
    %v3962 = vand.u32 %v123, 4294901760
    %3963 = vmatpush.msra.mxu0 %v3962
    %v3964 = vand.u32 %v122, 4294901760
    %3965 = vmatpush.msra.mxu0 %v3964
    %v3966 = vand.u32 %v121, 4294901760
    %3967 = vmatpush.msra.mxu0 %v3966
    %v3968 = vand.u32 %v120, 4294901760
    %3969 = vmatpush.msra.mxu0 %v3968
    %v3970 = vand.u32 %v119, 4294901760
    %3971 = vmatpush.msra.mxu0 %v3970
    %v3972 = vand.u32 %v118, 4294901760
    %3973 = vmatpush.msra.mxu0 %v3972
    %v3974 = vand.u32 %v3600, 4294901760
    %v3975 = vsub.f32 %v3600, %v3974
    %v3976 = vand.u32 %v3975, 4294901760
    %v3977 = vsub.f32 %v3975, %v3976
    %v3978 = vand.u32 %v3977, 4294901760
    %3979 = vmatmul.f32.gmra.mxu0 %v3978
    %v3980 = vpop.f32.mrf.mxu0
    %v3981 = vadd.f32 %v3940, %v3980
    %3982 = vdwg.mxu0
    %v3983 = vand.u32 %v133, 4294901760
    %v3984 = vsub.f32 %v133, %v3983
    %v3985 = vand.u32 %v3984, 4294901760
    %v3986 = vsub.f32 %v3984, %v3985
    %v3987 = vand.u32 %v3986, 4294901760
    %3988 = vmatpush.msra.mxu0 %v3987
    %v3989 = vand.u32 %v132, 4294901760
    %v3990 = vsub.f32 %v132, %v3989
    %v3991 = vand.u32 %v3990, 4294901760
    %v3992 = vsub.f32 %v3990, %v3991
    %v3993 = vand.u32 %v3992, 4294901760
    %3994 = vmatpush.msra.mxu0 %v3993
    %v3995 = vand.u32 %v131, 4294901760
    %v3996 = vsub.f32 %v131, %v3995
    %v3997 = vand.u32 %v3996, 4294901760
    %v3998 = vsub.f32 %v3996, %v3997
    %v3999 = vand.u32 %v3998, 4294901760
    %4000 = vmatpush.msra.mxu0 %v3999
    %v4001 = vand.u32 %v130, 4294901760
    %v4002 = vsub.f32 %v130, %v4001
    %v4003 = vand.u32 %v4002, 4294901760
    %v4004 = vsub.f32 %v4002, %v4003
    %v4005 = vand.u32 %v4004, 4294901760
    %4006 = vmatpush.msra.mxu0 %v4005
    %v4007 = vand.u32 %v129, 4294901760
    %v4008 = vsub.f32 %v129, %v4007
    %v4009 = vand.u32 %v4008, 4294901760
    %v4010 = vsub.f32 %v4008, %v4009
    %v4011 = vand.u32 %v4010, 4294901760
    %4012 = vmatpush.msra.mxu0 %v4011
    %v4013 = vand.u32 %v128, 4294901760
    %v4014 = vsub.f32 %v128, %v4013
    %v4015 = vand.u32 %v4014, 4294901760
    %v4016 = vsub.f32 %v4014, %v4015
    %v4017 = vand.u32 %v4016, 4294901760
    %4018 = vmatpush.msra.mxu0 %v4017
    %v4019 = vand.u32 %v127, 4294901760
    %v4020 = vsub.f32 %v127, %v4019
    %v4021 = vand.u32 %v4020, 4294901760
    %v4022 = vsub.f32 %v4020, %v4021
    %v4023 = vand.u32 %v4022, 4294901760
    %4024 = vmatpush.msra.mxu0 %v4023
    %v4025 = vand.u32 %v126, 4294901760
    %v4026 = vsub.f32 %v126, %v4025
    %v4027 = vand.u32 %v4026, 4294901760
    %v4028 = vsub.f32 %v4026, %v4027
    %v4029 = vand.u32 %v4028, 4294901760
    %4030 = vmatpush.msra.mxu0 %v4029
    %v4031 = vand.u32 %v125, 4294901760
    %v4032 = vsub.f32 %v125, %v4031
    %v4033 = vand.u32 %v4032, 4294901760
    %v4034 = vsub.f32 %v4032, %v4033
    %v4035 = vand.u32 %v4034, 4294901760
    %4036 = vmatpush.msra.mxu0 %v4035
    %v4037 = vand.u32 %v124, 4294901760
    %v4038 = vsub.f32 %v124, %v4037
    %v4039 = vand.u32 %v4038, 4294901760
    %v4040 = vsub.f32 %v4038, %v4039
    %v4041 = vand.u32 %v4040, 4294901760
    %4042 = vmatpush.msra.mxu0 %v4041
    %v4043 = vand.u32 %v123, 4294901760
    %v4044 = vsub.f32 %v123, %v4043
    %v4045 = vand.u32 %v4044, 4294901760
    %v4046 = vsub.f32 %v4044, %v4045
    %v4047 = vand.u32 %v4046, 4294901760
    %4048 = vmatpush.msra.mxu0 %v4047
    %v4049 = vand.u32 %v122, 4294901760
    %v4050 = vsub.f32 %v122, %v4049
    %v4051 = vand.u32 %v4050, 4294901760
    %v4052 = vsub.f32 %v4050, %v4051
    %v4053 = vand.u32 %v4052, 4294901760
    %4054 = vmatpush.msra.mxu0 %v4053
    %v4055 = vand.u32 %v121, 4294901760
    %v4056 = vsub.f32 %v121, %v4055
    %v4057 = vand.u32 %v4056, 4294901760
    %v4058 = vsub.f32 %v4056, %v4057
    %v4059 = vand.u32 %v4058, 4294901760
    %4060 = vmatpush.msra.mxu0 %v4059
    %v4061 = vand.u32 %v120, 4294901760
    %v4062 = vsub.f32 %v120, %v4061
    %v4063 = vand.u32 %v4062, 4294901760
    %v4064 = vsub.f32 %v4062, %v4063
    %v4065 = vand.u32 %v4064, 4294901760
    %4066 = vmatpush.msra.mxu0 %v4065
    %v4067 = vand.u32 %v119, 4294901760
    %v4068 = vsub.f32 %v119, %v4067
    %v4069 = vand.u32 %v4068, 4294901760
    %v4070 = vsub.f32 %v4068, %v4069
    %v4071 = vand.u32 %v4070, 4294901760
    %4072 = vmatpush.msra.mxu0 %v4071
    %v4073 = vand.u32 %v118, 4294901760
    %v4074 = vsub.f32 %v118, %v4073
    %v4075 = vand.u32 %v4074, 4294901760
    %v4076 = vsub.f32 %v4074, %v4075
    %v4077 = vand.u32 %v4076, 4294901760
    %4078 = vmatpush.msra.mxu0 %v4077
    %v4079 = vand.u32 %v3600, 4294901760
    %4080 = vmatmul.f32.gmra.mxu0 %v4079
    %v4081 = vpop.f32.mrf.mxu0
    %v4082 = vadd.f32 %v3981, %v4081
    %4083 = vdwg.mxu0
    %v4084 = vand.u32 %v133, 4294901760
    %v4085 = vsub.f32 %v133, %v4084
    %4086 = vmatpush.msra.mxu0 %v4085
    %v4087 = vand.u32 %v132, 4294901760
    %v4088 = vsub.f32 %v132, %v4087
    %4089 = vmatpush.msra.mxu0 %v4088
    %v4090 = vand.u32 %v131, 4294901760
    %v4091 = vsub.f32 %v131, %v4090
    %4092 = vmatpush.msra.mxu0 %v4091
    %v4093 = vand.u32 %v130, 4294901760
    %v4094 = vsub.f32 %v130, %v4093
    %4095 = vmatpush.msra.mxu0 %v4094
    %v4096 = vand.u32 %v129, 4294901760
    %v4097 = vsub.f32 %v129, %v4096
    %4098 = vmatpush.msra.mxu0 %v4097
    %v4099 = vand.u32 %v128, 4294901760
    %v4100 = vsub.f32 %v128, %v4099
    %4101 = vmatpush.msra.mxu0 %v4100
    %v4102 = vand.u32 %v127, 4294901760
    %v4103 = vsub.f32 %v127, %v4102
    %4104 = vmatpush.msra.mxu0 %v4103
    %v4105 = vand.u32 %v126, 4294901760
    %v4106 = vsub.f32 %v126, %v4105
    %4107 = vmatpush.msra.mxu0 %v4106
    %v4108 = vand.u32 %v125, 4294901760
    %v4109 = vsub.f32 %v125, %v4108
    %4110 = vmatpush.msra.mxu0 %v4109
    %v4111 = vand.u32 %v124, 4294901760
    %v4112 = vsub.f32 %v124, %v4111
    %4113 = vmatpush.msra.mxu0 %v4112
    %v4114 = vand.u32 %v123, 4294901760
    %v4115 = vsub.f32 %v123, %v4114
    %4116 = vmatpush.msra.mxu0 %v4115
    %v4117 = vand.u32 %v122, 4294901760
    %v4118 = vsub.f32 %v122, %v4117
    %4119 = vmatpush.msra.mxu0 %v4118
    %v4120 = vand.u32 %v121, 4294901760
    %v4121 = vsub.f32 %v121, %v4120
    %4122 = vmatpush.msra.mxu0 %v4121
    %v4123 = vand.u32 %v120, 4294901760
    %v4124 = vsub.f32 %v120, %v4123
    %4125 = vmatpush.msra.mxu0 %v4124
    %v4126 = vand.u32 %v119, 4294901760
    %v4127 = vsub.f32 %v119, %v4126
    %4128 = vmatpush.msra.mxu0 %v4127
    %v4129 = vand.u32 %v118, 4294901760
    %v4130 = vsub.f32 %v118, %v4129
    %4131 = vmatpush.msra.mxu0 %v4130
    %v4132 = vand.u32 %v3600, 4294901760
    %v4133 = vsub.f32 %v3600, %v4132
    %4134 = vmatmul.f32.gmra.mxu0 %v4133
    %v4135 = vpop.f32.mrf.mxu0
    %v4136 = vadd.f32 %v4082, %v4135
    %4137 = vdwg.mxu0
    %v4138 = vand.u32 %v133, 4294901760
    %4139 = vmatpush.msra.mxu0 %v4138
    %v4140 = vand.u32 %v132, 4294901760
    %4141 = vmatpush.msra.mxu0 %v4140
    %v4142 = vand.u32 %v131, 4294901760
    %4143 = vmatpush.msra.mxu0 %v4142
    %v4144 = vand.u32 %v130, 4294901760
    %4145 = vmatpush.msra.mxu0 %v4144
    %v4146 = vand.u32 %v129, 4294901760
    %4147 = vmatpush.msra.mxu0 %v4146
    %v4148 = vand.u32 %v128, 4294901760
    %4149 = vmatpush.msra.mxu0 %v4148
    %v4150 = vand.u32 %v127, 4294901760
    %4151 = vmatpush.msra.mxu0 %v4150
    %v4152 = vand.u32 %v126, 4294901760
    %4153 = vmatpush.msra.mxu0 %v4152
    %v4154 = vand.u32 %v125, 4294901760
    %4155 = vmatpush.msra.mxu0 %v4154
    %v4156 = vand.u32 %v124, 4294901760
    %4157 = vmatpush.msra.mxu0 %v4156
    %v4158 = vand.u32 %v123, 4294901760
    %4159 = vmatpush.msra.mxu0 %v4158
    %v4160 = vand.u32 %v122, 4294901760
    %4161 = vmatpush.msra.mxu0 %v4160
    %v4162 = vand.u32 %v121, 4294901760
    %4163 = vmatpush.msra.mxu0 %v4162
    %v4164 = vand.u32 %v120, 4294901760
    %4165 = vmatpush.msra.mxu0 %v4164
    %v4166 = vand.u32 %v119, 4294901760
    %4167 = vmatpush.msra.mxu0 %v4166
    %v4168 = vand.u32 %v118, 4294901760
    %4169 = vmatpush.msra.mxu0 %v4168
    %v4170 = vand.u32 %v3600, 4294901760
    %v4171 = vsub.f32 %v3600, %v4170
    %v4172 = vand.u32 %v4171, 4294901760
    %4173 = vmatmul.f32.gmra.mxu0 %v4172
    %v4174 = vpop.f32.mrf.mxu0
    %v4175 = vadd.f32 %v4136, %v4174
    %4176 = vdwg.mxu0
    %v4177 = vand.u32 %v133, 4294901760
    %v4178 = vsub.f32 %v133, %v4177
    %v4179 = vand.u32 %v4178, 4294901760
    %4180 = vmatpush.msra.mxu0 %v4179
    %v4181 = vand.u32 %v132, 4294901760
    %v4182 = vsub.f32 %v132, %v4181
    %v4183 = vand.u32 %v4182, 4294901760
    %4184 = vmatpush.msra.mxu0 %v4183
    %v4185 = vand.u32 %v131, 4294901760
    %v4186 = vsub.f32 %v131, %v4185
    %v4187 = vand.u32 %v4186, 4294901760
    %4188 = vmatpush.msra.mxu0 %v4187
    %v4189 = vand.u32 %v130, 4294901760
    %v4190 = vsub.f32 %v130, %v4189
    %v4191 = vand.u32 %v4190, 4294901760
    %4192 = vmatpush.msra.mxu0 %v4191
    %v4193 = vand.u32 %v129, 4294901760
    %v4194 = vsub.f32 %v129, %v4193
    %v4195 = vand.u32 %v4194, 4294901760
    %4196 = vmatpush.msra.mxu0 %v4195
    %v4197 = vand.u32 %v128, 4294901760
    %v4198 = vsub.f32 %v128, %v4197
    %v4199 = vand.u32 %v4198, 4294901760
    %4200 = vmatpush.msra.mxu0 %v4199
    %v4201 = vand.u32 %v127, 4294901760
    %v4202 = vsub.f32 %v127, %v4201
    %v4203 = vand.u32 %v4202, 4294901760
    %4204 = vmatpush.msra.mxu0 %v4203
    %v4205 = vand.u32 %v126, 4294901760
    %v4206 = vsub.f32 %v126, %v4205
    %v4207 = vand.u32 %v4206, 4294901760
    %4208 = vmatpush.msra.mxu0 %v4207
    %v4209 = vand.u32 %v125, 4294901760
    %v4210 = vsub.f32 %v125, %v4209
    %v4211 = vand.u32 %v4210, 4294901760
    %4212 = vmatpush.msra.mxu0 %v4211
    %v4213 = vand.u32 %v124, 4294901760
    %v4214 = vsub.f32 %v124, %v4213
    %v4215 = vand.u32 %v4214, 4294901760
    %4216 = vmatpush.msra.mxu0 %v4215
    %v4217 = vand.u32 %v123, 4294901760
    %v4218 = vsub.f32 %v123, %v4217
    %v4219 = vand.u32 %v4218, 4294901760
    %4220 = vmatpush.msra.mxu0 %v4219
    %v4221 = vand.u32 %v122, 4294901760
    %v4222 = vsub.f32 %v122, %v4221
    %v4223 = vand.u32 %v4222, 4294901760
    %4224 = vmatpush.msra.mxu0 %v4223
    %v4225 = vand.u32 %v121, 4294901760
    %v4226 = vsub.f32 %v121, %v4225
    %v4227 = vand.u32 %v4226, 4294901760
    %4228 = vmatpush.msra.mxu0 %v4227
    %v4229 = vand.u32 %v120, 4294901760
    %v4230 = vsub.f32 %v120, %v4229
    %v4231 = vand.u32 %v4230, 4294901760
    %4232 = vmatpush.msra.mxu0 %v4231
    %v4233 = vand.u32 %v119, 4294901760
    %v4234 = vsub.f32 %v119, %v4233
    %v4235 = vand.u32 %v4234, 4294901760
    %4236 = vmatpush.msra.mxu0 %v4235
    %v4237 = vand.u32 %v118, 4294901760
    %v4238 = vsub.f32 %v118, %v4237
    %v4239 = vand.u32 %v4238, 4294901760
    %4240 = vmatpush.msra.mxu0 %v4239
    %v4241 = vand.u32 %v3600, 4294901760
    %4242 = vmatmul.f32.gmra.mxu0 %v4241
    %v4243 = vpop.f32.mrf.mxu0
    %v4244 = vadd.f32 %v4175, %v4243
    %4245 = vdwg.mxu0
    %v4246 = vand.u32 %v133, 4294901760
    %4247 = vmatpush.msra.mxu0 %v4246
    %v4248 = vand.u32 %v132, 4294901760
    %4249 = vmatpush.msra.mxu0 %v4248
    %v4250 = vand.u32 %v131, 4294901760
    %4251 = vmatpush.msra.mxu0 %v4250
    %v4252 = vand.u32 %v130, 4294901760
    %4253 = vmatpush.msra.mxu0 %v4252
    %v4254 = vand.u32 %v129, 4294901760
    %4255 = vmatpush.msra.mxu0 %v4254
    %v4256 = vand.u32 %v128, 4294901760
    %4257 = vmatpush.msra.mxu0 %v4256
    %v4258 = vand.u32 %v127, 4294901760
    %4259 = vmatpush.msra.mxu0 %v4258
    %v4260 = vand.u32 %v126, 4294901760
    %4261 = vmatpush.msra.mxu0 %v4260
    %v4262 = vand.u32 %v125, 4294901760
    %4263 = vmatpush.msra.mxu0 %v4262
    %v4264 = vand.u32 %v124, 4294901760
    %4265 = vmatpush.msra.mxu0 %v4264
    %v4266 = vand.u32 %v123, 4294901760
    %4267 = vmatpush.msra.mxu0 %v4266
    %v4268 = vand.u32 %v122, 4294901760
    %4269 = vmatpush.msra.mxu0 %v4268
    %v4270 = vand.u32 %v121, 4294901760
    %4271 = vmatpush.msra.mxu0 %v4270
    %v4272 = vand.u32 %v120, 4294901760
    %4273 = vmatpush.msra.mxu0 %v4272
    %v4274 = vand.u32 %v119, 4294901760
    %4275 = vmatpush.msra.mxu0 %v4274
    %v4276 = vand.u32 %v118, 4294901760
    %4277 = vmatpush.msra.mxu0 %v4276
    %v4278 = vand.u32 %v3600, 4294901760
    %4279 = vmatmul.f32.gmra.mxu0 %v4278
    %v4280 = vpop.f32.mrf.mxu0
    %v4281 = vadd.f32 %v4244, %v4280
    %4282 = vdwg.mxu0
    %v4283 = vadd.f32 %v826, %v2208
    %v4284 = vsub.f32 %v4283, %v1517
    %4285 = vst [vmem:[#allocation8] sm:$0xff] %v4284
    %v4286 = vadd.f32 %v2899, %v4281
    %v4287 = vsub.f32 %v4286, %v3590
    %4288 = vst [vmem:[#allocation9] sm:$0xff] %v4287
    %4289 = vst [vmem:[#allocation11] sm:$0xff] %v826
    %4290 = vst [vmem:[#allocation12] sm:$0xff] %v1517
    %4291 = vst [vmem:[#allocation14] sm:$0xff] %v2899
    %4292 = vst [vmem:[#allocation15] sm:$0xff] %v3590
    // Predicated region
    $region26: #{tpu_custom_call.1} parent=1 // pred_check
      _
    $region27: #{tpu_custom_call.1} parent=1 // pred_check_branch
      %4294 = sbr.rel (0) target = $region29
    $region28: #{tpu_custom_call.1} parent=1 // pred_region
      %4296 = vsyncadd [#allocation4], 0
      %s4298 = sshll.u32 [#allocation8], 4
      %s4299 = int_to_ptr.vmem [resolvable:$true] %s4298
      %s4300 = sshll.u32 %s3, 4
      %s4301 = int_to_ptr.hbm [resolvable:$true] %s4300
      %4303 = dma.vmem_to_hbm [thread:$0]  %s4299, 128, %s4301, [#allocation4]
    $region29: #{tpu_custom_call.1} parent=1 // pred_fallthru
      _
    // Predicated region
    $region30: #{tpu_custom_call.1} parent=1 // pred_check
      _
    $region31: #{tpu_custom_call.1} parent=1 // pred_check_branch
      %4305 = sbr.rel (0) target = $region33
    $region32: #{tpu_custom_call.1} parent=1 // pred_region
      %4307 = vsyncadd [#allocation10], 0
      %s4309 = sshll.u32 [#allocation9], 4
      %s4310 = int_to_ptr.vmem [resolvable:$true] %s4309
      %s4311 = sshll.u32 %s4, 4
      %s4312 = int_to_ptr.hbm [resolvable:$true] %s4311
      %4314 = dma.vmem_to_hbm [thread:$0]  %s4310, 128, %s4312, [#allocation10]
    $region33: #{tpu_custom_call.1} parent=1 // pred_fallthru
      _
    // Predicated region
    $region34: #{tpu_custom_call.1} parent=1 // pred_check
      _
    $region35: #{tpu_custom_call.1} parent=1 // pred_check_branch
      %4316 = sbr.rel (0) target = $region37
    $region36: #{tpu_custom_call.1} parent=1 // pred_region
      %4318 = vsyncadd [#allocation10], 0
      %s4320 = sshll.u32 [#allocation11], 4
      %s4321 = int_to_ptr.vmem [resolvable:$true] %s4320
      %s4322 = sshll.u32 %s5, 4
      %s4323 = int_to_ptr.hbm [resolvable:$true] %s4322
      %4325 = dma.vmem_to_hbm [thread:$0]  %s4321, 128, %s4323, [#allocation10]
    $region37: #{tpu_custom_call.1} parent=1 // pred_fallthru
      _
    // Predicated region
    $region38: #{tpu_custom_call.1} parent=1 // pred_check
      _
    $region39: #{tpu_custom_call.1} parent=1 // pred_check_branch
      %4327 = sbr.rel (0) target = $region41
    $region40: #{tpu_custom_call.1} parent=1 // pred_region
      %4329 = vsyncadd [#allocation13], 0
      %s4331 = sshll.u32 [#allocation12], 4
      %s4332 = int_to_ptr.vmem [resolvable:$true] %s4331
      %s4333 = sshll.u32 %s6, 4
      %s4334 = int_to_ptr.hbm [resolvable:$true] %s4333
      %4336 = dma.vmem_to_hbm [thread:$0]  %s4332, 128, %s4334, [#allocation13]
    $region41: #{tpu_custom_call.1} parent=1 // pred_fallthru
      _
    // Predicated region
    $region42: #{tpu_custom_call.1} parent=1 // pred_check
      _
    $region43: #{tpu_custom_call.1} parent=1 // pred_check_branch
      %4338 = sbr.rel (0) target = $region45
    $region44: #{tpu_custom_call.1} parent=1 // pred_region
      %4340 = vsyncadd [#allocation13], 0
      %s4342 = sshll.u32 [#allocation14], 4
      %s4343 = int_to_ptr.vmem [resolvable:$true] %s4342
      %s4344 = sshll.u32 %s7, 4
      %s4345 = int_to_ptr.hbm [resolvable:$true] %s4344
      %4347 = dma.vmem_to_hbm [thread:$0]  %s4343, 128, %s4345, [#allocation13]
    $region45: #{tpu_custom_call.1} parent=1 // pred_fallthru
      _
    // Predicated region
    $region46: #{tpu_custom_call.1} parent=1 // pred_check
      _
    $region47: #{tpu_custom_call.1} parent=1 // pred_check_branch
      %4349 = sbr.rel (0) target = $region49
    $region48: #{tpu_custom_call.1} parent=1 // pred_region
      %4351 = vsyncadd [#allocation16], 0
      %s4353 = sshll.u32 [#allocation15], 4
      %s4354 = int_to_ptr.vmem [resolvable:$true] %s4353
      %s4355 = sshll.u32 %s8, 4
      %s4356 = int_to_ptr.hbm [resolvable:$true] %s4355
      %4358 = dma.vmem_to_hbm [thread:$0]  %s4354, 128, %s4356, [#allocation16]
    $region49: #{tpu_custom_call.1} parent=1 // pred_fallthru
      _
    // Predicated region
    $region50: #{tpu_custom_call.1} parent=1 // pred_check
      _
    $region51: #{tpu_custom_call.1} parent=1 // pred_check_branch
      %4360 = sbr.rel (0) target = $region53
    $region52: #{tpu_custom_call.1} parent=1 // pred_region
      %4362 = dma.done [#allocation4], 128
    $region53: #{tpu_custom_call.1} parent=1 // pred_fallthru
      _
    // Predicated region
    $region54: #{tpu_custom_call.1} parent=1 // pred_check
      _
    $region55: #{tpu_custom_call.1} parent=1 // pred_check_branch
      %4364 = sbr.rel (0) target = $region57
    $region56: #{tpu_custom_call.1} parent=1 // pred_region
      %4366 = dma.done [#allocation10], 128
    $region57: #{tpu_custom_call.1} parent=1 // pred_fallthru
      _
    // Predicated region
    $region58: #{tpu_custom_call.1} parent=1 // pred_check
      _
    $region59: #{tpu_custom_call.1} parent=1 // pred_check_branch
      %4368 = sbr.rel (0) target = $region61
    $region60: #{tpu_custom_call.1} parent=1 // pred_region
      %4370 = dma.done [#allocation10], 128
    $region61: #{tpu_custom_call.1} parent=1 // pred_fallthru
      _
    // Predicated region
    $region62: #{tpu_custom_call.1} parent=1 // pred_check
      _
    $region63: #{tpu_custom_call.1} parent=1 // pred_check_branch
      %4372 = sbr.rel (0) target = $region65
    $region64: #{tpu_custom_call.1} parent=1 // pred_region
      %4374 = dma.done [#allocation13], 128
    $region65: #{tpu_custom_call.1} parent=1 // pred_fallthru
      _
    // Predicated region
    $region66: #{tpu_custom_call.1} parent=1 // pred_check
      _
    $region67: #{tpu_custom_call.1} parent=1 // pred_check_branch
      %4376 = sbr.rel (0) target = $region69
    $region68: #{tpu_custom_call.1} parent=1 // pred_region
      %4378 = dma.done [#allocation13], 128
    $region69: #{tpu_custom_call.1} parent=1 // pred_fallthru
      _
    // Predicated region
    $region70: #{tpu_custom_call.1} parent=1 // pred_check
      _
    $region71: #{tpu_custom_call.1} parent=1 // pred_check_branch
      %4380 = sbr.rel (0) target = $region73
    $region72: #{tpu_custom_call.1} parent=1 // pred_region
      %4382 = dma.done [#allocation16], 128
    $region73: #{tpu_custom_call.1} parent=1 // pred_fallthru
      _
    %4383 = vsyncpa [#allocation3], 1
    %4384 = vsyncpa [#allocation6], 1
    %4385 = vsyncpa [#allocation4], 1
    %4386 = vsyncpa [#allocation10], 1
    %4387 = vsyncpa [#allocation13], 1
    %4388 = vsyncpa [#allocation16], 1

</llo_original>
